<compile_context>
chip_gen: v7x
topology: tpu7x:2x2x1
jax: 0.10.0
libtpu: 0.0.40
codegen_flags: <defaults>
</compile_context>

<pallas_src>
import math

import jax
import jax.numpy as jnp
from jax import lax
from jax.experimental import pallas as pl
from jax.experimental.pallas import tpu as pltpu

LANE = 128


def _silu(x):
    return x * jax.nn.sigmoid(x)


def _round_up(x, m):
    return ((x + m - 1) // m) * m


def _pad2(a, rows, cols, dtype):
    a = a.astype(dtype)
    return jnp.pad(a, ((0, rows - a.shape[0]), (0, cols - a.shape[1])))


# ----------------------------------------------------------------------------
# Fused Pallas kernel
# ----------------------------------------------------------------------------

def make_fused_gnn_kernel(n_valid, down_dims, n_latent_blocks, up_dims):
    """Builds the fused forward kernel.

    down_dims / up_dims: list of (c_in, c_out) *valid* (unpadded) channel dims
    per GraphConv block; used for the contraction-order choice and the
    LayerNorm divisor.  Weight / vector slabs are zero-padded so padded lanes
    stay exactly zero.
    """

    def kernel(x_ref, a_ref, w_ref, v_ref, o_ref):
        a = a_ref[...]          # (Np, Np) bf16 normalized adjacency
        vecs = v_ref[...]       # (V, P)  f32 bias / affine / time-embedding rows

        wc = [0]
        vc = [0]

        def W():                # next (P, P) bf16 weight matrix
            i = wc[0]
            wc[0] += 1
            return w_ref[i]

        def V():                # next (1, P) f32 row vector
            i = vc[0]
            vc[0] += 1
            return vecs[i:i + 1, :]

        def mm(lhs_f32, rhs_bf16):
            # bf16 MXU operands, f32 accumulation.
            return jnp.dot(lhs_f32.astype(jnp.bfloat16), rhs_bf16,
                           preferred_element_type=jnp.float32)

        # ---- min_max_scale over the VALID node rows only -------------------
        # TODO(synk): min_max_scale is not defined in the reference source;
        # assumed per-feature scaling to [0, 1] over the node axis.
        x = x_ref[...]
        rows = lax.broadcasted_iota(jnp.int32, x.shape, 0)
        row_ok = rows < n_valid
        xmin = jnp.min(jnp.where(row_ok, x, jnp.inf), axis=0, keepdims=True)
        xmax = jnp.max(jnp.where(row_ok, x, -jnp.inf), axis=0, keepdims=True)
        xs = jnp.where(row_ok, (x - xmin) / (xmax - xmin + 1e-8), 0.0)

        # ---- stem: layer0 + time MLP ---------------------------------------
        t_sin = V()                                    # (1, P) sinusoidal emb
        w0, b0 = W(), V()
        wt, bt = W(), V()
        h = mm(xs, w0) + b0                            # layer0
        t = jnp.maximum(mm(t_sin, wt) + bt, 0.0)       # time MLP Linear + ReLU

        def gc_block(h, c_in, c_out):
            w_gc, b_gc = W(), V()
            w_tb, b_tb = W(), V()
            w_lin, b_lin = W(), V()
            gamma, beta = V(), V()
            # GCNConv: D^-1/2 (A+I) D^-1/2 @ h @ W + b — cheaper order first.
            if c_in <= c_out:
                ah = jnp.dot(a, h.astype(jnp.bfloat16),
                             preferred_element_type=jnp.float32)
                z = mm(ah, w_gc) + b_gc
            else:
                hw = mm(h, w_gc)
                z = jnp.dot(a, hw.astype(jnp.bfloat16),
                            preferred_element_type=jnp.float32) + b_gc
            z = _silu(z)
            z = z + _silu(mm(t, w_tb) + b_tb)          # broadcast (1,P) temb
            y = _silu(mm(z, w_lin) + b_lin)
            # One-pass LayerNorm over VALID lanes (padded lanes are exactly 0,
            # so plain lane sums equal valid-lane sums; divide by the true C).
            inv_c = 1.0 / float(c_out)
            mu = jnp.sum(y, axis=-1, keepdims=True) * inv_c
            ex2 = jnp.sum(y * y, axis=-1, keepdims=True) * inv_c
            var = ex2 - mu * mu
            yhat = (y - mu) * lax.rsqrt(var + 1e-5)
            return yhat * gamma + beta                 # padded lanes: 0

        # downsampling GraphConv blocks
        for c_in, c_out in down_dims:
            h = gc_block(h, c_in, c_out)

        # latent MLP: (Linear + SiLU) blocks, then final Linear
        for _ in range(n_latent_blocks):
            w, b = W(), V()
            h = _silu(mm(h, w) + b)
        w, b = W(), V()
        h = mm(h, w) + b

        # upsampling GraphConv blocks
        for c_in, c_out in up_dims:
            h = gc_block(h, c_in, c_out)

        # layer_out
        w, b = W(), V()
        o_ref[...] = mm(h, w) + b

    return kernel


# ----------------------------------------------------------------------------
# Packing: stack params into one bf16 weight slab + one f32 vector slab
# ----------------------------------------------------------------------------

def pack_gnn_inputs(params, x, t_sin, a_norm, layers, latent_space_dims,
                    n_feat_in, time_emb_dim):
    n = x.shape[0]
    n_pad = _round_up(max(n, LANE), LANE)              # fill MXU rows
    p = _round_up(max([n_feat_in, time_emb_dim] + list(layers)
                      + list(latent_space_dims)), LANE)

    wmats, vrows = [], []

    def add_w(w):
        wmats.append(_pad2(w, p, p, jnp.bfloat16))

    def add_v(v):
        vrows.append(_pad2(v, 1, p, jnp.float32))

    # Order here MUST match the W()/V() consumption order in the kernel.
    add_v(t_sin)
    add_w(params["layer0_w"]); add_v(params["layer0_b"])
    add_w(params["time_w"]);   add_v(params["time_b"])

    def pack_block(pb):
        add_w(pb["w_gc"]);   add_v(pb["b_gc"])
        add_w(pb["w_time"]); add_v(pb["b_time"])
        add_w(pb["w_lin"]);  add_v(pb["b_lin"])
        add_v(pb["ln_gamma"]); add_v(pb["ln_beta"])

    for pb in params["down"]:
        pack_block(pb)
    for (w, b) in params["latent"]:
        add_w(w); add_v(b)
    w, b = params["latent_out"]
    add_w(w); add_v(b)
    for pb in params["up"]:
        pack_block(pb)
    add_w(params["layer_out_w"]); add_v(params["layer_out_b"])

    w_stack = jnp.stack(wmats)                         # (K, P, P) bf16
    v_stack = jnp.concatenate(vrows, axis=0)           # (V, P)    f32
    v_rows_pad = _round_up(v_stack.shape[0], 8)
    if v_rows_pad != v_stack.shape[0]:
        v_stack = jnp.pad(v_stack, ((0, v_rows_pad - v_stack.shape[0]), (0, 0)))

    x_pad = _pad2(x, n_pad, p, jnp.float32)
    a_pad = _pad2(a_norm, n_pad, n_pad, jnp.bfloat16)

    meta = dict(
        n_valid=n, n_pad=n_pad, p=p,
        down_dims=[(layers[i], layers[i + 1]) for i in range(len(layers) - 1)],
        up_dims=[(layers[i], layers[i - 1])
                 for i in reversed(range(1, len(layers)))],
        n_latent_blocks=len(params["latent"]),
    )
    return (x_pad, a_pad, w_stack, v_stack), meta


# ----------------------------------------------------------------------------
# Glue: sinusoidal time embedding, normalized adjacency, parameter init
# ----------------------------------------------------------------------------

def sinusoidal_pos_emb(time, dim):
    half_dim = dim // 2
    scale = math.log(10000.0) / (half_dim - 1)
    freqs = jnp.exp(jnp.arange(half_dim, dtype=jnp.float32) * -scale)
    emb = time[:, None] * freqs[None, :]
    return jnp.concatenate([jnp.sin(emb), jnp.cos(emb)], axis=-1)


def gcn_norm_dense(edge_index, num_nodes):
    """Dense D^{-1/2} (A + I) D^{-1/2}, matching PyG GCNConv defaults."""
    src, dst = edge_index[0], edge_index[1]
    a = jnp.zeros((num_nodes, num_nodes), jnp.float32).at[dst, src].add(1.0)
    a = a + jnp.eye(num_nodes, dtype=jnp.float32)        # add self loops
    deg = jnp.sum(a, axis=1)
    dinv = jnp.where(deg > 0, 1.0 / jnp.sqrt(deg), 0.0)
    return dinv[:, None] * a * dinv[None, :]


def _linear_params(key, fan_in, fan_out):
    kw, kb = jax.random.split(key)
    bound = 1.0 / math.sqrt(fan_in)
    w = jax.random.uniform(kw, (fan_in, fan_out), jnp.float32, -bound, bound)
    b = jax.random.uniform(kb, (1, fan_out), jnp.float32, -bound, bound)
    return w, b


def _graphconv_params(key, c_in, c_out, time_emb_dim):
    k1, k2, k3 = jax.random.split(key, 3)
    w_gc, b_gc = _linear_params(k1, c_in, c_out)
    w_time, b_time = _linear_params(k2, time_emb_dim, c_out)
    w_lin, b_lin = _linear_params(k3, c_out, c_out)
    return dict(w_gc=w_gc, b_gc=b_gc, w_time=w_time, b_time=b_time,
                w_lin=w_lin, b_lin=b_lin,
                ln_gamma=jnp.ones((1, c_out), jnp.float32),
                ln_beta=jnp.zeros((1, c_out), jnp.float32))


def init_gnn_params(key, n_feat_in, layers, latent_space_dims, time_emb_dim):
    keys = jax.random.split(key, 16)
    params = {}
    params["layer0_w"], params["layer0_b"] = _linear_params(keys[0], n_feat_in, layers[0])
    params["layer_out_w"], params["layer_out_b"] = _linear_params(keys[1], layers[0], n_feat_in)
    params["time_w"], params["time_b"] = _linear_params(keys[2], time_emb_dim, time_emb_dim)
    params["down"] = [
        _graphconv_params(keys[3 + i], layers[i], layers[i + 1], time_emb_dim)
        for i in range(len(layers) - 1)
    ]
    params["up"] = [
        _graphconv_params(keys[7 + j], layers[i], layers[i - 1], time_emb_dim)
        for j, i in enumerate(reversed(range(1, len(layers))))
    ]
    lat_dims = [layers[-1], *latent_space_dims, layers[-1]]
    params["latent"] = [
        _linear_params(keys[11 + i], lat_dims[i], lat_dims[i + 1])
        for i in range(len(lat_dims) - 2)
    ]
    params["latent_out"] = _linear_params(keys[15], lat_dims[-2], lat_dims[-1])
    return params


# ----------------------------------------------------------------------------
# Forward pass: one fused pallas_call
# ----------------------------------------------------------------------------

def gnn_forward(params, x, timestep, edge_index, layers, latent_space_dims,
                time_emb_dim):
    n, n_feat_in = x.shape
    a_norm = gcn_norm_dense(edge_index, n)
    t_sin = sinusoidal_pos_emb(timestep, time_emb_dim)

    inputs, meta = pack_gnn_inputs(params, x, t_sin, a_norm, layers,
                                   latent_space_dims, n_feat_in, time_emb_dim)
    kernel = make_fused_gnn_kernel(meta["n_valid"], meta["down_dims"],
                                   meta["n_latent_blocks"], meta["up_dims"])
    n_pad, p = meta["n_pad"], meta["p"]

    # Rough cost hint so XLA can schedule surrounding glue around the call.
    n_blocks = len(meta["down_dims"]) + len(meta["up_dims"])
    n_graph_mm = 2 * n_blocks
    n_feat_mm = 2 + 3 * n_blocks + meta["n_latent_blocks"] + 1 + 1
    flops = int(2 * n_pad * n_pad * p * n_graph_mm
                + 2 * n_pad * p * p * n_feat_mm)
    bytes_accessed = int(sum(int(a.size) * a.dtype.itemsize for a in inputs)
                         + n_pad * p * 4)
    transcendentals = int(n_pad * p * (3 * n_blocks + meta["n_latent_blocks"]))

    out = pl.pallas_call(
        kernel,
        out_shape=jax.ShapeDtypeStruct((n_pad, p), jnp.float32),
        in_specs=[pl.BlockSpec(memory_space=pltpu.MemorySpace.VMEM)] * len(inputs),
        out_specs=pl.BlockSpec(memory_space=pltpu.MemorySpace.VMEM),
        compiler_params=pltpu.CompilerParams(vmem_limit_bytes=32 * 1024 * 1024),
        cost_estimate=pl.CostEstimate(flops=flops,
                                      transcendentals=transcendentals,
                                      bytes_accessed=bytes_accessed),
    )(*inputs)
    return out[:n, :n_feat_in]


# ----------------------------------------------------------------------------
# Pure-JAX f32 reference (for numerical validation of the bf16 kernel)
# ----------------------------------------------------------------------------

def gnn_forward_ref(params, x, timestep, edge_index, time_emb_dim):
    a = gcn_norm_dense(edge_index, x.shape[0])
    xmin = x.min(0, keepdims=True)
    xmax = x.max(0, keepdims=True)
    h = (x - xmin) / (xmax - xmin + 1e-8) @ params["layer0_w"] + params["layer0_b"]
    t = jax.nn.relu(sinusoidal_pos_emb(timestep, time_emb_dim)
                    @ params["time_w"] + params["time_b"])

    def gc_block(h, p):
        x1 = jax.nn.silu(a @ (h @ p["w_gc"]) + p["b_gc"])
        x1 = x1 + jax.nn.silu(t @ p["w_time"] + p["b_time"])
        y = jax.nn.silu(x1 @ p["w_lin"] + p["b_lin"])
        mu = y.mean(-1, keepdims=True)
        var = ((y - mu) ** 2).mean(-1, keepdims=True)
        return (y - mu) / jnp.sqrt(var + 1e-5) * p["ln_gamma"] + p["ln_beta"]

    for p in params["down"]:
        h = gc_block(h, p)
    for (w, b) in params["latent"]:
        h = jax.nn.silu(h @ w + b)
    w, b = params["latent_out"]
    h = h @ w + b
    for p in params["up"]:
        h = gc_block(h, p)
    return h @ params["layer_out_w"] + params["layer_out_b"]


# ----------------------------------------------------------------------------
# Demo
# ----------------------------------------------------------------------------

if __name__ == "__main__":
    N_NODES = 16
    N_FEAT_IN = 8
    LAYERS = [32, 64]
    LATENT_DIMS = [48]
    TIME_EMB_DIM = 32

    key = jax.random.PRNGKey(0)
    k_x, k_e, k_p = jax.random.split(key, 3)

    x = jax.random.normal(k_x, (N_NODES, N_FEAT_IN), jnp.float32)
    timestep = jnp.array([5.0], dtype=jnp.float32)

    ring_src = jnp.arange(N_NODES, dtype=jnp.int32)
    ring_dst = (ring_src + 1) % N_NODES
    rnd_src = jax.random.randint(k_e, (16,), 0, N_NODES, jnp.int32)
    rnd_dst = (rnd_src + jax.random.randint(jax.random.fold_in(k_e, 1), (16,),
                                            1, N_NODES, jnp.int32)) % N_NODES
    edge_index = jnp.stack([
        jnp.concatenate([ring_src, ring_dst, rnd_src]),
        jnp.concatenate([ring_dst, ring_src, rnd_dst]),
    ])  # [2, 48]

    params = init_gnn_params(k_p, N_FEAT_IN, LAYERS, LATENT_DIMS, TIME_EMB_DIM)

    logits = gnn_forward(params, x, timestep, edge_index, LAYERS, LATENT_DIMS,
                         TIME_EMB_DIM)
    logits = jax.block_until_ready(logits)

    assert logits.shape == (N_NODES, N_FEAT_IN), logits.shape
    assert bool(jnp.all(jnp.isfinite(logits)))

    # Validate the bf16-MXU fused kernel against the pure f32 JAX reference.
    ref = gnn_forward_ref(params, x, timestep, edge_index, TIME_EMB_DIM)
    err = float(jnp.max(jnp.abs(logits - ref)))
    assert err < 0.25, f"kernel vs f32 reference max|diff|={err}"

    print("KERNEL_OK")
</pallas_src>

<mosaic_0001>
module attributes {stable_mosaic.version = 11 : i64} {
  func.func @kernel(%arg0: memref<128x128xf32, #tpu.memory_space<vmem>>, %arg1: memref<128x128xbf16, #tpu.memory_space<vmem>>, %arg2: memref<11x128x128xbf16, #tpu.memory_space<vmem>>, %arg3: memref<16x128xf32, #tpu.memory_space<vmem>>, %arg4: memref<128x128xf32, #tpu.memory_space<vmem>>) attributes {dimension_semantics = [], scalar_prefetch = 0 : i64, scratch_operands = 0 : i64, tpu.core_type = #tpu.core_type<tc>} {
    %c0 = arith.constant 0 : index
    %c0_0 = arith.constant 0 : index
    %0 = vector.load %arg1[%c0, %c0_0] : memref<128x128xbf16, #tpu.memory_space<vmem>>, vector<128x128xbf16>
    %c0_1 = arith.constant 0 : index
    %c0_2 = arith.constant 0 : index
    %1 = vector.load %arg3[%c0_1, %c0_2] : memref<16x128xf32, #tpu.memory_space<vmem>>, vector<16x128xf32>
    %c0_3 = arith.constant 0 : index
    %c0_4 = arith.constant 0 : index
    %2 = vector.load %arg0[%c0_3, %c0_4] : memref<128x128xf32, #tpu.memory_space<vmem>>, vector<128x128xf32>
    %3 = tpu.iota {dimensions = array<i32: 0>} : vector<128x128xi32>
    %c16_i32 = arith.constant 16 : i32
    %4 = vector.broadcast %c16_i32 : i32 to vector<128x128xi32>
    %5 = arith.cmpi slt, %3, %4 : vector<128x128xi32>
    %cst = arith.constant 0x7F800000 : f32
    %6 = vector.broadcast %cst : f32 to vector<128x128xf32>
    %7 = arith.select %5, %2, %6 : vector<128x128xi1>, vector<128x128xf32>
    %cst_5 = arith.constant dense<0x7F800000> : vector<128xf32>
    %8 = vector.multi_reduction <minimumf>, %7, %cst_5 [0] : vector<128x128xf32> to vector<128xf32>
    %9 = vector.shape_cast %8 : vector<128xf32> to vector<1x128xf32>
    %cst_6 = arith.constant 0xFF800000 : f32
    %10 = vector.broadcast %cst_6 : f32 to vector<128x128xf32>
    %11 = arith.select %5, %2, %10 : vector<128x128xi1>, vector<128x128xf32>
    %cst_7 = arith.constant dense<0xFF800000> : vector<128xf32>
    %12 = vector.multi_reduction <maximumf>, %11, %cst_7 [0] : vector<128x128xf32> to vector<128xf32>
    %13 = vector.shape_cast %12 : vector<128xf32> to vector<1x128xf32>
    %14 = vector.broadcast %9 : vector<1x128xf32> to vector<128x128xf32>
    %15 = arith.subf %2, %14 : vector<128x128xf32>
    %16 = arith.subf %13, %9 : vector<1x128xf32>
    %cst_8 = arith.constant 9.99999993E-9 : f32
    %17 = vector.broadcast %cst_8 : f32 to vector<1x128xf32>
    %18 = arith.addf %16, %17 : vector<1x128xf32>
    %19 = vector.broadcast %18 : vector<1x128xf32> to vector<128x128xf32>
    %20 = arith.divf %15, %19 : vector<128x128xf32>
    %cst_9 = arith.constant 0.000000e+00 : f32
    %21 = vector.broadcast %cst_9 : f32 to vector<128x128xf32>
    %22 = arith.select %5, %20, %21 : vector<128x128xi1>, vector<128x128xf32>
    %23 = vector.extract_strided_slice %1 {offsets = [0, 0], sizes = [1, 128], strides = [1, 1]} : vector<16x128xf32> to vector<1x128xf32>
    %c0_10 = arith.constant 0 : index
    %c0_11 = arith.constant 0 : index
    %c0_12 = arith.constant 0 : index
    %24 = vector.load %arg2[%c0_10, %c0_11, %c0_12] : memref<11x128x128xbf16, #tpu.memory_space<vmem>>, vector<1x128x128xbf16>
    %25 = vector.shape_cast %24 : vector<1x128x128xbf16> to vector<128x128xbf16>
    %26 = vector.extract_strided_slice %1 {offsets = [1, 0], sizes = [1, 128], strides = [1, 1]} : vector<16x128xf32> to vector<1x128xf32>
    %c1 = arith.constant 1 : index
    %c0_13 = arith.constant 0 : index
    %c0_14 = arith.constant 0 : index
    %27 = vector.load %arg2[%c1, %c0_13, %c0_14] : memref<11x128x128xbf16, #tpu.memory_space<vmem>>, vector<1x128x128xbf16>
    %28 = vector.shape_cast %27 : vector<1x128x128xbf16> to vector<128x128xbf16>
    %29 = vector.extract_strided_slice %1 {offsets = [2, 0], sizes = [1, 128], strides = [1, 1]} : vector<16x128xf32> to vector<1x128xf32>
    %30 = arith.truncf %22 : vector<128x128xf32> to vector<128x128xbf16>
    %cst_15 = arith.constant dense<0.000000e+00> : vector<128x128xf32>
    %31 = tpu.matmul %30, %25, %cst_15 {dimension_numbers = #tpu.dot_dimension_numbers<[1], [0], [0], [1], [0, 0, 1, 1], [], []>} : vector<128x128xbf16>, vector<128x128xbf16>, vector<128x128xf32> -> vector<128x128xf32>
    %32 = vector.broadcast %26 : vector<1x128xf32> to vector<128x128xf32>
    %33 = arith.addf %31, %32 : vector<128x128xf32>
    %34 = arith.truncf %23 : vector<1x128xf32> to vector<1x128xbf16>
    %cst_16 = arith.constant dense<0.000000e+00> : vector<1x128xf32>
    %35 = tpu.matmul %34, %28, %cst_16 {dimension_numbers = #tpu.dot_dimension_numbers<[1], [0], [0], [1], [0, 0, 1, 1], [], []>} : vector<1x128xbf16>, vector<128x128xbf16>, vector<1x128xf32> -> vector<1x128xf32>
    %36 = arith.addf %35, %29 : vector<1x128xf32>
    %cst_17 = arith.constant 0.000000e+00 : f32
    %37 = vector.broadcast %cst_17 : f32 to vector<1x128xf32>
    %38 = arith.maximumf %36, %37 : vector<1x128xf32>
    %c2 = arith.constant 2 : index
    %c0_18 = arith.constant 0 : index
    %c0_19 = arith.constant 0 : index
    %39 = vector.load %arg2[%c2, %c0_18, %c0_19] : memref<11x128x128xbf16, #tpu.memory_space<vmem>>, vector<1x128x128xbf16>
    %40 = vector.shape_cast %39 : vector<1x128x128xbf16> to vector<128x128xbf16>
    %41 = vector.extract_strided_slice %1 {offsets = [3, 0], sizes = [1, 128], strides = [1, 1]} : vector<16x128xf32> to vector<1x128xf32>
    %c3 = arith.constant 3 : index
    %c0_20 = arith.constant 0 : index
    %c0_21 = arith.constant 0 : index
    %42 = vector.load %arg2[%c3, %c0_20, %c0_21] : memref<11x128x128xbf16, #tpu.memory_space<vmem>>, vector<1x128x128xbf16>
    %43 = vector.shape_cast %42 : vector<1x128x128xbf16> to vector<128x128xbf16>
    %44 = vector.extract_strided_slice %1 {offsets = [4, 0], sizes = [1, 128], strides = [1, 1]} : vector<16x128xf32> to vector<1x128xf32>
    %c4 = arith.constant 4 : index
    %c0_22 = arith.constant 0 : index
    %c0_23 = arith.constant 0 : index
    %45 = vector.load %arg2[%c4, %c0_22, %c0_23] : memref<11x128x128xbf16, #tpu.memory_space<vmem>>, vector<1x128x128xbf16>
    %46 = vector.shape_cast %45 : vector<1x128x128xbf16> to vector<128x128xbf16>
    %47 = vector.extract_strided_slice %1 {offsets = [5, 0], sizes = [1, 128], strides = [1, 1]} : vector<16x128xf32> to vector<1x128xf32>
    %48 = vector.extract_strided_slice %1 {offsets = [6, 0], sizes = [1, 128], strides = [1, 1]} : vector<16x128xf32> to vector<1x128xf32>
    %49 = vector.extract_strided_slice %1 {offsets = [7, 0], sizes = [1, 128], strides = [1, 1]} : vector<16x128xf32> to vector<1x128xf32>
    %50 = arith.truncf %33 : vector<128x128xf32> to vector<128x128xbf16>
    %cst_24 = arith.constant dense<0.000000e+00> : vector<128x128xf32>
    %51 = tpu.matmul %0, %50, %cst_24 {dimension_numbers = #tpu.dot_dimension_numbers<[1], [0], [0], [1], [0, 0, 1, 1], [], []>} : vector<128x128xbf16>, vector<128x128xbf16>, vector<128x128xf32> -> vector<128x128xf32>
    %52 = arith.truncf %51 : vector<128x128xf32> to vector<128x128xbf16>
    %cst_25 = arith.constant dense<0.000000e+00> : vector<128x128xf32>
    %53 = tpu.matmul %52, %40, %cst_25 {dimension_numbers = #tpu.dot_dimension_numbers<[1], [0], [0], [1], [0, 0, 1, 1], [], []>} : vector<128x128xbf16>, vector<128x128xbf16>, vector<128x128xf32> -> vector<128x128xf32>
    %54 = vector.broadcast %41 : vector<1x128xf32> to vector<128x128xf32>
    %55 = arith.addf %53, %54 : vector<128x128xf32>
    %56 = arith.negf %55 : vector<128x128xf32>
    %57 = math.exp %56 : vector<128x128xf32>
    %cst_26 = arith.constant 1.000000e+00 : f32
    %58 = vector.broadcast %cst_26 : f32 to vector<128x128xf32>
    %59 = arith.addf %58, %57 : vector<128x128xf32>
    %60 = arith.divf %58, %59 : vector<128x128xf32>
    %61 = arith.mulf %55, %60 : vector<128x128xf32>
    %62 = arith.truncf %38 : vector<1x128xf32> to vector<1x128xbf16>
    %cst_27 = arith.constant dense<0.000000e+00> : vector<1x128xf32>
    %63 = tpu.matmul %62, %43, %cst_27 {dimension_numbers = #tpu.dot_dimension_numbers<[1], [0], [0], [1], [0, 0, 1, 1], [], []>} : vector<1x128xbf16>, vector<128x128xbf16>, vector<1x128xf32> -> vector<1x128xf32>
    %64 = arith.addf %63, %44 : vector<1x128xf32>
    %65 = arith.negf %64 : vector<1x128xf32>
    %66 = math.exp %65 : vector<1x128xf32>
    %cst_28 = arith.constant 1.000000e+00 : f32
    %67 = vector.broadcast %cst_28 : f32 to vector<1x128xf32>
    %68 = arith.addf %67, %66 : vector<1x128xf32>
    %69 = arith.divf %67, %68 : vector<1x128xf32>
    %70 = arith.mulf %64, %69 : vector<1x128xf32>
    %71 = vector.broadcast %70 : vector<1x128xf32> to vector<128x128xf32>
    %72 = arith.addf %61, %71 : vector<128x128xf32>
    %73 = arith.truncf %72 : vector<128x128xf32> to vector<128x128xbf16>
    %cst_29 = arith.constant dense<0.000000e+00> : vector<128x128xf32>
    %74 = tpu.matmul %73, %46, %cst_29 {dimension_numbers = #tpu.dot_dimension_numbers<[1], [0], [0], [1], [0, 0, 1, 1], [], []>} : vector<128x128xbf16>, vector<128x128xbf16>, vector<128x128xf32> -> vector<128x128xf32>
    %75 = vector.broadcast %47 : vector<1x128xf32> to vector<128x128xf32>
    %76 = arith.addf %74, %75 : vector<128x128xf32>
    %77 = arith.negf %76 : vector<128x128xf32>
    %78 = math.exp %77 : vector<128x128xf32>
    %cst_30 = arith.constant 1.000000e+00 : f32
    %79 = vector.broadcast %cst_30 : f32 to vector<128x128xf32>
    %80 = arith.addf %79, %78 : vector<128x128xf32>
    %81 = arith.divf %79, %80 : vector<128x128xf32>
    %82 = arith.mulf %76, %81 : vector<128x128xf32>
    %cst_31 = arith.constant dense<0.000000e+00> : vector<128xf32>
    %83 = vector.multi_reduction <add>, %82, %cst_31 [1] : vector<128x128xf32> to vector<128xf32>
    %84 = vector.shape_cast %83 : vector<128xf32> to vector<128x1xf32>
    %cst_32 = arith.constant 1.562500e-02 : f32
    %85 = vector.broadcast %cst_32 : f32 to vector<128x1xf32>
    %86 = arith.mulf %84, %85 : vector<128x1xf32>
    %87 = arith.mulf %82, %82 : vector<128x128xf32>
    %cst_33 = arith.constant dense<0.000000e+00> : vector<128xf32>
    %88 = vector.multi_reduction <add>, %87, %cst_33 [1] : vector<128x128xf32> to vector<128xf32>
    %89 = vector.shape_cast %88 : vector<128xf32> to vector<128x1xf32>
    %cst_34 = arith.constant 1.562500e-02 : f32
    %90 = vector.broadcast %cst_34 : f32 to vector<128x1xf32>
    %91 = arith.mulf %89, %90 : vector<128x1xf32>
    %92 = arith.mulf %86, %86 : vector<128x1xf32>
    %93 = arith.subf %91, %92 : vector<128x1xf32>
    %94 = vector.broadcast %86 : vector<128x1xf32> to vector<128x128xf32>
    %95 = arith.subf %82, %94 : vector<128x128xf32>
    %cst_35 = arith.constant 9.99999974E-6 : f32
    %96 = vector.broadcast %cst_35 : f32 to vector<128x1xf32>
    %97 = arith.addf %93, %96 : vector<128x1xf32>
    %98 = math.rsqrt %97 : vector<128x1xf32>
    %99 = vector.broadcast %98 : vector<128x1xf32> to vector<128x128xf32>
    %100 = arith.mulf %95, %99 : vector<128x128xf32>
    %101 = vector.broadcast %48 : vector<1x128xf32> to vector<128x128xf32>
    %102 = arith.mulf %100, %101 : vector<128x128xf32>
    %103 = vector.broadcast %49 : vector<1x128xf32> to vector<128x128xf32>
    %104 = arith.addf %102, %103 : vector<128x128xf32>
    %c5 = arith.constant 5 : index
    %c0_36 = arith.constant 0 : index
    %c0_37 = arith.constant 0 : index
    %105 = vector.load %arg2[%c5, %c0_36, %c0_37] : memref<11x128x128xbf16, #tpu.memory_space<vmem>>, vector<1x128x128xbf16>
    %106 = vector.shape_cast %105 : vector<1x128x128xbf16> to vector<128x128xbf16>
    %107 = vector.extract_strided_slice %1 {offsets = [8, 0], sizes = [1, 128], strides = [1, 1]} : vector<16x128xf32> to vector<1x128xf32>
    %108 = arith.truncf %104 : vector<128x128xf32> to vector<128x128xbf16>
    %cst_38 = arith.constant dense<0.000000e+00> : vector<128x128xf32>
    %109 = tpu.matmul %108, %106, %cst_38 {dimension_numbers = #tpu.dot_dimension_numbers<[1], [0], [0], [1], [0, 0, 1, 1], [], []>} : vector<128x128xbf16>, vector<128x128xbf16>, vector<128x128xf32> -> vector<128x128xf32>
    %110 = vector.broadcast %107 : vector<1x128xf32> to vector<128x128xf32>
    %111 = arith.addf %109, %110 : vector<128x128xf32>
    %112 = arith.negf %111 : vector<128x128xf32>
    %113 = math.exp %112 : vector<128x128xf32>
    %cst_39 = arith.constant 1.000000e+00 : f32
    %114 = vector.broadcast %cst_39 : f32 to vector<128x128xf32>
    %115 = arith.addf %114, %113 : vector<128x128xf32>
    %116 = arith.divf %114, %115 : vector<128x128xf32>
    %117 = arith.mulf %111, %116 : vector<128x128xf32>
    %c6 = arith.constant 6 : index
    %c0_40 = arith.constant 0 : index
    %c0_41 = arith.constant 0 : index
    %118 = vector.load %arg2[%c6, %c0_40, %c0_41] : memref<11x128x128xbf16, #tpu.memory_space<vmem>>, vector<1x128x128xbf16>
    %119 = vector.shape_cast %118 : vector<1x128x128xbf16> to vector<128x128xbf16>
    %120 = vector.extract_strided_slice %1 {offsets = [9, 0], sizes = [1, 128], strides = [1, 1]} : vector<16x128xf32> to vector<1x128xf32>
    %121 = arith.truncf %117 : vector<128x128xf32> to vector<128x128xbf16>
    %cst_42 = arith.constant dense<0.000000e+00> : vector<128x128xf32>
    %122 = tpu.matmul %121, %119, %cst_42 {dimension_numbers = #tpu.dot_dimension_numbers<[1], [0], [0], [1], [0, 0, 1, 1], [], []>} : vector<128x128xbf16>, vector<128x128xbf16>, vector<128x128xf32> -> vector<128x128xf32>
    %123 = vector.broadcast %120 : vector<1x128xf32> to vector<128x128xf32>
    %124 = arith.addf %122, %123 : vector<128x128xf32>
    %c7 = arith.constant 7 : index
    %c0_43 = arith.constant 0 : index
    %c0_44 = arith.constant 0 : index
    %125 = vector.load %arg2[%c7, %c0_43, %c0_44] : memref<11x128x128xbf16, #tpu.memory_space<vmem>>, vector<1x128x128xbf16>
    %126 = vector.shape_cast %125 : vector<1x128x128xbf16> to vector<128x128xbf16>
    %127 = vector.extract_strided_slice %1 {offsets = [10, 0], sizes = [1, 128], strides = [1, 1]} : vector<16x128xf32> to vector<1x128xf32>
    %c8 = arith.constant 8 : index
    %c0_45 = arith.constant 0 : index
    %c0_46 = arith.constant 0 : index
    %128 = vector.load %arg2[%c8, %c0_45, %c0_46] : memref<11x128x128xbf16, #tpu.memory_space<vmem>>, vector<1x128x128xbf16>
    %129 = vector.shape_cast %128 : vector<1x128x128xbf16> to vector<128x128xbf16>
    %130 = vector.extract_strided_slice %1 {offsets = [11, 0], sizes = [1, 128], strides = [1, 1]} : vector<16x128xf32> to vector<1x128xf32>
    %c9 = arith.constant 9 : index
    %c0_47 = arith.constant 0 : index
    %c0_48 = arith.constant 0 : index
    %131 = vector.load %arg2[%c9, %c0_47, %c0_48] : memref<11x128x128xbf16, #tpu.memory_space<vmem>>, vector<1x128x128xbf16>
    %132 = vector.shape_cast %131 : vector<1x128x128xbf16> to vector<128x128xbf16>
    %133 = vector.extract_strided_slice %1 {offsets = [12, 0], sizes = [1, 128], strides = [1, 1]} : vector<16x128xf32> to vector<1x128xf32>
    %134 = vector.extract_strided_slice %1 {offsets = [13, 0], sizes = [1, 128], strides = [1, 1]} : vector<16x128xf32> to vector<1x128xf32>
    %135 = vector.extract_strided_slice %1 {offsets = [14, 0], sizes = [1, 128], strides = [1, 1]} : vector<16x128xf32> to vector<1x128xf32>
    %136 = arith.truncf %124 : vector<128x128xf32> to vector<128x128xbf16>
    %cst_49 = arith.constant dense<0.000000e+00> : vector<128x128xf32>
    %137 = tpu.matmul %136, %126, %cst_49 {dimension_numbers = #tpu.dot_dimension_numbers<[1], [0], [0], [1], [0, 0, 1, 1], [], []>} : vector<128x128xbf16>, vector<128x128xbf16>, vector<128x128xf32> -> vector<128x128xf32>
    %138 = arith.truncf %137 : vector<128x128xf32> to vector<128x128xbf16>
    %cst_50 = arith.constant dense<0.000000e+00> : vector<128x128xf32>
    %139 = tpu.matmul %0, %138, %cst_50 {dimension_numbers = #tpu.dot_dimension_numbers<[1], [0], [0], [1], [0, 0, 1, 1], [], []>} : vector<128x128xbf16>, vector<128x128xbf16>, vector<128x128xf32> -> vector<128x128xf32>
    %140 = vector.broadcast %127 : vector<1x128xf32> to vector<128x128xf32>
    %141 = arith.addf %139, %140 : vector<128x128xf32>
    %142 = arith.negf %141 : vector<128x128xf32>
    %143 = math.exp %142 : vector<128x128xf32>
    %cst_51 = arith.constant 1.000000e+00 : f32
    %144 = vector.broadcast %cst_51 : f32 to vector<128x128xf32>
    %145 = arith.addf %144, %143 : vector<128x128xf32>
    %146 = arith.divf %144, %145 : vector<128x128xf32>
    %147 = arith.mulf %141, %146 : vector<128x128xf32>
    %148 = arith.truncf %38 : vector<1x128xf32> to vector<1x128xbf16>
    %cst_52 = arith.constant dense<0.000000e+00> : vector<1x128xf32>
    %149 = tpu.matmul %148, %129, %cst_52 {dimension_numbers = #tpu.dot_dimension_numbers<[1], [0], [0], [1], [0, 0, 1, 1], [], []>} : vector<1x128xbf16>, vector<128x128xbf16>, vector<1x128xf32> -> vector<1x128xf32>
    %150 = arith.addf %149, %130 : vector<1x128xf32>
    %151 = arith.negf %150 : vector<1x128xf32>
    %152 = math.exp %151 : vector<1x128xf32>
    %cst_53 = arith.constant 1.000000e+00 : f32
    %153 = vector.broadcast %cst_53 : f32 to vector<1x128xf32>
    %154 = arith.addf %153, %152 : vector<1x128xf32>
    %155 = arith.divf %153, %154 : vector<1x128xf32>
    %156 = arith.mulf %150, %155 : vector<1x128xf32>
    %157 = vector.broadcast %156 : vector<1x128xf32> to vector<128x128xf32>
    %158 = arith.addf %147, %157 : vector<128x128xf32>
    %159 = arith.truncf %158 : vector<128x128xf32> to vector<128x128xbf16>
    %cst_54 = arith.constant dense<0.000000e+00> : vector<128x128xf32>
    %160 = tpu.matmul %159, %132, %cst_54 {dimension_numbers = #tpu.dot_dimension_numbers<[1], [0], [0], [1], [0, 0, 1, 1], [], []>} : vector<128x128xbf16>, vector<128x128xbf16>, vector<128x128xf32> -> vector<128x128xf32>
    %161 = vector.broadcast %133 : vector<1x128xf32> to vector<128x128xf32>
    %162 = arith.addf %160, %161 : vector<128x128xf32>
    %163 = arith.negf %162 : vector<128x128xf32>
    %164 = math.exp %163 : vector<128x128xf32>
    %cst_55 = arith.constant 1.000000e+00 : f32
    %165 = vector.broadcast %cst_55 : f32 to vector<128x128xf32>
    %166 = arith.addf %165, %164 : vector<128x128xf32>
    %167 = arith.divf %165, %166 : vector<128x128xf32>
    %168 = arith.mulf %162, %167 : vector<128x128xf32>
    %cst_56 = arith.constant dense<0.000000e+00> : vector<128xf32>
    %169 = vector.multi_reduction <add>, %168, %cst_56 [1] : vector<128x128xf32> to vector<128xf32>
    %170 = vector.shape_cast %169 : vector<128xf32> to vector<128x1xf32>
    %cst_57 = arith.constant 3.125000e-02 : f32
    %171 = vector.broadcast %cst_57 : f32 to vector<128x1xf32>
    %172 = arith.mulf %170, %171 : vector<128x1xf32>
    %173 = arith.mulf %168, %168 : vector<128x128xf32>
    %cst_58 = arith.constant dense<0.000000e+00> : vector<128xf32>
    %174 = vector.multi_reduction <add>, %173, %cst_58 [1] : vector<128x128xf32> to vector<128xf32>
    %175 = vector.shape_cast %174 : vector<128xf32> to vector<128x1xf32>
    %cst_59 = arith.constant 3.125000e-02 : f32
    %176 = vector.broadcast %cst_59 : f32 to vector<128x1xf32>
    %177 = arith.mulf %175, %176 : vector<128x1xf32>
    %178 = arith.mulf %172, %172 : vector<128x1xf32>
    %179 = arith.subf %177, %178 : vector<128x1xf32>
    %180 = vector.broadcast %172 : vector<128x1xf32> to vector<128x128xf32>
    %181 = arith.subf %168, %180 : vector<128x128xf32>
    %cst_60 = arith.constant 9.99999974E-6 : f32
    %182 = vector.broadcast %cst_60 : f32 to vector<128x1xf32>
    %183 = arith.addf %179, %182 : vector<128x1xf32>
    %184 = math.rsqrt %183 : vector<128x1xf32>
    %185 = vector.broadcast %184 : vector<128x1xf32> to vector<128x128xf32>
    %186 = arith.mulf %181, %185 : vector<128x128xf32>
    %187 = vector.broadcast %134 : vector<1x128xf32> to vector<128x128xf32>
    %188 = arith.mulf %186, %187 : vector<128x128xf32>
    %189 = vector.broadcast %135 : vector<1x128xf32> to vector<128x128xf32>
    %190 = arith.addf %188, %189 : vector<128x128xf32>
    %c10 = arith.constant 10 : index
    %c0_61 = arith.constant 0 : index
    %c0_62 = arith.constant 0 : index
    %191 = vector.load %arg2[%c10, %c0_61, %c0_62] : memref<11x128x128xbf16, #tpu.memory_space<vmem>>, vector<1x128x128xbf16>
    %192 = vector.shape_cast %191 : vector<1x128x128xbf16> to vector<128x128xbf16>
    %193 = vector.extract_strided_slice %1 {offsets = [15, 0], sizes = [1, 128], strides = [1, 1]} : vector<16x128xf32> to vector<1x128xf32>
    %194 = arith.truncf %190 : vector<128x128xf32> to vector<128x128xbf16>
    %cst_63 = arith.constant dense<0.000000e+00> : vector<128x128xf32>
    %195 = tpu.matmul %194, %192, %cst_63 {dimension_numbers = #tpu.dot_dimension_numbers<[1], [0], [0], [1], [0, 0, 1, 1], [], []>} : vector<128x128xbf16>, vector<128x128xbf16>, vector<128x128xf32> -> vector<128x128xf32>
    %196 = vector.broadcast %193 : vector<1x128xf32> to vector<128x128xf32>
    %197 = arith.addf %195, %196 : vector<128x128xf32>
    %c0_64 = arith.constant 0 : index
    %c0_65 = arith.constant 0 : index
    %198 = vector.load %arg4[%c0_64, %c0_65] : memref<128x128xf32, #tpu.memory_space<vmem>>, vector<128x128xf32>
    tpu.vector_store %arg4[%c0_64, %c0_65], %197 {strides = array<i32>} : memref<128x128xf32, #tpu.memory_space<vmem>>, vector<128x128xf32>,
    return
  }
}

</mosaic_0001>

<llo_original>
// kernel: tpu_custom_call.1
$region0: #{tpu_custom_call.1}
  #allocation0 [shape = 'u32[]', space=smem, size = 0x4, offset = 0x4, fixed_abs, tag = 'smem constant byte address 0x4 - core index']
  #allocation1 [shape = 'u32[144,128]{1,0:T(1,128)}', space=vmem, size = 0x12000, scoped, tag = 'internal scratch']
  %s0 = inlined_call_operand.hbm [shape: f32[128,128], index: 0, kind: input, shape index: {}]
  %s1 = inlined_call_operand.hbm [shape: bf16[128,128], index: 1, kind: input, shape index: {}]
  %s2 = inlined_call_operand.hbm [shape: bf16[11,128,128], index: 2, kind: input, shape index: {}]
  %s3 = inlined_call_operand.hbm [shape: f32[16,128], index: 3, kind: input, shape index: {}]
  %s4 = inlined_call_operand.hbm [shape: f32[128,128], index: 4, kind: output, shape index: {}]
  %s5 = sld [smem:[#allocation0]]
  $region42: #{tpu_custom_call.1} parent=0
    _
  %s7 = ssub.s32 1, %s5
  %s8 = scalar_select 0, %s7, %s5
  $region1: #{tpu_custom_call.1} parent=0
    #allocation2 [shape = 'u8[65536]{0}', space=vmem, size = 0x10000, scoped, tag = 'input window, operand 0, single buffered']
    #allocation3 [shape = 's32[1]{0}', space=sflag, size = 0x4, scoped, tag = 'scoped memory for tpu_custom_call.1']
    #allocation4 [shape = 's32[1]{0}', space=sflag, size = 0x4, scoped, tag = 'scoped memory for tpu_custom_call.1']
    #allocation5 [shape = 'u8[32768]{0}', space=vmem, size = 0x8000, scoped, tag = 'input window, operand 1, single buffered']
    #allocation6 [shape = 's32[1]{0}', space=sflag, size = 0x4, scoped, tag = 'scoped memory for tpu_custom_call.1']
    #allocation7 [shape = 'u8[360448]{0}', space=vmem, size = 0x58000, scoped, tag = 'input window, operand 2, single buffered']
    #allocation8 [shape = 'u8[8192]{0}', space=vmem, size = 0x2000, scoped, tag = 'input window, operand 3, single buffered']
    #allocation9 [shape = 's32[1]{0}', space=sflag, size = 0x4, scoped, tag = 'scoped memory for tpu_custom_call.1']
    #allocation10 [shape = 'u8[65536]{0}', space=vmem, size = 0x10000, scoped, tag = 'output window, operand 0, single buffered']
    %9 = vsyncpa [#allocation3], 0
    %10 = vsyncpa [#allocation6], 0
    %11 = vsyncpa [#allocation9], 0
    %12 = vsyncpa [#allocation4], 0
    // Predicated region
    $region2: #{tpu_custom_call.1} parent=1 // pred_check
      _
    $region3: #{tpu_custom_call.1} parent=1 // pred_check_branch
      %14 = sbr.rel (0) target = $region5
    $region4: #{tpu_custom_call.1} parent=1 // pred_region
      %s16 = ssub.s32 2048, 2048
      %17 = vsyncadd [#allocation3], %s16
      %s18 = sshll.u32 [#allocation2], 4
      %s19 = int_to_ptr.vmem [resolvable:$true] %s18
      %24 = dma.hbm_to_vmem [thread:$0]  %s0, 2048, %s19, [#allocation3], 128, 128, 8
    $region5: #{tpu_custom_call.1} parent=1 // pred_fallthru
      _
    // Predicated region
    $region6: #{tpu_custom_call.1} parent=1 // pred_check
      _
    $region7: #{tpu_custom_call.1} parent=1 // pred_check_branch
      %26 = sbr.rel (0) target = $region9
    $region8: #{tpu_custom_call.1} parent=1 // pred_region
      %s28 = ssub.s32 1024, 1024
      %29 = vsyncadd [#allocation6], %s28
      %s30 = sshll.u32 [#allocation5], 4
      %s31 = int_to_ptr.vmem [resolvable:$true] %s30
      %36 = dma.hbm_to_vmem [thread:$0]  %s1, 1024, %s31, [#allocation6], 64, 64, 4
    $region9: #{tpu_custom_call.1} parent=1 // pred_fallthru
      _
    // Predicated region
    $region10: #{tpu_custom_call.1} parent=1 // pred_check
      _
    $region11: #{tpu_custom_call.1} parent=1 // pred_check_branch
      %38 = sbr.rel (0) target = $region13
    $region12: #{tpu_custom_call.1} parent=1 // pred_region
      %s40 = ssub.s32 11264, 11264
      %41 = vsyncadd [#allocation6], %s40
      %s42 = sshll.u32 [#allocation7], 4
      %s43 = int_to_ptr.vmem [resolvable:$true] %s42
      %48 = dma.hbm_to_vmem [thread:$0]  %s2, 11264, %s43, [#allocation6], 64, 64, 4
    $region13: #{tpu_custom_call.1} parent=1 // pred_fallthru
      _
    // Predicated region
    $region14: #{tpu_custom_call.1} parent=1 // pred_check
      _
    $region15: #{tpu_custom_call.1} parent=1 // pred_check_branch
      %50 = sbr.rel (0) target = $region17
    $region16: #{tpu_custom_call.1} parent=1 // pred_region
      %s52 = ssub.s32 256, 256
      %53 = vsyncadd [#allocation9], %s52
      %s54 = sshll.u32 [#allocation8], 4
      %s55 = int_to_ptr.vmem [resolvable:$true] %s54
      %60 = dma.hbm_to_vmem [thread:$0]  %s3, 256, %s55, [#allocation9], 128, 128, 8
    $region17: #{tpu_custom_call.1} parent=1 // pred_fallthru
      _
    // Predicated region
    $region18: #{tpu_custom_call.1} parent=1 // pred_check
      _
    $region19: #{tpu_custom_call.1} parent=1 // pred_check_branch
      %62 = sbr.rel (0) target = $region21
    $region20: #{tpu_custom_call.1} parent=1 // pred_region
      %63 = dma.done [#allocation3], 2048
    $region21: #{tpu_custom_call.1} parent=1 // pred_fallthru
      _
    // Predicated region
    $region22: #{tpu_custom_call.1} parent=1 // pred_check
      _
    $region23: #{tpu_custom_call.1} parent=1 // pred_check_branch
      %65 = sbr.rel (0) target = $region25
    $region24: #{tpu_custom_call.1} parent=1 // pred_region
      %66 = dma.done [#allocation6], 1024
    $region25: #{tpu_custom_call.1} parent=1 // pred_fallthru
      _
    // Predicated region
    $region26: #{tpu_custom_call.1} parent=1 // pred_check
      _
    $region27: #{tpu_custom_call.1} parent=1 // pred_check_branch
      %68 = sbr.rel (0) target = $region29
    $region28: #{tpu_custom_call.1} parent=1 // pred_region
      %69 = dma.done [#allocation6], 11264
    $region29: #{tpu_custom_call.1} parent=1 // pred_fallthru
      _
    // Predicated region
    $region30: #{tpu_custom_call.1} parent=1 // pred_check
      _
    $region31: #{tpu_custom_call.1} parent=1 // pred_check_branch
      %71 = sbr.rel (0) target = $region33
    $region32: #{tpu_custom_call.1} parent=1 // pred_region
      %72 = dma.done [#allocation9], 256
    $region33: #{tpu_custom_call.1} parent=1 // pred_fallthru
      _
    %v74 = vld [vmem:[#allocation5] sm:$0xf]
    %v75 = vld [vmem:[#allocation5 + $0x4] sm:$0xf]
    %v76 = vld [vmem:[#allocation5 + $0x8] sm:$0xf]
    %v77 = vld [vmem:[#allocation5 + $0xc] sm:$0xf]
    %v78 = vld [vmem:[#allocation5 + $0x10] sm:$0xf]
    %v79 = vld [vmem:[#allocation5 + $0x14] sm:$0xf]
    %v80 = vld [vmem:[#allocation5 + $0x18] sm:$0xf]
    %v81 = vld [vmem:[#allocation5 + $0x1c] sm:$0xf]
    %v82 = vld [vmem:[#allocation5 + $0x20] sm:$0xf]
    %v83 = vld [vmem:[#allocation5 + $0x24] sm:$0xf]
    %v84 = vld [vmem:[#allocation5 + $0x28] sm:$0xf]
    %v85 = vld [vmem:[#allocation5 + $0x2c] sm:$0xf]
    %v86 = vld [vmem:[#allocation5 + $0x30] sm:$0xf]
    %v87 = vld [vmem:[#allocation5 + $0x34] sm:$0xf]
    %v88 = vld [vmem:[#allocation5 + $0x38] sm:$0xf]
    %v89 = vld [vmem:[#allocation5 + $0x3c] sm:$0xf]
    %v90 = vld [vmem:[#allocation8] sm:$0xff]
    %v91 = vld [vmem:[#allocation8 + $0x8] sm:$0xff]
    %v92 = vld [vmem:[#allocation2] sm:$0xff]
    %v93 = vld [vmem:[#allocation2 + $0x8] sm:$0xff]
    %v94 = vld [vmem:[#allocation2 + $0x10] sm:$0xff]
    %v95 = vld [vmem:[#allocation2 + $0x18] sm:$0xff]
    %v96 = vld [vmem:[#allocation2 + $0x20] sm:$0xff]
    %v97 = vld [vmem:[#allocation2 + $0x28] sm:$0xff]
    %v98 = vld [vmem:[#allocation2 + $0x30] sm:$0xff]
    %v99 = vld [vmem:[#allocation2 + $0x38] sm:$0xff]
    %v100 = vld [vmem:[#allocation2 + $0x40] sm:$0xff]
    %v101 = vld [vmem:[#allocation2 + $0x48] sm:$0xff]
    %v102 = vld [vmem:[#allocation2 + $0x50] sm:$0xff]
    %v103 = vld [vmem:[#allocation2 + $0x58] sm:$0xff]
    %v104 = vld [vmem:[#allocation2 + $0x60] sm:$0xff]
    %v105 = vld [vmem:[#allocation2 + $0x68] sm:$0xff]
    %v106 = vld [vmem:[#allocation2 + $0x70] sm:$0xff]
    %v107 = vld [vmem:[#allocation2 + $0x78] sm:$0xff]
    %v108 = vlaneseq
    %v109 = vshrl.u32 %v108, 7
    %v110 = vadd.s32 %v109, 8
    %v111 = vadd.s32 %v109, 16
    %v112 = vadd.s32 %v109, 24
    %v113 = vadd.s32 %v109, 32
    %v114 = vadd.s32 %v109, 40
    %v115 = vadd.s32 %v109, 48
    %v116 = vadd.s32 %v109, 56
    %v117 = vadd.s32 %v109, 64
    %v118 = vadd.s32 %v109, 72
    %v119 = vadd.s32 %v109, 80
    %v120 = vadd.s32 %v109, 88
    %v121 = vadd.s32 %v109, 96
    %v122 = vadd.s32 %v109, 104
    %v123 = vadd.s32 %v109, 112
    %v124 = vadd.s32 %v109, 120
    %vm125 = vcmp.lt.s32.totalorder %v109, 16
    %vm126 = vcmp.lt.s32.totalorder %v110, 16
    %vm127 = vcmp.lt.s32.totalorder %v111, 16
    %vm128 = vcmp.lt.s32.totalorder %v112, 16
    %vm129 = vcmp.lt.s32.totalorder %v113, 16
    %vm130 = vcmp.lt.s32.totalorder %v114, 16
    %vm131 = vcmp.lt.s32.totalorder %v115, 16
    %vm132 = vcmp.lt.s32.totalorder %v116, 16
    %vm133 = vcmp.lt.s32.totalorder %v117, 16
    %vm134 = vcmp.lt.s32.totalorder %v118, 16
    %vm135 = vcmp.lt.s32.totalorder %v119, 16
    %vm136 = vcmp.lt.s32.totalorder %v120, 16
    %vm137 = vcmp.lt.s32.totalorder %v121, 16
    %vm138 = vcmp.lt.s32.totalorder %v122, 16
    %vm139 = vcmp.lt.s32.totalorder %v123, 16
    %vm140 = vcmp.lt.s32.totalorder %v124, 16
    %v141 = vsel %vm125, %v92, inf
    %v142 = vsel %vm126, %v93, inf
    %v143 = vsel %vm127, %v94, inf
    %v144 = vsel %vm128, %v95, inf
    %v145 = vsel %vm129, %v96, inf
    %v146 = vsel %vm130, %v97, inf
    %v147 = vsel %vm131, %v98, inf
    %v148 = vsel %vm132, %v99, inf
    %v149 = vsel %vm133, %v100, inf
    %v150 = vsel %vm134, %v101, inf
    %v151 = vsel %vm135, %v102, inf
    %v152 = vsel %vm136, %v103, inf
    %v153 = vsel %vm137, %v104, inf
    %v154 = vsel %vm138, %v105, inf
    %v155 = vsel %vm139, %v106, inf
    %v156 = vsel %vm140, %v107, inf
    %v157 = vmin.f32 %v141, %v145
    %v158 = vmin.f32 %v142, %v146
    %v159 = vmin.f32 %v143, %v147
    %v160 = vmin.f32 %v144, %v148
    %v161 = vmin.f32 %v157, %v149
    %v162 = vmin.f32 %v158, %v150
    %v163 = vmin.f32 %v159, %v151
    %v164 = vmin.f32 %v160, %v152
    %v165 = vmin.f32 %v161, %v153
    %v166 = vmin.f32 %v162, %v154
    %v167 = vmin.f32 %v163, %v155
    %v168 = vmin.f32 %v164, %v156
    %v169 = vmin.f32 %v165, %v166
    %v170 = vmin.f32 %v167, %v168
    %v171 = vmin.f32 %v169, %v170
    %v172 = vrot.slane %v171, 4
    %v173 = vmin.f32 %v171, %v172
    %v174 = vrot.slane %v173, 2
    %v175 = vmin.f32 %v173, %v174
    %v176 = vrot.slane %v175, 1
    %v177 = vmin.f32 %v175, %v176
    %v178 = vsel %vm125, %v92, -inf
    %v179 = vsel %vm126, %v93, -inf
    %v180 = vsel %vm127, %v94, -inf
    %v181 = vsel %vm128, %v95, -inf
    %v182 = vsel %vm129, %v96, -inf
    %v183 = vsel %vm130, %v97, -inf
    %v184 = vsel %vm131, %v98, -inf
    %v185 = vsel %vm132, %v99, -inf
    %v186 = vsel %vm133, %v100, -inf
    %v187 = vsel %vm134, %v101, -inf
    %v188 = vsel %vm135, %v102, -inf
    %v189 = vsel %vm136, %v103, -inf
    %v190 = vsel %vm137, %v104, -inf
    %v191 = vsel %vm138, %v105, -inf
    %v192 = vsel %vm139, %v106, -inf
    %v193 = vsel %vm140, %v107, -inf
    %v194 = vmax.f32 %v178, %v182
    %v195 = vmax.f32 %v179, %v183
    %v196 = vmax.f32 %v180, %v184
    %v197 = vmax.f32 %v181, %v185
    %v198 = vmax.f32 %v194, %v186
    %v199 = vmax.f32 %v195, %v187
    %v200 = vmax.f32 %v196, %v188
    %v201 = vmax.f32 %v197, %v189
    %v202 = vmax.f32 %v198, %v190
    %v203 = vmax.f32 %v199, %v191
    %v204 = vmax.f32 %v200, %v192
    %v205 = vmax.f32 %v201, %v193
    %v206 = vmax.f32 %v202, %v203
    %v207 = vmax.f32 %v204, %v205
    %v208 = vmax.f32 %v206, %v207
    %v209 = vrot.slane %v208, 4
    %v210 = vmax.f32 %v208, %v209
    %v211 = vrot.slane %v210, 2
    %v212 = vmax.f32 %v210, %v211
    %v213 = vrot.slane %v212, 1
    %v214 = vmax.f32 %v212, %v213
    %v215 = vsub.f32 %v92, %v177
    %v216 = vsub.f32 %v93, %v177
    %v217 = vsub.f32 %v94, %v177
    %v218 = vsub.f32 %v95, %v177
    %v219 = vsub.f32 %v96, %v177
    %v220 = vsub.f32 %v97, %v177
    %v221 = vsub.f32 %v98, %v177
    %v222 = vsub.f32 %v99, %v177
    %v223 = vsub.f32 %v100, %v177
    %v224 = vsub.f32 %v101, %v177
    %v225 = vsub.f32 %v102, %v177
    %v226 = vsub.f32 %v103, %v177
    %v227 = vsub.f32 %v104, %v177
    %v228 = vsub.f32 %v105, %v177
    %v229 = vsub.f32 %v106, %v177
    %v230 = vsub.f32 %v107, %v177
    %v231 = vsub.f32 %v214, %v177
    %v232 = vadd.f32 %v231, 1e-08
    %v233 = vrcp.pop %v232
    %v234 = vmul.f32 %v215, %v233
    %v235 = vmul.f32 %v216, %v233
    %v236 = vmul.f32 %v217, %v233
    %v237 = vmul.f32 %v218, %v233
    %v238 = vmul.f32 %v219, %v233
    %v239 = vmul.f32 %v220, %v233
    %v240 = vmul.f32 %v221, %v233
    %v241 = vmul.f32 %v222, %v233
    %v242 = vmul.f32 %v223, %v233
    %v243 = vmul.f32 %v224, %v233
    %v244 = vmul.f32 %v225, %v233
    %v245 = vmul.f32 %v226, %v233
    %v246 = vmul.f32 %v227, %v233
    %v247 = vmul.f32 %v228, %v233
    %v248 = vmul.f32 %v229, %v233
    %v249 = vmul.f32 %v230, %v233
    %v250 = vsel %vm125, %v234, 0.0
    %v251 = vsel %vm126, %v235, 0.0
    %v252 = vsel %vm127, %v236, 0.0
    %v253 = vsel %vm128, %v237, 0.0
    %v254 = vsel %vm129, %v238, 0.0
    %v255 = vsel %vm130, %v239, 0.0
    %v256 = vsel %vm131, %v240, 0.0
    %v257 = vsel %vm132, %v241, 0.0
    %v258 = vsel %vm133, %v242, 0.0
    %v259 = vsel %vm134, %v243, 0.0
    %v260 = vsel %vm135, %v244, 0.0
    %v261 = vsel %vm136, %v245, 0.0
    %v262 = vsel %vm137, %v246, 0.0
    %v263 = vsel %vm138, %v247, 0.0
    %v264 = vsel %vm139, %v248, 0.0
    %v265 = vsel %vm140, %v249, 0.0
    %v266 = vld [vmem:[#allocation7] sm:$0xf]
    %v267 = vld [vmem:[#allocation7 + $0x4] sm:$0xf]
    %v268 = vld [vmem:[#allocation7 + $0x8] sm:$0xf]
    %v269 = vld [vmem:[#allocation7 + $0xc] sm:$0xf]
    %v270 = vld [vmem:[#allocation7 + $0x10] sm:$0xf]
    %v271 = vld [vmem:[#allocation7 + $0x14] sm:$0xf]
    %v272 = vld [vmem:[#allocation7 + $0x18] sm:$0xf]
    %v273 = vld [vmem:[#allocation7 + $0x1c] sm:$0xf]
    %v274 = vld [vmem:[#allocation7 + $0x20] sm:$0xf]
    %v275 = vld [vmem:[#allocation7 + $0x24] sm:$0xf]
    %v276 = vld [vmem:[#allocation7 + $0x28] sm:$0xf]
    %v277 = vld [vmem:[#allocation7 + $0x2c] sm:$0xf]
    %v278 = vld [vmem:[#allocation7 + $0x30] sm:$0xf]
    %v279 = vld [vmem:[#allocation7 + $0x34] sm:$0xf]
    %v280 = vld [vmem:[#allocation7 + $0x38] sm:$0xf]
    %v281 = vld [vmem:[#allocation7 + $0x3c] sm:$0xf]
    %s282 = scalar_lea.vmem [#allocation7], 64
    %v283 = vld [vmem:[%s282] sm:$0xf]
    %v284 = vld [vmem:[%s282 + $0x4] sm:$0xf]
    %v285 = vld [vmem:[%s282 + $0x8] sm:$0xf]
    %v286 = vld [vmem:[%s282 + $0xc] sm:$0xf]
    %v287 = vld [vmem:[%s282 + $0x10] sm:$0xf]
    %v288 = vld [vmem:[%s282 + $0x14] sm:$0xf]
    %v289 = vld [vmem:[%s282 + $0x18] sm:$0xf]
    %v290 = vld [vmem:[%s282 + $0x1c] sm:$0xf]
    %v291 = vld [vmem:[%s282 + $0x20] sm:$0xf]
    %v292 = vld [vmem:[%s282 + $0x24] sm:$0xf]
    %v293 = vld [vmem:[%s282 + $0x28] sm:$0xf]
    %v294 = vld [vmem:[%s282 + $0x2c] sm:$0xf]
    %v295 = vld [vmem:[%s282 + $0x30] sm:$0xf]
    %v296 = vld [vmem:[%s282 + $0x34] sm:$0xf]
    %v297 = vld [vmem:[%s282 + $0x38] sm:$0xf]
    %v298 = vld [vmem:[%s282 + $0x3c] sm:$0xf]
    %v299 = vpack.c.bf16 %v251, %v250
    %v300 = vpack.c.bf16 %v253, %v252
    %v301 = vpack.c.bf16 %v255, %v254
    %v302 = vpack.c.bf16 %v257, %v256
    %v303 = vpack.c.bf16 %v259, %v258
    %v304 = vpack.c.bf16 %v261, %v260
    %v305 = vpack.c.bf16 %v263, %v262
    %v306 = vpack.c.bf16 %v265, %v264
    %v307 = vlaneseq
    %v308 = vshrl.u32 %v307, 7
    %v309 = vsub.s32 1, %v308
    %v310 = vrot.slane %v90, %v309
    %v327 = vunpack.c.l.b16 %v266
    %v328 = vunpack.c.l.b16 %v267
    %v329 = vunpack.c.l.b16 %v268
    %v330 = vunpack.c.l.b16 %v269
    %v331 = vunpack.c.l.b16 %v270
    %v332 = vunpack.c.l.b16 %v271
    %v333 = vunpack.c.l.b16 %v272
    %v334 = vunpack.c.l.b16 %v273
    %v335 = vunpack.c.l.b16 %v274
    %v336 = vunpack.c.l.b16 %v275
    %v337 = vunpack.c.l.b16 %v276
    %v338 = vunpack.c.l.b16 %v277
    %v339 = vunpack.c.l.b16 %v278
    %v340 = vunpack.c.l.b16 %v279
    %v341 = vunpack.c.l.b16 %v280
    %v342 = vunpack.c.l.b16 %v281
    %v343 = vpack.c.b16 %v328, %v327
    %v344 = vpack.c.b16 %v330, %v329
    %v345 = vpack.c.b16 %v332, %v331
    %v346 = vpack.c.b16 %v334, %v333
    %v347 = vpack.c.b16 %v336, %v335
    %v348 = vpack.c.b16 %v338, %v337
    %v349 = vpack.c.b16 %v340, %v339
    %v350 = vpack.c.b16 %v342, %v341
    %359 = vmatprep.subr.bf16.mxu0 0
    %360 = vmatpush1.bf16.msra.mxu0 %v343
    %361 = vmatprep.subr.bf16.mxu0 0
    %362 = vmatpush1.bf16.msra.mxu0 %v344
    %363 = vmatprep.subr.bf16.mxu0 0
    %364 = vmatpush1.bf16.msra.mxu0 %v345
    %365 = vmatprep.subr.bf16.mxu0 0
    %366 = vmatpush1.bf16.msra.mxu0 %v346
    %367 = vmatprep.subr.bf16.mxu0 0
    %368 = vmatpush1.bf16.msra.mxu0 %v347
    %369 = vmatprep.subr.bf16.mxu0 0
    %370 = vmatpush1.bf16.msra.mxu0 %v348
    %371 = vmatprep.subr.bf16.mxu0 0
    %372 = vmatpush1.bf16.msra.mxu0 %v349
    %373 = vmatprep.subr.bf16.mxu0 0
    %374 = vmatpush1.bf16.msra.mxu0 %v350
    %375 = vmatprep.subr.bf16.mxu0 0
    %376 = vmatpush1.bf16.msra.mxu0 0
    %377 = vmatprep.subr.bf16.mxu0 0
    %378 = vmatpush1.bf16.msra.mxu0 0
    %379 = vmatprep.subr.bf16.mxu0 0
    %380 = vmatpush1.bf16.msra.mxu0 0
    %381 = vmatprep.subr.bf16.mxu0 0
    %382 = vmatpush1.bf16.msra.mxu0 0
    %383 = vmatprep.subr.bf16.mxu0 0
    %384 = vmatpush1.bf16.msra.mxu0 0
    %385 = vmatprep.subr.bf16.mxu0 0
    %386 = vmatpush1.bf16.msra.mxu0 0
    %387 = vmatprep.subr.bf16.mxu0 0
    %388 = vmatpush1.bf16.msra.mxu0 0
    %389 = vmatprep.subr.bf16.mxu0 0
    %390 = vmatpush1.bf16.msra.mxu0 0
    %391 = vmatprep.mubr.bf16.mxu0 0
    %392 = vmatmul.mubr.bf16.gmra.mrb[0].mxu0 %v299
    %v393 = vpop.f32.mrb[0].mxu0
    %v394 = vadd.f32 %v310, %v393
    %v395 = vpop.f32.mrb[0].mxu0
    %v396 = vpop.f32.mrb[0].mxu0
    %v397 = vadd.f32 %v310, %v396
    %v398 = vpop.f32.mrb[0].mxu0
    %399 = vmatprep.mubr.bf16.mxu0 0
    %400 = vmatmul.mubr.bf16.gmra.mrb[0].mxu0 %v300
    %v401 = vpop.f32.mrb[0].mxu0
    %v402 = vadd.f32 %v310, %v401
    %v403 = vpop.f32.mrb[0].mxu0
    %v404 = vpop.f32.mrb[0].mxu0
    %v405 = vadd.f32 %v310, %v404
    %v406 = vpop.f32.mrb[0].mxu0
    %407 = vmatprep.mubr.bf16.mxu0 0
    %408 = vmatmul.mubr.bf16.gmra.mrb[0].mxu0 %v301
    %v409 = vpop.f32.mrb[0].mxu0
    %v410 = vadd.f32 %v310, %v409
    %v411 = vpop.f32.mrb[0].mxu0
    %v412 = vpop.f32.mrb[0].mxu0
    %v413 = vadd.f32 %v310, %v412
    %v414 = vpop.f32.mrb[0].mxu0
    %415 = vmatprep.mubr.bf16.mxu0 0
    %416 = vmatmul.mubr.bf16.gmra.mrb[0].mxu0 %v302
    %v417 = vpop.f32.mrb[0].mxu0
    %v418 = vadd.f32 %v310, %v417
    %v419 = vpop.f32.mrb[0].mxu0
    %v420 = vpop.f32.mrb[0].mxu0
    %v421 = vadd.f32 %v310, %v420
    %v422 = vpop.f32.mrb[0].mxu0
    %423 = vmatprep.mubr.bf16.mxu0 0
    %424 = vmatmul.mubr.bf16.gmra.mrb[0].mxu0 %v303
    %v425 = vpop.f32.mrb[0].mxu0
    %v426 = vadd.f32 %v310, %v425
    %v427 = vpop.f32.mrb[0].mxu0
    %v428 = vpop.f32.mrb[0].mxu0
    %v429 = vadd.f32 %v310, %v428
    %v430 = vpop.f32.mrb[0].mxu0
    %431 = vmatprep.mubr.bf16.mxu0 0
    %432 = vmatmul.mubr.bf16.gmra.mrb[0].mxu0 %v304
    %v433 = vpop.f32.mrb[0].mxu0
    %v434 = vadd.f32 %v310, %v433
    %v435 = vpop.f32.mrb[0].mxu0
    %v436 = vpop.f32.mrb[0].mxu0
    %v437 = vadd.f32 %v310, %v436
    %v438 = vpop.f32.mrb[0].mxu0
    %439 = vmatprep.mubr.bf16.mxu0 0
    %440 = vmatmul.mubr.bf16.gmra.mrb[0].mxu0 %v305
    %v441 = vpop.f32.mrb[0].mxu0
    %v442 = vadd.f32 %v310, %v441
    %v443 = vpop.f32.mrb[0].mxu0
    %v444 = vpop.f32.mrb[0].mxu0
    %v445 = vadd.f32 %v310, %v444
    %v446 = vpop.f32.mrb[0].mxu0
    %447 = vmatprep.mubr.bf16.mxu0 0
    %448 = vmatmul.mubr.bf16.gmra.mrb[0].mxu0 %v306
    %v449 = vpop.f32.mrb[0].mxu0
    %v450 = vadd.f32 %v310, %v449
    %v451 = vpop.f32.mrb[0].mxu0
    %v452 = vpop.f32.mrb[0].mxu0
    %v453 = vadd.f32 %v310, %v452
    %v454 = vpop.f32.mrb[0].mxu0
    %455 = vdwg.mxu0
    %v456 = vpack.c.bf16 %v90, %v90
    %v473 = vunpack.c.l.b16 %v283
    %v474 = vunpack.c.l.b16 %v284
    %v475 = vunpack.c.l.b16 %v285
    %v476 = vunpack.c.l.b16 %v286
    %v477 = vunpack.c.l.b16 %v287
    %v478 = vunpack.c.l.b16 %v288
    %v479 = vunpack.c.l.b16 %v289
    %v480 = vunpack.c.l.b16 %v290
    %v481 = vunpack.c.l.b16 %v291
    %v482 = vunpack.c.l.b16 %v292
    %v483 = vunpack.c.l.b16 %v293
    %v484 = vunpack.c.l.b16 %v294
    %v485 = vunpack.c.l.b16 %v295
    %v486 = vunpack.c.l.b16 %v296
    %v487 = vunpack.c.l.b16 %v297
    %v488 = vunpack.c.l.b16 %v298
    %v489 = vpack.c.b16 %v474, %v473
    %v490 = vpack.c.b16 %v476, %v475
    %v491 = vpack.c.b16 %v478, %v477
    %v492 = vpack.c.b16 %v480, %v479
    %v493 = vpack.c.b16 %v482, %v481
    %v494 = vpack.c.b16 %v484, %v483
    %v495 = vpack.c.b16 %v486, %v485
    %v496 = vpack.c.b16 %v488, %v487
    %v506 = vrot.slane %v90, 2
    %508 = vmatprep.subr.bf16.mxu0 0
    %509 = vmatpush1.bf16.msra.mxu0 %v489
    %510 = vmatprep.subr.bf16.mxu0 0
    %511 = vmatpush1.bf16.msra.mxu0 %v490
    %512 = vmatprep.subr.bf16.mxu0 0
    %513 = vmatpush1.bf16.msra.mxu0 %v491
    %514 = vmatprep.subr.bf16.mxu0 0
    %515 = vmatpush1.bf16.msra.mxu0 %v492
    %516 = vmatprep.subr.bf16.mxu0 0
    %517 = vmatpush1.bf16.msra.mxu0 %v493
    %518 = vmatprep.subr.bf16.mxu0 0
    %519 = vmatpush1.bf16.msra.mxu0 %v494
    %520 = vmatprep.subr.bf16.mxu0 0
    %521 = vmatpush1.bf16.msra.mxu0 %v495
    %522 = vmatprep.subr.bf16.mxu0 0
    %523 = vmatpush1.bf16.msra.mxu0 %v496
    %524 = vmatprep.subr.bf16.mxu0 0
    %525 = vmatpush1.bf16.msra.mxu0 0
    %526 = vmatprep.subr.bf16.mxu0 0
    %527 = vmatpush1.bf16.msra.mxu0 0
    %528 = vmatprep.subr.bf16.mxu0 0
    %529 = vmatpush1.bf16.msra.mxu0 0
    %530 = vmatprep.subr.bf16.mxu0 0
    %531 = vmatpush1.bf16.msra.mxu0 0
    %532 = vmatprep.subr.bf16.mxu0 0
    %533 = vmatpush1.bf16.msra.mxu0 0
    %534 = vmatprep.subr.bf16.mxu0 0
    %535 = vmatpush1.bf16.msra.mxu0 0
    %536 = vmatprep.subr.bf16.mxu0 0
    %537 = vmatpush1.bf16.msra.mxu0 0
    %538 = vmatprep.subr.bf16.mxu0 0
    %539 = vmatpush1.bf16.msra.mxu0 0
    %540 = vmatprep.mubr.bf16.mxu0 0
    %541 = vmatmul.mubr.bf16.gmra.mrb[0].mxu0 %v456
    %v542 = vpop.f32.mrb[0].mxu0
    %v543 = vadd.f32 %v506, %v542
    %v544 = vpop.f32.mrb[0].mxu0
    %v545 = vpop.f32.mrb[0].mxu0
    %v546 = vpop.f32.mrb[0].mxu0
    %547 = vdwg.mxu0
    %v548 = vmax.f32 %v543, 0.0
    %s549 = scalar_lea.vmem [#allocation7], 128
    %v550 = vld [vmem:[%s549] sm:$0xf]
    %v551 = vld [vmem:[%s549 + $0x4] sm:$0xf]
    %v552 = vld [vmem:[%s549 + $0x8] sm:$0xf]
    %v553 = vld [vmem:[%s549 + $0xc] sm:$0xf]
    %v554 = vld [vmem:[%s549 + $0x10] sm:$0xf]
    %v555 = vld [vmem:[%s549 + $0x14] sm:$0xf]
    %v556 = vld [vmem:[%s549 + $0x18] sm:$0xf]
    %v557 = vld [vmem:[%s549 + $0x1c] sm:$0xf]
    %v558 = vld [vmem:[%s549 + $0x20] sm:$0xf]
    %v559 = vld [vmem:[%s549 + $0x24] sm:$0xf]
    %v560 = vld [vmem:[%s549 + $0x28] sm:$0xf]
    %v561 = vld [vmem:[%s549 + $0x2c] sm:$0xf]
    %v562 = vld [vmem:[%s549 + $0x30] sm:$0xf]
    %v563 = vld [vmem:[%s549 + $0x34] sm:$0xf]
    %v564 = vld [vmem:[%s549 + $0x38] sm:$0xf]
    %v565 = vld [vmem:[%s549 + $0x3c] sm:$0xf]
    %s566 = scalar_lea.vmem [#allocation7], 192
    %v567 = vld [vmem:[%s566] sm:$0xf]
    %v568 = vld [vmem:[%s566 + $0x4] sm:$0xf]
    %v569 = vld [vmem:[%s566 + $0x8] sm:$0xf]
    %v570 = vld [vmem:[%s566 + $0xc] sm:$0xf]
    %v571 = vld [vmem:[%s566 + $0x10] sm:$0xf]
    %v572 = vld [vmem:[%s566 + $0x14] sm:$0xf]
    %v573 = vld [vmem:[%s566 + $0x18] sm:$0xf]
    %v574 = vld [vmem:[%s566 + $0x1c] sm:$0xf]
    %v575 = vld [vmem:[%s566 + $0x20] sm:$0xf]
    %v576 = vld [vmem:[%s566 + $0x24] sm:$0xf]
    %v577 = vld [vmem:[%s566 + $0x28] sm:$0xf]
    %v578 = vld [vmem:[%s566 + $0x2c] sm:$0xf]
    %v579 = vld [vmem:[%s566 + $0x30] sm:$0xf]
    %v580 = vld [vmem:[%s566 + $0x34] sm:$0xf]
    %v581 = vld [vmem:[%s566 + $0x38] sm:$0xf]
    %v582 = vld [vmem:[%s566 + $0x3c] sm:$0xf]
    %s583 = scalar_lea.vmem [#allocation7], 256
    %v584 = vld [vmem:[%s583] sm:$0xf]
    %v585 = vld [vmem:[%s583 + $0x4] sm:$0xf]
    %v586 = vld [vmem:[%s583 + $0x8] sm:$0xf]
    %v587 = vld [vmem:[%s583 + $0xc] sm:$0xf]
    %v588 = vld [vmem:[%s583 + $0x10] sm:$0xf]
    %v589 = vld [vmem:[%s583 + $0x14] sm:$0xf]
    %v590 = vld [vmem:[%s583 + $0x18] sm:$0xf]
    %v591 = vld [vmem:[%s583 + $0x1c] sm:$0xf]
    %v592 = vld [vmem:[%s583 + $0x20] sm:$0xf]
    %v593 = vld [vmem:[%s583 + $0x24] sm:$0xf]
    %v594 = vld [vmem:[%s583 + $0x28] sm:$0xf]
    %v595 = vld [vmem:[%s583 + $0x2c] sm:$0xf]
    %v596 = vld [vmem:[%s583 + $0x30] sm:$0xf]
    %v597 = vld [vmem:[%s583 + $0x34] sm:$0xf]
    %v598 = vld [vmem:[%s583 + $0x38] sm:$0xf]
    %v599 = vld [vmem:[%s583 + $0x3c] sm:$0xf]
    %v600 = vpack.c.bf16 %v397, %v394
    %v601 = vpack.c.bf16 %v405, %v402
    %v602 = vpack.c.bf16 %v413, %v410
    %v603 = vpack.c.bf16 %v421, %v418
    %v604 = vpack.c.bf16 %v429, %v426
    %v605 = vpack.c.bf16 %v437, %v434
    %v606 = vpack.c.bf16 %v445, %v442
    %v607 = vpack.c.bf16 %v453, %v450
    %v624 = vunpack.c.l.b16 %v74
    %v625 = vunpack.c.l.b16 %v75
    %v626 = vunpack.c.l.b16 %v76
    %v627 = vunpack.c.l.b16 %v77
    %v628 = vunpack.c.l.b16 %v78
    %v629 = vunpack.c.l.b16 %v79
    %v630 = vunpack.c.l.b16 %v80
    %v631 = vunpack.c.l.b16 %v81
    %v632 = vunpack.c.l.b16 %v82
    %v633 = vunpack.c.l.b16 %v83
    %v634 = vunpack.c.l.b16 %v84
    %v635 = vunpack.c.l.b16 %v85
    %v636 = vunpack.c.l.b16 %v86
    %v637 = vunpack.c.l.b16 %v87
    %v638 = vunpack.c.l.b16 %v88
    %v639 = vunpack.c.l.b16 %v89
    %v640 = vpack.c.b16 %v625, %v624
    %v641 = vpack.c.b16 %v627, %v626
    %v642 = vpack.c.b16 %v629, %v628
    %v643 = vpack.c.b16 %v631, %v630
    %v644 = vpack.c.b16 %v633, %v632
    %v645 = vpack.c.b16 %v635, %v634
    %v646 = vpack.c.b16 %v637, %v636
    %v647 = vpack.c.b16 %v639, %v638
    %656 = vmatprep.subr.bf16.mxu0 0
    %657 = vmatpush1.bf16.msra.mxu0 %v600
    %658 = vmatprep.subr.bf16.mxu0 0
    %659 = vmatpush1.bf16.msra.mxu0 %v601
    %660 = vmatprep.subr.bf16.mxu0 0
    %661 = vmatpush1.bf16.msra.mxu0 %v602
    %662 = vmatprep.subr.bf16.mxu0 0
    %663 = vmatpush1.bf16.msra.mxu0 %v603
    %664 = vmatprep.subr.bf16.mxu0 0
    %665 = vmatpush1.bf16.msra.mxu0 %v604
    %666 = vmatprep.subr.bf16.mxu0 0
    %667 = vmatpush1.bf16.msra.mxu0 %v605
    %668 = vmatprep.subr.bf16.mxu0 0
    %669 = vmatpush1.bf16.msra.mxu0 %v606
    %670 = vmatprep.subr.bf16.mxu0 0
    %671 = vmatpush1.bf16.msra.mxu0 %v607
    %672 = vmatprep.subr.bf16.mxu0 0
    %673 = vmatpush1.bf16.msra.mxu0 0
    %674 = vmatprep.subr.bf16.mxu0 0
    %675 = vmatpush1.bf16.msra.mxu0 0
    %676 = vmatprep.subr.bf16.mxu0 0
    %677 = vmatpush1.bf16.msra.mxu0 0
    %678 = vmatprep.subr.bf16.mxu0 0
    %679 = vmatpush1.bf16.msra.mxu0 0
    %680 = vmatprep.subr.bf16.mxu0 0
    %681 = vmatpush1.bf16.msra.mxu0 0
    %682 = vmatprep.subr.bf16.mxu0 0
    %683 = vmatpush1.bf16.msra.mxu0 0
    %684 = vmatprep.subr.bf16.mxu0 0
    %685 = vmatpush1.bf16.msra.mxu0 0
    %686 = vmatprep.subr.bf16.mxu0 0
    %687 = vmatpush1.bf16.msra.mxu0 0
    %688 = vmatprep.mubr.bf16.mxu0 0
    %689 = vmatmul.mubr.bf16.gmra.mrb[0].mxu0 %v640
    %v690 = vpop.f32.mrb[0].mxu0
    %v691 = vadd.f32 0.0, %v690
    %v692 = vpop.f32.mrb[0].mxu0
    %v693 = vpop.f32.mrb[0].mxu0
    %v694 = vadd.f32 0.0, %v693
    %v695 = vpop.f32.mrb[0].mxu0
    %696 = vmatprep.mubr.bf16.mxu0 0
    %697 = vmatmul.mubr.bf16.gmra.mrb[0].mxu0 %v641
    %v698 = vpop.f32.mrb[0].mxu0
    %v699 = vadd.f32 0.0, %v698
    %v700 = vpop.f32.mrb[0].mxu0
    %v701 = vpop.f32.mrb[0].mxu0
    %v702 = vadd.f32 0.0, %v701
    %v703 = vpop.f32.mrb[0].mxu0
    %704 = vmatprep.mubr.bf16.mxu0 0
    %705 = vmatmul.mubr.bf16.gmra.mrb[0].mxu0 %v642
    %v706 = vpop.f32.mrb[0].mxu0
    %v707 = vadd.f32 0.0, %v706
    %v708 = vpop.f32.mrb[0].mxu0
    %v709 = vpop.f32.mrb[0].mxu0
    %v710 = vadd.f32 0.0, %v709
    %v711 = vpop.f32.mrb[0].mxu0
    %712 = vmatprep.mubr.bf16.mxu0 0
    %713 = vmatmul.mubr.bf16.gmra.mrb[0].mxu0 %v643
    %v714 = vpop.f32.mrb[0].mxu0
    %v715 = vadd.f32 0.0, %v714
    %v716 = vpop.f32.mrb[0].mxu0
    %v717 = vpop.f32.mrb[0].mxu0
    %v718 = vadd.f32 0.0, %v717
    %v719 = vpop.f32.mrb[0].mxu0
    %720 = vmatprep.mubr.bf16.mxu0 0
    %721 = vmatmul.mubr.bf16.gmra.mrb[0].mxu0 %v644
    %v722 = vpop.f32.mrb[0].mxu0
    %v723 = vadd.f32 0.0, %v722
    %v724 = vpop.f32.mrb[0].mxu0
    %v725 = vpop.f32.mrb[0].mxu0
    %v726 = vadd.f32 0.0, %v725
    %v727 = vpop.f32.mrb[0].mxu0
    %728 = vmatprep.mubr.bf16.mxu0 0
    %729 = vmatmul.mubr.bf16.gmra.mrb[0].mxu0 %v645
    %v730 = vpop.f32.mrb[0].mxu0
    %v731 = vadd.f32 0.0, %v730
    %v732 = vpop.f32.mrb[0].mxu0
    %v733 = vpop.f32.mrb[0].mxu0
    %v734 = vadd.f32 0.0, %v733
    %v735 = vpop.f32.mrb[0].mxu0
    %736 = vmatprep.mubr.bf16.mxu0 0
    %737 = vmatmul.mubr.bf16.gmra.mrb[0].mxu0 %v646
    %v738 = vpop.f32.mrb[0].mxu0
    %v739 = vadd.f32 0.0, %v738
    %v740 = vpop.f32.mrb[0].mxu0
    %v741 = vpop.f32.mrb[0].mxu0
    %v742 = vadd.f32 0.0, %v741
    %v743 = vpop.f32.mrb[0].mxu0
    %744 = vmatprep.mubr.bf16.mxu0 0
    %745 = vmatmul.mubr.bf16.gmra.mrb[0].mxu0 %v647
    %v746 = vpop.f32.mrb[0].mxu0
    %v747 = vadd.f32 0.0, %v746
    %v748 = vpop.f32.mrb[0].mxu0
    %v749 = vpop.f32.mrb[0].mxu0
    %v750 = vadd.f32 0.0, %v749
    %v751 = vpop.f32.mrb[0].mxu0
    %752 = vdwg.mxu0
    %v753 = vpack.c.bf16 %v694, %v691
    %v754 = vpack.c.bf16 %v702, %v699
    %v755 = vpack.c.bf16 %v710, %v707
    %v756 = vpack.c.bf16 %v718, %v715
    %v757 = vpack.c.bf16 %v726, %v723
    %v758 = vpack.c.bf16 %v734, %v731
    %v759 = vpack.c.bf16 %v742, %v739
    %v760 = vpack.c.bf16 %v750, %v747
    %v761 = vlaneseq
    %v762 = vshrl.u32 %v761, 7
    %v763 = vsub.s32 3, %v762
    %v764 = vrot.slane %v90, %v763
    %v781 = vunpack.c.l.b16 %v550
    %v782 = vunpack.c.l.b16 %v551
    %v783 = vunpack.c.l.b16 %v552
    %v784 = vunpack.c.l.b16 %v553
    %v785 = vunpack.c.l.b16 %v554
    %v786 = vunpack.c.l.b16 %v555
    %v787 = vunpack.c.l.b16 %v556
    %v788 = vunpack.c.l.b16 %v557
    %v789 = vunpack.c.l.b16 %v558
    %v790 = vunpack.c.l.b16 %v559
    %v791 = vunpack.c.l.b16 %v560
    %v792 = vunpack.c.l.b16 %v561
    %v793 = vunpack.c.l.b16 %v562
    %v794 = vunpack.c.l.b16 %v563
    %v795 = vunpack.c.l.b16 %v564
    %v796 = vunpack.c.l.b16 %v565
    %v797 = vpack.c.b16 %v782, %v781
    %v798 = vpack.c.b16 %v784, %v783
    %v799 = vpack.c.b16 %v786, %v785
    %v800 = vpack.c.b16 %v788, %v787
    %v801 = vpack.c.b16 %v790, %v789
    %v802 = vpack.c.b16 %v792, %v791
    %v803 = vpack.c.b16 %v794, %v793
    %v804 = vpack.c.b16 %v796, %v795
    %813 = vmatprep.subr.bf16.mxu0 0
    %814 = vmatpush1.bf16.msra.mxu0 %v797
    %815 = vmatprep.subr.bf16.mxu0 0
    %816 = vmatpush1.bf16.msra.mxu0 %v798
    %817 = vmatprep.subr.bf16.mxu0 0
    %818 = vmatpush1.bf16.msra.mxu0 %v799
    %819 = vmatprep.subr.bf16.mxu0 0
    %820 = vmatpush1.bf16.msra.mxu0 %v800
    %821 = vmatprep.subr.bf16.mxu0 0
    %822 = vmatpush1.bf16.msra.mxu0 %v801
    %823 = vmatprep.subr.bf16.mxu0 0
    %824 = vmatpush1.bf16.msra.mxu0 %v802
    %825 = vmatprep.subr.bf16.mxu0 0
    %826 = vmatpush1.bf16.msra.mxu0 %v803
    %827 = vmatprep.subr.bf16.mxu0 0
    %828 = vmatpush1.bf16.msra.mxu0 %v804
    %829 = vmatprep.subr.bf16.mxu0 0
    %830 = vmatpush1.bf16.msra.mxu0 0
    %831 = vmatprep.subr.bf16.mxu0 0
    %832 = vmatpush1.bf16.msra.mxu0 0
    %833 = vmatprep.subr.bf16.mxu0 0
    %834 = vmatpush1.bf16.msra.mxu0 0
    %835 = vmatprep.subr.bf16.mxu0 0
    %836 = vmatpush1.bf16.msra.mxu0 0
    %837 = vmatprep.subr.bf16.mxu0 0
    %838 = vmatpush1.bf16.msra.mxu0 0
    %839 = vmatprep.subr.bf16.mxu0 0
    %840 = vmatpush1.bf16.msra.mxu0 0
    %841 = vmatprep.subr.bf16.mxu0 0
    %842 = vmatpush1.bf16.msra.mxu0 0
    %843 = vmatprep.subr.bf16.mxu0 0
    %844 = vmatpush1.bf16.msra.mxu0 0
    %845 = vmatprep.mubr.bf16.mxu0 0
    %846 = vmatmul.mubr.bf16.gmra.mrb[0].mxu0 %v753
    %v847 = vpop.f32.mrb[0].mxu0
    %v848 = vadd.f32 %v764, %v847
    %v849 = vpop.f32.mrb[0].mxu0
    %v850 = vpop.f32.mrb[0].mxu0
    %v851 = vadd.f32 %v764, %v850
    %v852 = vpop.f32.mrb[0].mxu0
    %853 = vmatprep.mubr.bf16.mxu0 0
    %854 = vmatmul.mubr.bf16.gmra.mrb[0].mxu0 %v754
    %v855 = vpop.f32.mrb[0].mxu0
    %v856 = vadd.f32 %v764, %v855
    %v857 = vpop.f32.mrb[0].mxu0
    %v858 = vpop.f32.mrb[0].mxu0
    %v859 = vadd.f32 %v764, %v858
    %v860 = vpop.f32.mrb[0].mxu0
    %861 = vmatprep.mubr.bf16.mxu0 0
    %862 = vmatmul.mubr.bf16.gmra.mrb[0].mxu0 %v755
    %v863 = vpop.f32.mrb[0].mxu0
    %v864 = vadd.f32 %v764, %v863
    %v865 = vpop.f32.mrb[0].mxu0
    %v866 = vpop.f32.mrb[0].mxu0
    %v867 = vadd.f32 %v764, %v866
    %v868 = vpop.f32.mrb[0].mxu0
    %869 = vmatprep.mubr.bf16.mxu0 0
    %870 = vmatmul.mubr.bf16.gmra.mrb[0].mxu0 %v756
    %v871 = vpop.f32.mrb[0].mxu0
    %v872 = vadd.f32 %v764, %v871
    %v873 = vpop.f32.mrb[0].mxu0
    %v874 = vpop.f32.mrb[0].mxu0
    %v875 = vadd.f32 %v764, %v874
    %v876 = vpop.f32.mrb[0].mxu0
    %877 = vmatprep.mubr.bf16.mxu0 0
    %878 = vmatmul.mubr.bf16.gmra.mrb[0].mxu0 %v757
    %v879 = vpop.f32.mrb[0].mxu0
    %v880 = vadd.f32 %v764, %v879
    %v881 = vpop.f32.mrb[0].mxu0
    %v882 = vpop.f32.mrb[0].mxu0
    %v883 = vadd.f32 %v764, %v882
    %v884 = vpop.f32.mrb[0].mxu0
    %885 = vmatprep.mubr.bf16.mxu0 0
    %886 = vmatmul.mubr.bf16.gmra.mrb[0].mxu0 %v758
    %v887 = vpop.f32.mrb[0].mxu0
    %v888 = vadd.f32 %v764, %v887
    %v889 = vpop.f32.mrb[0].mxu0
    %v890 = vpop.f32.mrb[0].mxu0
    %v891 = vadd.f32 %v764, %v890
    %v892 = vpop.f32.mrb[0].mxu0
    %893 = vmatprep.mubr.bf16.mxu0 0
    %894 = vmatmul.mubr.bf16.gmra.mrb[0].mxu0 %v759
    %v895 = vpop.f32.mrb[0].mxu0
    %v896 = vadd.f32 %v764, %v895
    %v897 = vpop.f32.mrb[0].mxu0
    %v898 = vpop.f32.mrb[0].mxu0
    %v899 = vadd.f32 %v764, %v898
    %v900 = vpop.f32.mrb[0].mxu0
    %901 = vmatprep.mubr.bf16.mxu0 0
    %902 = vmatmul.mubr.bf16.gmra.mrb[0].mxu0 %v760
    %v903 = vpop.f32.mrb[0].mxu0
    %v904 = vadd.f32 %v764, %v903
    %v905 = vpop.f32.mrb[0].mxu0
    %v906 = vpop.f32.mrb[0].mxu0
    %v907 = vadd.f32 %v764, %v906
    %v908 = vpop.f32.mrb[0].mxu0
    %909 = vdwg.mxu0
    %v910 = vxor.u32 %v848, 2147483648
    %v911 = vxor.u32 %v851, 2147483648
    %v912 = vxor.u32 %v856, 2147483648
    %v913 = vxor.u32 %v859, 2147483648
    %v914 = vxor.u32 %v864, 2147483648
    %v915 = vxor.u32 %v867, 2147483648
    %v916 = vxor.u32 %v872, 2147483648
    %v917 = vxor.u32 %v875, 2147483648
    %v918 = vxor.u32 %v880, 2147483648
    %v919 = vxor.u32 %v883, 2147483648
    %v920 = vxor.u32 %v888, 2147483648
    %v921 = vxor.u32 %v891, 2147483648
    %v922 = vxor.u32 %v896, 2147483648
    %v923 = vxor.u32 %v899, 2147483648
    %v924 = vxor.u32 %v904, 2147483648
    %v925 = vxor.u32 %v907, 2147483648
    %v926 = vmul.f32 %v910, 1.442695
    %v927 = vpow.pop %v926
    %v928 = vmul.f32 %v911, 1.442695
    %v929 = vpow.pop %v928
    %v930 = vmul.f32 %v912, 1.442695
    %v931 = vpow.pop %v930
    %v932 = vmul.f32 %v913, 1.442695
    %v933 = vpow.pop %v932
    %v934 = vmul.f32 %v914, 1.442695
    %v935 = vpow.pop %v934
    %v936 = vmul.f32 %v915, 1.442695
    %v937 = vpow.pop %v936
    %v938 = vmul.f32 %v916, 1.442695
    %v939 = vpow.pop %v938
    %v940 = vmul.f32 %v917, 1.442695
    %v941 = vpow.pop %v940
    %v942 = vmul.f32 %v918, 1.442695
    %v943 = vpow.pop %v942
    %v944 = vmul.f32 %v919, 1.442695
    %v945 = vpow.pop %v944
    %v946 = vmul.f32 %v920, 1.442695
    %v947 = vpow.pop %v946
    %v948 = vmul.f32 %v921, 1.442695
    %v949 = vpow.pop %v948
    %v950 = vmul.f32 %v922, 1.442695
    %v951 = vpow.pop %v950
    %v952 = vmul.f32 %v923, 1.442695
    %v953 = vpow.pop %v952
    %v954 = vmul.f32 %v924, 1.442695
    %v955 = vpow.pop %v954
    %v956 = vmul.f32 %v925, 1.442695
    %v957 = vpow.pop %v956
    %v958 = vadd.f32 %v927, 1.0
    %v959 = vadd.f32 %v929, 1.0
    %v960 = vadd.f32 %v931, 1.0
    %v961 = vadd.f32 %v933, 1.0
    %v962 = vadd.f32 %v935, 1.0
    %v963 = vadd.f32 %v937, 1.0
    %v964 = vadd.f32 %v939, 1.0
    %v965 = vadd.f32 %v941, 1.0
    %v966 = vadd.f32 %v943, 1.0
    %v967 = vadd.f32 %v945, 1.0
    %v968 = vadd.f32 %v947, 1.0
    %v969 = vadd.f32 %v949, 1.0
    %v970 = vadd.f32 %v951, 1.0
    %v971 = vadd.f32 %v953, 1.0
    %v972 = vadd.f32 %v955, 1.0
    %v973 = vadd.f32 %v957, 1.0
    %v974 = vrcp.pop %v958
    %v975 = vmul.f32 1.0, %v974
    %v976 = vrcp.pop %v959
    %v977 = vmul.f32 1.0, %v976
    %v978 = vrcp.pop %v960
    %v979 = vmul.f32 1.0, %v978
    %v980 = vrcp.pop %v961
    %v981 = vmul.f32 1.0, %v980
    %v982 = vrcp.pop %v962
    %v983 = vmul.f32 1.0, %v982
    %v984 = vrcp.pop %v963
    %v985 = vmul.f32 1.0, %v984
    %v986 = vrcp.pop %v964
    %v987 = vmul.f32 1.0, %v986
    %v988 = vrcp.pop %v965
    %v989 = vmul.f32 1.0, %v988
    %v990 = vrcp.pop %v966
    %v991 = vmul.f32 1.0, %v990
    %v992 = vrcp.pop %v967
    %v993 = vmul.f32 1.0, %v992
    %v994 = vrcp.pop %v968
    %v995 = vmul.f32 1.0, %v994
    %v996 = vrcp.pop %v969
    %v997 = vmul.f32 1.0, %v996
    %v998 = vrcp.pop %v970
    %v999 = vmul.f32 1.0, %v998
    %v1000 = vrcp.pop %v971
    %v1001 = vmul.f32 1.0, %v1000
    %v1002 = vrcp.pop %v972
    %v1003 = vmul.f32 1.0, %v1002
    %v1004 = vrcp.pop %v973
    %v1005 = vmul.f32 1.0, %v1004
    %v1006 = vmul.f32 %v848, %v975
    %v1007 = vmul.f32 %v851, %v977
    %v1008 = vmul.f32 %v856, %v979
    %v1009 = vmul.f32 %v859, %v981
    %v1010 = vmul.f32 %v864, %v983
    %v1011 = vmul.f32 %v867, %v985
    %v1012 = vmul.f32 %v872, %v987
    %v1013 = vmul.f32 %v875, %v989
    %v1014 = vmul.f32 %v880, %v991
    %v1015 = vmul.f32 %v883, %v993
    %v1016 = vmul.f32 %v888, %v995
    %v1017 = vmul.f32 %v891, %v997
    %v1018 = vmul.f32 %v896, %v999
    %v1019 = vmul.f32 %v899, %v1001
    %v1020 = vmul.f32 %v904, %v1003
    %v1021 = vmul.f32 %v907, %v1005
    %v1022 = vpack.c.bf16 %v548, %v548
    %v1039 = vunpack.c.l.b16 %v567
    %v1040 = vunpack.c.l.b16 %v568
    %v1041 = vunpack.c.l.b16 %v569
    %v1042 = vunpack.c.l.b16 %v570
    %v1043 = vunpack.c.l.b16 %v571
    %v1044 = vunpack.c.l.b16 %v572
    %v1045 = vunpack.c.l.b16 %v573
    %v1046 = vunpack.c.l.b16 %v574
    %v1047 = vunpack.c.l.b16 %v575
    %v1048 = vunpack.c.l.b16 %v576
    %v1049 = vunpack.c.l.b16 %v577
    %v1050 = vunpack.c.l.b16 %v578
    %v1051 = vunpack.c.l.b16 %v579
    %v1052 = vunpack.c.l.b16 %v580
    %v1053 = vunpack.c.l.b16 %v581
    %v1054 = vunpack.c.l.b16 %v582
    %v1055 = vpack.c.b16 %v1040, %v1039
    %v1056 = vpack.c.b16 %v1042, %v1041
    %v1057 = vpack.c.b16 %v1044, %v1043
    %v1058 = vpack.c.b16 %v1046, %v1045
    %v1059 = vpack.c.b16 %v1048, %v1047
    %v1060 = vpack.c.b16 %v1050, %v1049
    %v1061 = vpack.c.b16 %v1052, %v1051
    %v1062 = vpack.c.b16 %v1054, %v1053
    %v1071 = vrot.slane %v90, 4
    %1073 = vmatprep.subr.bf16.mxu0 0
    %1074 = vmatpush1.bf16.msra.mxu0 %v1055
    %1075 = vmatprep.subr.bf16.mxu0 0
    %1076 = vmatpush1.bf16.msra.mxu0 %v1056
    %1077 = vmatprep.subr.bf16.mxu0 0
    %1078 = vmatpush1.bf16.msra.mxu0 %v1057
    %1079 = vmatprep.subr.bf16.mxu0 0
    %1080 = vmatpush1.bf16.msra.mxu0 %v1058
    %1081 = vmatprep.subr.bf16.mxu0 0
    %1082 = vmatpush1.bf16.msra.mxu0 %v1059
    %1083 = vmatprep.subr.bf16.mxu0 0
    %1084 = vmatpush1.bf16.msra.mxu0 %v1060
    %1085 = vmatprep.subr.bf16.mxu0 0
    %1086 = vmatpush1.bf16.msra.mxu0 %v1061
    %1087 = vmatprep.subr.bf16.mxu0 0
    %1088 = vmatpush1.bf16.msra.mxu0 %v1062
    %1089 = vmatprep.subr.bf16.mxu0 0
    %1090 = vmatpush1.bf16.msra.mxu0 0
    %1091 = vmatprep.subr.bf16.mxu0 0
    %1092 = vmatpush1.bf16.msra.mxu0 0
    %1093 = vmatprep.subr.bf16.mxu0 0
    %1094 = vmatpush1.bf16.msra.mxu0 0
    %1095 = vmatprep.subr.bf16.mxu0 0
    %1096 = vmatpush1.bf16.msra.mxu0 0
    %1097 = vmatprep.subr.bf16.mxu0 0
    %1098 = vmatpush1.bf16.msra.mxu0 0
    %1099 = vmatprep.subr.bf16.mxu0 0
    %1100 = vmatpush1.bf16.msra.mxu0 0
    %1101 = vmatprep.subr.bf16.mxu0 0
    %1102 = vmatpush1.bf16.msra.mxu0 0
    %1103 = vmatprep.subr.bf16.mxu0 0
    %1104 = vmatpush1.bf16.msra.mxu0 0
    %1105 = vmatprep.mubr.bf16.mxu0 0
    %1106 = vmatmul.mubr.bf16.gmra.mrb[0].mxu0 %v1022
    %v1107 = vpop.f32.mrb[0].mxu0
    %v1108 = vadd.f32 %v1071, %v1107
    %v1109 = vpop.f32.mrb[0].mxu0
    %v1110 = vpop.f32.mrb[0].mxu0
    %v1111 = vpop.f32.mrb[0].mxu0
    %1112 = vdwg.mxu0
    %v1113 = vxor.u32 %v1108, 2147483648
    %v1114 = vmul.f32 %v1113, 1.442695
    %v1115 = vpow.pop %v1114
    %v1116 = vadd.f32 %v1115, 1.0
    %v1117 = vrcp.pop %v1116
    %v1118 = vmul.f32 1.0, %v1117
    %v1119 = vmul.f32 %v1108, %v1118
    %v1120 = vlaneseq
    %v1121 = vshrl.u32 %v1120, 7
    %v1122 = vsub.s32 0, %v1121
    %v1123 = vrot.slane %v1119, %v1122
    %v1124 = vadd.f32 %v1006, %v1123
    %v1125 = vadd.f32 %v1007, %v1123
    %v1126 = vadd.f32 %v1008, %v1123
    %v1127 = vadd.f32 %v1009, %v1123
    %v1128 = vadd.f32 %v1010, %v1123
    %v1129 = vadd.f32 %v1011, %v1123
    %v1130 = vadd.f32 %v1012, %v1123
    %v1131 = vadd.f32 %v1013, %v1123
    %v1132 = vadd.f32 %v1014, %v1123
    %v1133 = vadd.f32 %v1015, %v1123
    %v1134 = vadd.f32 %v1016, %v1123
    %v1135 = vadd.f32 %v1017, %v1123
    %v1136 = vadd.f32 %v1018, %v1123
    %v1137 = vadd.f32 %v1019, %v1123
    %v1138 = vadd.f32 %v1020, %v1123
    %v1139 = vadd.f32 %v1021, %v1123
    %v1140 = vpack.c.bf16 %v1125, %v1124
    %v1141 = vpack.c.bf16 %v1127, %v1126
    %v1142 = vpack.c.bf16 %v1129, %v1128
    %v1143 = vpack.c.bf16 %v1131, %v1130
    %v1144 = vpack.c.bf16 %v1133, %v1132
    %v1145 = vpack.c.bf16 %v1135, %v1134
    %v1146 = vpack.c.bf16 %v1137, %v1136
    %v1147 = vpack.c.bf16 %v1139, %v1138
    %v1148 = vlaneseq
    %v1149 = vshrl.u32 %v1148, 7
    %v1150 = vsub.s32 5, %v1149
    %v1151 = vrot.slane %v90, %v1150
    %v1168 = vunpack.c.l.b16 %v584
    %v1169 = vunpack.c.l.b16 %v585
    %v1170 = vunpack.c.l.b16 %v586
    %v1171 = vunpack.c.l.b16 %v587
    %v1172 = vunpack.c.l.b16 %v588
    %v1173 = vunpack.c.l.b16 %v589
    %v1174 = vunpack.c.l.b16 %v590
    %v1175 = vunpack.c.l.b16 %v591
    %v1176 = vunpack.c.l.b16 %v592
    %v1177 = vunpack.c.l.b16 %v593
    %v1178 = vunpack.c.l.b16 %v594
    %v1179 = vunpack.c.l.b16 %v595
    %v1180 = vunpack.c.l.b16 %v596
    %v1181 = vunpack.c.l.b16 %v597
    %v1182 = vunpack.c.l.b16 %v598
    %v1183 = vunpack.c.l.b16 %v599
    %v1184 = vpack.c.b16 %v1169, %v1168
    %v1185 = vpack.c.b16 %v1171, %v1170
    %v1186 = vpack.c.b16 %v1173, %v1172
    %v1187 = vpack.c.b16 %v1175, %v1174
    %v1188 = vpack.c.b16 %v1177, %v1176
    %v1189 = vpack.c.b16 %v1179, %v1178
    %v1190 = vpack.c.b16 %v1181, %v1180
    %v1191 = vpack.c.b16 %v1183, %v1182
    %1200 = vmatprep.subr.bf16.mxu0 0
    %1201 = vmatpush1.bf16.msra.mxu0 %v1184
    %1202 = vmatprep.subr.bf16.mxu0 0
    %1203 = vmatpush1.bf16.msra.mxu0 %v1185
    %1204 = vmatprep.subr.bf16.mxu0 0
    %1205 = vmatpush1.bf16.msra.mxu0 %v1186
    %1206 = vmatprep.subr.bf16.mxu0 0
    %1207 = vmatpush1.bf16.msra.mxu0 %v1187
    %1208 = vmatprep.subr.bf16.mxu0 0
    %1209 = vmatpush1.bf16.msra.mxu0 %v1188
    %1210 = vmatprep.subr.bf16.mxu0 0
    %1211 = vmatpush1.bf16.msra.mxu0 %v1189
    %1212 = vmatprep.subr.bf16.mxu0 0
    %1213 = vmatpush1.bf16.msra.mxu0 %v1190
    %1214 = vmatprep.subr.bf16.mxu0 0
    %1215 = vmatpush1.bf16.msra.mxu0 %v1191
    %1216 = vmatprep.subr.bf16.mxu0 0
    %1217 = vmatpush1.bf16.msra.mxu0 0
    %1218 = vmatprep.subr.bf16.mxu0 0
    %1219 = vmatpush1.bf16.msra.mxu0 0
    %1220 = vmatprep.subr.bf16.mxu0 0
    %1221 = vmatpush1.bf16.msra.mxu0 0
    %1222 = vmatprep.subr.bf16.mxu0 0
    %1223 = vmatpush1.bf16.msra.mxu0 0
    %1224 = vmatprep.subr.bf16.mxu0 0
    %1225 = vmatpush1.bf16.msra.mxu0 0
    %1226 = vmatprep.subr.bf16.mxu0 0
    %1227 = vmatpush1.bf16.msra.mxu0 0
    %1228 = vmatprep.subr.bf16.mxu0 0
    %1229 = vmatpush1.bf16.msra.mxu0 0
    %1230 = vmatprep.subr.bf16.mxu0 0
    %1231 = vmatpush1.bf16.msra.mxu0 0
    %1232 = vmatprep.mubr.bf16.mxu0 0
    %1233 = vmatmul.mubr.bf16.gmra.mrb[0].mxu0 %v1140
    %v1234 = vpop.f32.mrb[0].mxu0
    %v1235 = vadd.f32 %v1151, %v1234
    %v1236 = vpop.f32.mrb[0].mxu0
    %v1237 = vpop.f32.mrb[0].mxu0
    %v1238 = vadd.f32 %v1151, %v1237
    %v1239 = vpop.f32.mrb[0].mxu0
    %1240 = vmatprep.mubr.bf16.mxu0 0
    %1241 = vmatmul.mubr.bf16.gmra.mrb[0].mxu0 %v1141
    %v1242 = vpop.f32.mrb[0].mxu0
    %v1243 = vadd.f32 %v1151, %v1242
    %v1244 = vpop.f32.mrb[0].mxu0
    %v1245 = vpop.f32.mrb[0].mxu0
    %v1246 = vadd.f32 %v1151, %v1245
    %v1247 = vpop.f32.mrb[0].mxu0
    %1248 = vmatprep.mubr.bf16.mxu0 0
    %1249 = vmatmul.mubr.bf16.gmra.mrb[0].mxu0 %v1142
    %v1250 = vpop.f32.mrb[0].mxu0
    %v1251 = vadd.f32 %v1151, %v1250
    %v1252 = vpop.f32.mrb[0].mxu0
    %v1253 = vpop.f32.mrb[0].mxu0
    %v1254 = vadd.f32 %v1151, %v1253
    %v1255 = vpop.f32.mrb[0].mxu0
    %1256 = vmatprep.mubr.bf16.mxu0 0
    %1257 = vmatmul.mubr.bf16.gmra.mrb[0].mxu0 %v1143
    %v1258 = vpop.f32.mrb[0].mxu0
    %v1259 = vadd.f32 %v1151, %v1258
    %v1260 = vpop.f32.mrb[0].mxu0
    %v1261 = vpop.f32.mrb[0].mxu0
    %v1262 = vadd.f32 %v1151, %v1261
    %v1263 = vpop.f32.mrb[0].mxu0
    %1264 = vmatprep.mubr.bf16.mxu0 0
    %1265 = vmatmul.mubr.bf16.gmra.mrb[0].mxu0 %v1144
    %v1266 = vpop.f32.mrb[0].mxu0
    %v1267 = vadd.f32 %v1151, %v1266
    %v1268 = vpop.f32.mrb[0].mxu0
    %v1269 = vpop.f32.mrb[0].mxu0
    %v1270 = vadd.f32 %v1151, %v1269
    %v1271 = vpop.f32.mrb[0].mxu0
    %1272 = vmatprep.mubr.bf16.mxu0 0
    %1273 = vmatmul.mubr.bf16.gmra.mrb[0].mxu0 %v1145
    %v1274 = vpop.f32.mrb[0].mxu0
    %v1275 = vadd.f32 %v1151, %v1274
    %v1276 = vpop.f32.mrb[0].mxu0
    %v1277 = vpop.f32.mrb[0].mxu0
    %v1278 = vadd.f32 %v1151, %v1277
    %v1279 = vpop.f32.mrb[0].mxu0
    %1280 = vmatprep.mubr.bf16.mxu0 0
    %1281 = vmatmul.mubr.bf16.gmra.mrb[0].mxu0 %v1146
    %v1282 = vpop.f32.mrb[0].mxu0
    %v1283 = vadd.f32 %v1151, %v1282
    %v1284 = vpop.f32.mrb[0].mxu0
    %v1285 = vpop.f32.mrb[0].mxu0
    %v1286 = vadd.f32 %v1151, %v1285
    %v1287 = vpop.f32.mrb[0].mxu0
    %1288 = vmatprep.mubr.bf16.mxu0 0
    %1289 = vmatmul.mubr.bf16.gmra.mrb[0].mxu0 %v1147
    %v1290 = vpop.f32.mrb[0].mxu0
    %v1291 = vadd.f32 %v1151, %v1290
    %v1292 = vpop.f32.mrb[0].mxu0
    %v1293 = vpop.f32.mrb[0].mxu0
    %v1294 = vadd.f32 %v1151, %v1293
    %v1295 = vpop.f32.mrb[0].mxu0
    %1296 = vdwg.mxu0
    %v1297 = vxor.u32 %v1235, 2147483648
    %v1298 = vxor.u32 %v1238, 2147483648
    %v1299 = vxor.u32 %v1243, 2147483648
    %v1300 = vxor.u32 %v1246, 2147483648
    %v1301 = vxor.u32 %v1251, 2147483648
    %v1302 = vxor.u32 %v1254, 2147483648
    %v1303 = vxor.u32 %v1259, 2147483648
    %v1304 = vxor.u32 %v1262, 2147483648
    %v1305 = vxor.u32 %v1267, 2147483648
    %v1306 = vxor.u32 %v1270, 2147483648
    %v1307 = vxor.u32 %v1275, 2147483648
    %v1308 = vxor.u32 %v1278, 2147483648
    %v1309 = vxor.u32 %v1283, 2147483648
    %v1310 = vxor.u32 %v1286, 2147483648
    %v1311 = vxor.u32 %v1291, 2147483648
    %v1312 = vxor.u32 %v1294, 2147483648
    %v1313 = vmul.f32 %v1297, 1.442695
    %v1314 = vpow.pop %v1313
    %v1315 = vmul.f32 %v1298, 1.442695
    %v1316 = vpow.pop %v1315
    %v1317 = vmul.f32 %v1299, 1.442695
    %v1318 = vpow.pop %v1317
    %v1319 = vmul.f32 %v1300, 1.442695
    %v1320 = vpow.pop %v1319
    %v1321 = vmul.f32 %v1301, 1.442695
    %v1322 = vpow.pop %v1321
    %v1323 = vmul.f32 %v1302, 1.442695
    %v1324 = vpow.pop %v1323
    %v1325 = vmul.f32 %v1303, 1.442695
    %v1326 = vpow.pop %v1325
    %v1327 = vmul.f32 %v1304, 1.442695
    %v1328 = vpow.pop %v1327
    %v1329 = vmul.f32 %v1305, 1.442695
    %v1330 = vpow.pop %v1329
    %v1331 = vmul.f32 %v1306, 1.442695
    %v1332 = vpow.pop %v1331
    %v1333 = vmul.f32 %v1307, 1.442695
    %v1334 = vpow.pop %v1333
    %v1335 = vmul.f32 %v1308, 1.442695
    %v1336 = vpow.pop %v1335
    %v1337 = vmul.f32 %v1309, 1.442695
    %v1338 = vpow.pop %v1337
    %v1339 = vmul.f32 %v1310, 1.442695
    %v1340 = vpow.pop %v1339
    %v1341 = vmul.f32 %v1311, 1.442695
    %v1342 = vpow.pop %v1341
    %v1343 = vmul.f32 %v1312, 1.442695
    %v1344 = vpow.pop %v1343
    %v1345 = vadd.f32 %v1314, 1.0
    %v1346 = vadd.f32 %v1316, 1.0
    %v1347 = vadd.f32 %v1318, 1.0
    %v1348 = vadd.f32 %v1320, 1.0
    %v1349 = vadd.f32 %v1322, 1.0
    %v1350 = vadd.f32 %v1324, 1.0
    %v1351 = vadd.f32 %v1326, 1.0
    %v1352 = vadd.f32 %v1328, 1.0
    %v1353 = vadd.f32 %v1330, 1.0
    %v1354 = vadd.f32 %v1332, 1.0
    %v1355 = vadd.f32 %v1334, 1.0
    %v1356 = vadd.f32 %v1336, 1.0
    %v1357 = vadd.f32 %v1338, 1.0
    %v1358 = vadd.f32 %v1340, 1.0
    %v1359 = vadd.f32 %v1342, 1.0
    %v1360 = vadd.f32 %v1344, 1.0
    %v1361 = vrcp.pop %v1345
    %v1362 = vmul.f32 1.0, %v1361
    %v1363 = vrcp.pop %v1346
    %v1364 = vmul.f32 1.0, %v1363
    %v1365 = vrcp.pop %v1347
    %v1366 = vmul.f32 1.0, %v1365
    %v1367 = vrcp.pop %v1348
    %v1368 = vmul.f32 1.0, %v1367
    %v1369 = vrcp.pop %v1349
    %v1370 = vmul.f32 1.0, %v1369
    %v1371 = vrcp.pop %v1350
    %v1372 = vmul.f32 1.0, %v1371
    %v1373 = vrcp.pop %v1351
    %v1374 = vmul.f32 1.0, %v1373
    %v1375 = vrcp.pop %v1352
    %v1376 = vmul.f32 1.0, %v1375
    %v1377 = vrcp.pop %v1353
    %v1378 = vmul.f32 1.0, %v1377
    %v1379 = vrcp.pop %v1354
    %v1380 = vmul.f32 1.0, %v1379
    %v1381 = vrcp.pop %v1355
    %v1382 = vmul.f32 1.0, %v1381
    %v1383 = vrcp.pop %v1356
    %v1384 = vmul.f32 1.0, %v1383
    %v1385 = vrcp.pop %v1357
    %v1386 = vmul.f32 1.0, %v1385
    %v1387 = vrcp.pop %v1358
    %v1388 = vmul.f32 1.0, %v1387
    %v1389 = vrcp.pop %v1359
    %v1390 = vmul.f32 1.0, %v1389
    %v1391 = vrcp.pop %v1360
    %v1392 = vmul.f32 1.0, %v1391
    %v1393 = vmul.f32 %v1235, %v1362
    %v1394 = vmul.f32 %v1238, %v1364
    %v1395 = vmul.f32 %v1243, %v1366
    %v1396 = vmul.f32 %v1246, %v1368
    %v1397 = vmul.f32 %v1251, %v1370
    %v1398 = vmul.f32 %v1254, %v1372
    %v1399 = vmul.f32 %v1259, %v1374
    %v1400 = vmul.f32 %v1262, %v1376
    %v1401 = vmul.f32 %v1267, %v1378
    %v1402 = vmul.f32 %v1270, %v1380
    %v1403 = vmul.f32 %v1275, %v1382
    %v1404 = vmul.f32 %v1278, %v1384
    %v1405 = vmul.f32 %v1283, %v1386
    %v1406 = vmul.f32 %v1286, %v1388
    %v1407 = vmul.f32 %v1291, %v1390
    %v1408 = vmul.f32 %v1294, %v1392
    %1409 = vadd.xlane.f32.xlu0 %v1393
    %v1410 = vpop.xlane.xlu0 %1409
    %1411 = vadd.xlane.f32.xlu0 %v1394
    %v1412 = vpop.xlane.xlu0 %1411
    %1413 = vadd.xlane.f32.xlu0 %v1395
    %v1414 = vpop.xlane.xlu0 %1413
    %1415 = vadd.xlane.f32.xlu0 %v1396
    %v1416 = vpop.xlane.xlu0 %1415
    %1417 = vadd.xlane.f32.xlu0 %v1397
    %v1418 = vpop.xlane.xlu0 %1417
    %1419 = vadd.xlane.f32.xlu0 %v1398
    %v1420 = vpop.xlane.xlu0 %1419
    %1421 = vadd.xlane.f32.xlu0 %v1399
    %v1422 = vpop.xlane.xlu0 %1421
    %1423 = vadd.xlane.f32.xlu0 %v1400
    %v1424 = vpop.xlane.xlu0 %1423
    %1425 = vadd.xlane.f32.xlu0 %v1401
    %v1426 = vpop.xlane.xlu0 %1425
    %1427 = vadd.xlane.f32.xlu0 %v1402
    %v1428 = vpop.xlane.xlu0 %1427
    %1429 = vadd.xlane.f32.xlu0 %v1403
    %v1430 = vpop.xlane.xlu0 %1429
    %1431 = vadd.xlane.f32.xlu0 %v1404
    %v1432 = vpop.xlane.xlu0 %1431
    %1433 = vadd.xlane.f32.xlu0 %v1405
    %v1434 = vpop.xlane.xlu0 %1433
    %1435 = vadd.xlane.f32.xlu0 %v1406
    %v1436 = vpop.xlane.xlu0 %1435
    %1437 = vadd.xlane.f32.xlu0 %v1407
    %v1438 = vpop.xlane.xlu0 %1437
    %1439 = vadd.xlane.f32.xlu0 %v1408
    %v1440 = vpop.xlane.xlu0 %1439
    %v1441 = vmul.f32 %v1410, 0.015625
    %v1442 = vmul.f32 %v1412, 0.015625
    %v1443 = vmul.f32 %v1414, 0.015625
    %v1444 = vmul.f32 %v1416, 0.015625
    %v1445 = vmul.f32 %v1418, 0.015625
    %v1446 = vmul.f32 %v1420, 0.015625
    %v1447 = vmul.f32 %v1422, 0.015625
    %v1448 = vmul.f32 %v1424, 0.015625
    %v1449 = vmul.f32 %v1426, 0.015625
    %v1450 = vmul.f32 %v1428, 0.015625
    %v1451 = vmul.f32 %v1430, 0.015625
    %v1452 = vmul.f32 %v1432, 0.015625
    %v1453 = vmul.f32 %v1434, 0.015625
    %v1454 = vmul.f32 %v1436, 0.015625
    %v1455 = vmul.f32 %v1438, 0.015625
    %v1456 = vmul.f32 %v1440, 0.015625
    %v1457 = vmul.f32 %v1393, %v1393
    %v1458 = vmul.f32 %v1394, %v1394
    %v1459 = vmul.f32 %v1395, %v1395
    %v1460 = vmul.f32 %v1396, %v1396
    %v1461 = vmul.f32 %v1397, %v1397
    %v1462 = vmul.f32 %v1398, %v1398
    %v1463 = vmul.f32 %v1399, %v1399
    %v1464 = vmul.f32 %v1400, %v1400
    %v1465 = vmul.f32 %v1401, %v1401
    %v1466 = vmul.f32 %v1402, %v1402
    %v1467 = vmul.f32 %v1403, %v1403
    %v1468 = vmul.f32 %v1404, %v1404
    %v1469 = vmul.f32 %v1405, %v1405
    %v1470 = vmul.f32 %v1406, %v1406
    %v1471 = vmul.f32 %v1407, %v1407
    %v1472 = vmul.f32 %v1408, %v1408
    %1473 = vadd.xlane.f32.xlu0 %v1457
    %v1474 = vpop.xlane.xlu0 %1473
    %1475 = vadd.xlane.f32.xlu0 %v1458
    %v1476 = vpop.xlane.xlu0 %1475
    %1477 = vadd.xlane.f32.xlu0 %v1459
    %v1478 = vpop.xlane.xlu0 %1477
    %1479 = vadd.xlane.f32.xlu0 %v1460
    %v1480 = vpop.xlane.xlu0 %1479
    %1481 = vadd.xlane.f32.xlu0 %v1461
    %v1482 = vpop.xlane.xlu0 %1481
    %1483 = vadd.xlane.f32.xlu0 %v1462
    %v1484 = vpop.xlane.xlu0 %1483
    %1485 = vadd.xlane.f32.xlu0 %v1463
    %v1486 = vpop.xlane.xlu0 %1485
    %1487 = vadd.xlane.f32.xlu0 %v1464
    %v1488 = vpop.xlane.xlu0 %1487
    %1489 = vadd.xlane.f32.xlu0 %v1465
    %v1490 = vpop.xlane.xlu0 %1489
    %1491 = vadd.xlane.f32.xlu0 %v1466
    %v1492 = vpop.xlane.xlu0 %1491
    %1493 = vadd.xlane.f32.xlu0 %v1467
    %v1494 = vpop.xlane.xlu0 %1493
    %1495 = vadd.xlane.f32.xlu0 %v1468
    %v1496 = vpop.xlane.xlu0 %1495
    %1497 = vadd.xlane.f32.xlu0 %v1469
    %v1498 = vpop.xlane.xlu0 %1497
    %1499 = vadd.xlane.f32.xlu0 %v1470
    %v1500 = vpop.xlane.xlu0 %1499
    %1501 = vadd.xlane.f32.xlu0 %v1471
    %v1502 = vpop.xlane.xlu0 %1501
    %1503 = vadd.xlane.f32.xlu0 %v1472
    %v1504 = vpop.xlane.xlu0 %1503
    %v1505 = vmul.f32 %v1474, 0.015625
    %v1506 = vmul.f32 %v1476, 0.015625
    %v1507 = vmul.f32 %v1478, 0.015625
    %v1508 = vmul.f32 %v1480, 0.015625
    %v1509 = vmul.f32 %v1482, 0.015625
    %v1510 = vmul.f32 %v1484, 0.015625
    %v1511 = vmul.f32 %v1486, 0.015625
    %v1512 = vmul.f32 %v1488, 0.015625
    %v1513 = vmul.f32 %v1490, 0.015625
    %v1514 = vmul.f32 %v1492, 0.015625
    %v1515 = vmul.f32 %v1494, 0.015625
    %v1516 = vmul.f32 %v1496, 0.015625
    %v1517 = vmul.f32 %v1498, 0.015625
    %v1518 = vmul.f32 %v1500, 0.015625
    %v1519 = vmul.f32 %v1502, 0.015625
    %v1520 = vmul.f32 %v1504, 0.015625
    %v1521 = vmul.f32 %v1441, %v1441
    %v1522 = vmul.f32 %v1442, %v1442
    %v1523 = vmul.f32 %v1443, %v1443
    %v1524 = vmul.f32 %v1444, %v1444
    %v1525 = vmul.f32 %v1445, %v1445
    %v1526 = vmul.f32 %v1446, %v1446
    %v1527 = vmul.f32 %v1447, %v1447
    %v1528 = vmul.f32 %v1448, %v1448
    %v1529 = vmul.f32 %v1449, %v1449
    %v1530 = vmul.f32 %v1450, %v1450
    %v1531 = vmul.f32 %v1451, %v1451
    %v1532 = vmul.f32 %v1452, %v1452
    %v1533 = vmul.f32 %v1453, %v1453
    %v1534 = vmul.f32 %v1454, %v1454
    %v1535 = vmul.f32 %v1455, %v1455
    %v1536 = vmul.f32 %v1456, %v1456
    %v1537 = vsub.f32 %v1505, %v1521
    %v1538 = vsub.f32 %v1506, %v1522
    %v1539 = vsub.f32 %v1507, %v1523
    %v1540 = vsub.f32 %v1508, %v1524
    %v1541 = vsub.f32 %v1509, %v1525
    %v1542 = vsub.f32 %v1510, %v1526
    %v1543 = vsub.f32 %v1511, %v1527
    %v1544 = vsub.f32 %v1512, %v1528
    %v1545 = vsub.f32 %v1513, %v1529
    %v1546 = vsub.f32 %v1514, %v1530
    %v1547 = vsub.f32 %v1515, %v1531
    %v1548 = vsub.f32 %v1516, %v1532
    %v1549 = vsub.f32 %v1517, %v1533
    %v1550 = vsub.f32 %v1518, %v1534
    %v1551 = vsub.f32 %v1519, %v1535
    %v1552 = vsub.f32 %v1520, %v1536
    %v1553 = vsub.f32 %v1393, %v1441
    %v1554 = vsub.f32 %v1394, %v1442
    %v1555 = vsub.f32 %v1395, %v1443
    %v1556 = vsub.f32 %v1396, %v1444
    %v1557 = vsub.f32 %v1397, %v1445
    %v1558 = vsub.f32 %v1398, %v1446
    %v1559 = vsub.f32 %v1399, %v1447
    %v1560 = vsub.f32 %v1400, %v1448
    %v1561 = vsub.f32 %v1401, %v1449
    %v1562 = vsub.f32 %v1402, %v1450
    %v1563 = vsub.f32 %v1403, %v1451
    %v1564 = vsub.f32 %v1404, %v1452
    %v1565 = vsub.f32 %v1405, %v1453
    %v1566 = vsub.f32 %v1406, %v1454
    %v1567 = vsub.f32 %v1407, %v1455
    %v1568 = vsub.f32 %v1408, %v1456
    %v1569 = vadd.f32 %v1537, 1e-05
    %v1570 = vadd.f32 %v1538, 1e-05
    %v1571 = vadd.f32 %v1539, 1e-05
    %v1572 = vadd.f32 %v1540, 1e-05
    %v1573 = vadd.f32 %v1541, 1e-05
    %v1574 = vadd.f32 %v1542, 1e-05
    %v1575 = vadd.f32 %v1543, 1e-05
    %v1576 = vadd.f32 %v1544, 1e-05
    %v1577 = vadd.f32 %v1545, 1e-05
    %v1578 = vadd.f32 %v1546, 1e-05
    %v1579 = vadd.f32 %v1547, 1e-05
    %v1580 = vadd.f32 %v1548, 1e-05
    %v1581 = vadd.f32 %v1549, 1e-05
    %v1582 = vadd.f32 %v1550, 1e-05
    %v1583 = vadd.f32 %v1551, 1e-05
    %v1584 = vadd.f32 %v1552, 1e-05
    %v1585 = vrsqrt.pop %v1569
    %v1586 = vrsqrt.pop %v1570
    %v1587 = vrsqrt.pop %v1571
    %v1588 = vrsqrt.pop %v1572
    %v1589 = vrsqrt.pop %v1573
    %v1590 = vrsqrt.pop %v1574
    %v1591 = vrsqrt.pop %v1575
    %v1592 = vrsqrt.pop %v1576
    %v1593 = vrsqrt.pop %v1577
    %v1594 = vrsqrt.pop %v1578
    %v1595 = vrsqrt.pop %v1579
    %v1596 = vrsqrt.pop %v1580
    %v1597 = vrsqrt.pop %v1581
    %v1598 = vrsqrt.pop %v1582
    %v1599 = vrsqrt.pop %v1583
    %v1600 = vrsqrt.pop %v1584
    %v1601 = vmul.f32 %v1553, %v1585
    %v1602 = vmul.f32 %v1554, %v1586
    %v1603 = vmul.f32 %v1555, %v1587
    %v1604 = vmul.f32 %v1556, %v1588
    %v1605 = vmul.f32 %v1557, %v1589
    %v1606 = vmul.f32 %v1558, %v1590
    %v1607 = vmul.f32 %v1559, %v1591
    %v1608 = vmul.f32 %v1560, %v1592
    %v1609 = vmul.f32 %v1561, %v1593
    %v1610 = vmul.f32 %v1562, %v1594
    %v1611 = vmul.f32 %v1563, %v1595
    %v1612 = vmul.f32 %v1564, %v1596
    %v1613 = vmul.f32 %v1565, %v1597
    %v1614 = vmul.f32 %v1566, %v1598
    %v1615 = vmul.f32 %v1567, %v1599
    %v1616 = vmul.f32 %v1568, %v1600
    %v1617 = vlaneseq
    %v1618 = vshrl.u32 %v1617, 7
    %v1619 = vsub.s32 6, %v1618
    %v1620 = vrot.slane %v90, %v1619
    %v1621 = vmul.f32 %v1601, %v1620
    %v1622 = vmul.f32 %v1602, %v1620
    %v1623 = vmul.f32 %v1603, %v1620
    %v1624 = vmul.f32 %v1604, %v1620
    %v1625 = vmul.f32 %v1605, %v1620
    %v1626 = vmul.f32 %v1606, %v1620
    %v1627 = vmul.f32 %v1607, %v1620
    %v1628 = vmul.f32 %v1608, %v1620
    %v1629 = vmul.f32 %v1609, %v1620
    %v1630 = vmul.f32 %v1610, %v1620
    %v1631 = vmul.f32 %v1611, %v1620
    %v1632 = vmul.f32 %v1612, %v1620
    %v1633 = vmul.f32 %v1613, %v1620
    %v1634 = vmul.f32 %v1614, %v1620
    %v1635 = vmul.f32 %v1615, %v1620
    %v1636 = vmul.f32 %v1616, %v1620
    %v1637 = vlaneseq
    %v1638 = vshrl.u32 %v1637, 7
    %v1639 = vsub.s32 7, %v1638
    %v1640 = vrot.slane %v90, %v1639
    %v1641 = vadd.f32 %v1621, %v1640
    %v1642 = vadd.f32 %v1622, %v1640
    %v1643 = vadd.f32 %v1623, %v1640
    %v1644 = vadd.f32 %v1624, %v1640
    %v1645 = vadd.f32 %v1625, %v1640
    %v1646 = vadd.f32 %v1626, %v1640
    %v1647 = vadd.f32 %v1627, %v1640
    %v1648 = vadd.f32 %v1628, %v1640
    %v1649 = vadd.f32 %v1629, %v1640
    %v1650 = vadd.f32 %v1630, %v1640
    %v1651 = vadd.f32 %v1631, %v1640
    %v1652 = vadd.f32 %v1632, %v1640
    %v1653 = vadd.f32 %v1633, %v1640
    %v1654 = vadd.f32 %v1634, %v1640
    %v1655 = vadd.f32 %v1635, %v1640
    %v1656 = vadd.f32 %v1636, %v1640
    %s1657 = scalar_lea.vmem [#allocation7], 320
    %v1658 = vld [vmem:[%s1657] sm:$0xf]
    %v1659 = vld [vmem:[%s1657 + $0x4] sm:$0xf]
    %v1660 = vld [vmem:[%s1657 + $0x8] sm:$0xf]
    %v1661 = vld [vmem:[%s1657 + $0xc] sm:$0xf]
    %v1662 = vld [vmem:[%s1657 + $0x10] sm:$0xf]
    %v1663 = vld [vmem:[%s1657 + $0x14] sm:$0xf]
    %v1664 = vld [vmem:[%s1657 + $0x18] sm:$0xf]
    %v1665 = vld [vmem:[%s1657 + $0x1c] sm:$0xf]
    %v1666 = vld [vmem:[%s1657 + $0x20] sm:$0xf]
    %v1667 = vld [vmem:[%s1657 + $0x24] sm:$0xf]
    %v1668 = vld [vmem:[%s1657 + $0x28] sm:$0xf]
    %v1669 = vld [vmem:[%s1657 + $0x2c] sm:$0xf]
    %v1670 = vld [vmem:[%s1657 + $0x30] sm:$0xf]
    %v1671 = vld [vmem:[%s1657 + $0x34] sm:$0xf]
    %v1672 = vld [vmem:[%s1657 + $0x38] sm:$0xf]
    %v1673 = vld [vmem:[%s1657 + $0x3c] sm:$0xf]
    %v1674 = vpack.c.bf16 %v1642, %v1641
    %v1675 = vpack.c.bf16 %v1644, %v1643
    %v1676 = vpack.c.bf16 %v1646, %v1645
    %v1677 = vpack.c.bf16 %v1648, %v1647
    %v1678 = vpack.c.bf16 %v1650, %v1649
    %v1679 = vpack.c.bf16 %v1652, %v1651
    %v1680 = vpack.c.bf16 %v1654, %v1653
    %v1681 = vpack.c.bf16 %v1656, %v1655
    %v1682 = vlaneseq
    %v1683 = vshrl.u32 %v1682, 7
    %v1684 = vsub.s32 0, %v1683
    %v1685 = vrot.slane %v91, %v1684
    %v1702 = vunpack.c.l.b16 %v1658
    %v1703 = vunpack.c.l.b16 %v1659
    %v1704 = vunpack.c.l.b16 %v1660
    %v1705 = vunpack.c.l.b16 %v1661
    %v1706 = vunpack.c.l.b16 %v1662
    %v1707 = vunpack.c.l.b16 %v1663
    %v1708 = vunpack.c.l.b16 %v1664
    %v1709 = vunpack.c.l.b16 %v1665
    %v1710 = vunpack.c.l.b16 %v1666
    %v1711 = vunpack.c.l.b16 %v1667
    %v1712 = vunpack.c.l.b16 %v1668
    %v1713 = vunpack.c.l.b16 %v1669
    %v1714 = vunpack.c.l.b16 %v1670
    %v1715 = vunpack.c.l.b16 %v1671
    %v1716 = vunpack.c.l.b16 %v1672
    %v1717 = vunpack.c.l.b16 %v1673
    %v1718 = vpack.c.b16 %v1703, %v1702
    %v1719 = vpack.c.b16 %v1705, %v1704
    %v1720 = vpack.c.b16 %v1707, %v1706
    %v1721 = vpack.c.b16 %v1709, %v1708
    %v1722 = vpack.c.b16 %v1711, %v1710
    %v1723 = vpack.c.b16 %v1713, %v1712
    %v1724 = vpack.c.b16 %v1715, %v1714
    %v1725 = vpack.c.b16 %v1717, %v1716
    %1734 = vmatprep.subr.bf16.mxu0 0
    %1735 = vmatpush1.bf16.msra.mxu0 %v1718
    %1736 = vmatprep.subr.bf16.mxu0 0
    %1737 = vmatpush1.bf16.msra.mxu0 %v1719
    %1738 = vmatprep.subr.bf16.mxu0 0
    %1739 = vmatpush1.bf16.msra.mxu0 %v1720
    %1740 = vmatprep.subr.bf16.mxu0 0
    %1741 = vmatpush1.bf16.msra.mxu0 %v1721
    %1742 = vmatprep.subr.bf16.mxu0 0
    %1743 = vmatpush1.bf16.msra.mxu0 %v1722
    %1744 = vmatprep.subr.bf16.mxu0 0
    %1745 = vmatpush1.bf16.msra.mxu0 %v1723
    %1746 = vmatprep.subr.bf16.mxu0 0
    %1747 = vmatpush1.bf16.msra.mxu0 %v1724
    %1748 = vmatprep.subr.bf16.mxu0 0
    %1749 = vmatpush1.bf16.msra.mxu0 %v1725
    %1750 = vmatprep.subr.bf16.mxu0 0
    %1751 = vmatpush1.bf16.msra.mxu0 0
    %1752 = vmatprep.subr.bf16.mxu0 0
    %1753 = vmatpush1.bf16.msra.mxu0 0
    %1754 = vmatprep.subr.bf16.mxu0 0
    %1755 = vmatpush1.bf16.msra.mxu0 0
    %1756 = vmatprep.subr.bf16.mxu0 0
    %1757 = vmatpush1.bf16.msra.mxu0 0
    %1758 = vmatprep.subr.bf16.mxu0 0
    %1759 = vmatpush1.bf16.msra.mxu0 0
    %1760 = vmatprep.subr.bf16.mxu0 0
    %1761 = vmatpush1.bf16.msra.mxu0 0
    %1762 = vmatprep.subr.bf16.mxu0 0
    %1763 = vmatpush1.bf16.msra.mxu0 0
    %1764 = vmatprep.subr.bf16.mxu0 0
    %1765 = vmatpush1.bf16.msra.mxu0 0
    %1766 = vmatprep.mubr.bf16.mxu0 0
    %1767 = vmatmul.mubr.bf16.gmra.mrb[0].mxu0 %v1674
    %v1768 = vpop.f32.mrb[0].mxu0
    %v1769 = vadd.f32 %v1685, %v1768
    %v1770 = vpop.f32.mrb[0].mxu0
    %v1771 = vpop.f32.mrb[0].mxu0
    %v1772 = vadd.f32 %v1685, %v1771
    %v1773 = vpop.f32.mrb[0].mxu0
    %1774 = vmatprep.mubr.bf16.mxu0 0
    %1775 = vmatmul.mubr.bf16.gmra.mrb[0].mxu0 %v1675
    %v1776 = vpop.f32.mrb[0].mxu0
    %v1777 = vadd.f32 %v1685, %v1776
    %v1778 = vpop.f32.mrb[0].mxu0
    %v1779 = vpop.f32.mrb[0].mxu0
    %v1780 = vadd.f32 %v1685, %v1779
    %v1781 = vpop.f32.mrb[0].mxu0
    %1782 = vmatprep.mubr.bf16.mxu0 0
    %1783 = vmatmul.mubr.bf16.gmra.mrb[0].mxu0 %v1676
    %v1784 = vpop.f32.mrb[0].mxu0
    %v1785 = vadd.f32 %v1685, %v1784
    %v1786 = vpop.f32.mrb[0].mxu0
    %v1787 = vpop.f32.mrb[0].mxu0
    %v1788 = vadd.f32 %v1685, %v1787
    %v1789 = vpop.f32.mrb[0].mxu0
    %1790 = vmatprep.mubr.bf16.mxu0 0
    %1791 = vmatmul.mubr.bf16.gmra.mrb[0].mxu0 %v1677
    %v1792 = vpop.f32.mrb[0].mxu0
    %v1793 = vadd.f32 %v1685, %v1792
    %v1794 = vpop.f32.mrb[0].mxu0
    %v1795 = vpop.f32.mrb[0].mxu0
    %v1796 = vadd.f32 %v1685, %v1795
    %v1797 = vpop.f32.mrb[0].mxu0
    %1798 = vmatprep.mubr.bf16.mxu0 0
    %1799 = vmatmul.mubr.bf16.gmra.mrb[0].mxu0 %v1678
    %v1800 = vpop.f32.mrb[0].mxu0
    %v1801 = vadd.f32 %v1685, %v1800
    %v1802 = vpop.f32.mrb[0].mxu0
    %v1803 = vpop.f32.mrb[0].mxu0
    %v1804 = vadd.f32 %v1685, %v1803
    %v1805 = vpop.f32.mrb[0].mxu0
    %1806 = vmatprep.mubr.bf16.mxu0 0
    %1807 = vmatmul.mubr.bf16.gmra.mrb[0].mxu0 %v1679
    %v1808 = vpop.f32.mrb[0].mxu0
    %v1809 = vadd.f32 %v1685, %v1808
    %v1810 = vpop.f32.mrb[0].mxu0
    %v1811 = vpop.f32.mrb[0].mxu0
    %v1812 = vadd.f32 %v1685, %v1811
    %v1813 = vpop.f32.mrb[0].mxu0
    %1814 = vmatprep.mubr.bf16.mxu0 0
    %1815 = vmatmul.mubr.bf16.gmra.mrb[0].mxu0 %v1680
    %v1816 = vpop.f32.mrb[0].mxu0
    %v1817 = vadd.f32 %v1685, %v1816
    %v1818 = vpop.f32.mrb[0].mxu0
    %v1819 = vpop.f32.mrb[0].mxu0
    %v1820 = vadd.f32 %v1685, %v1819
    %v1821 = vpop.f32.mrb[0].mxu0
    %1822 = vmatprep.mubr.bf16.mxu0 0
    %1823 = vmatmul.mubr.bf16.gmra.mrb[0].mxu0 %v1681
    %v1824 = vpop.f32.mrb[0].mxu0
    %v1825 = vadd.f32 %v1685, %v1824
    %v1826 = vpop.f32.mrb[0].mxu0
    %v1827 = vpop.f32.mrb[0].mxu0
    %v1828 = vadd.f32 %v1685, %v1827
    %v1829 = vpop.f32.mrb[0].mxu0
    %1830 = vdwg.mxu0
    %v1831 = vxor.u32 %v1769, 2147483648
    %v1832 = vxor.u32 %v1772, 2147483648
    %v1833 = vxor.u32 %v1777, 2147483648
    %v1834 = vxor.u32 %v1780, 2147483648
    %v1835 = vxor.u32 %v1785, 2147483648
    %v1836 = vxor.u32 %v1788, 2147483648
    %v1837 = vxor.u32 %v1793, 2147483648
    %v1838 = vxor.u32 %v1796, 2147483648
    %v1839 = vxor.u32 %v1801, 2147483648
    %v1840 = vxor.u32 %v1804, 2147483648
    %v1841 = vxor.u32 %v1809, 2147483648
    %v1842 = vxor.u32 %v1812, 2147483648
    %v1843 = vxor.u32 %v1817, 2147483648
    %v1844 = vxor.u32 %v1820, 2147483648
    %v1845 = vxor.u32 %v1825, 2147483648
    %v1846 = vxor.u32 %v1828, 2147483648
    %v1847 = vmul.f32 %v1831, 1.442695
    %v1848 = vpow.pop %v1847
    %v1849 = vmul.f32 %v1832, 1.442695
    %v1850 = vpow.pop %v1849
    %v1851 = vmul.f32 %v1833, 1.442695
    %v1852 = vpow.pop %v1851
    %v1853 = vmul.f32 %v1834, 1.442695
    %v1854 = vpow.pop %v1853
    %v1855 = vmul.f32 %v1835, 1.442695
    %v1856 = vpow.pop %v1855
    %v1857 = vmul.f32 %v1836, 1.442695
    %v1858 = vpow.pop %v1857
    %v1859 = vmul.f32 %v1837, 1.442695
    %v1860 = vpow.pop %v1859
    %v1861 = vmul.f32 %v1838, 1.442695
    %v1862 = vpow.pop %v1861
    %v1863 = vmul.f32 %v1839, 1.442695
    %v1864 = vpow.pop %v1863
    %v1865 = vmul.f32 %v1840, 1.442695
    %v1866 = vpow.pop %v1865
    %v1867 = vmul.f32 %v1841, 1.442695
    %v1868 = vpow.pop %v1867
    %v1869 = vmul.f32 %v1842, 1.442695
    %v1870 = vpow.pop %v1869
    %v1871 = vmul.f32 %v1843, 1.442695
    %v1872 = vpow.pop %v1871
    %v1873 = vmul.f32 %v1844, 1.442695
    %v1874 = vpow.pop %v1873
    %v1875 = vmul.f32 %v1845, 1.442695
    %v1876 = vpow.pop %v1875
    %v1877 = vmul.f32 %v1846, 1.442695
    %v1878 = vpow.pop %v1877
    %v1879 = vadd.f32 %v1848, 1.0
    %v1880 = vadd.f32 %v1850, 1.0
    %v1881 = vadd.f32 %v1852, 1.0
    %v1882 = vadd.f32 %v1854, 1.0
    %v1883 = vadd.f32 %v1856, 1.0
    %v1884 = vadd.f32 %v1858, 1.0
    %v1885 = vadd.f32 %v1860, 1.0
    %v1886 = vadd.f32 %v1862, 1.0
    %v1887 = vadd.f32 %v1864, 1.0
    %v1888 = vadd.f32 %v1866, 1.0
    %v1889 = vadd.f32 %v1868, 1.0
    %v1890 = vadd.f32 %v1870, 1.0
    %v1891 = vadd.f32 %v1872, 1.0
    %v1892 = vadd.f32 %v1874, 1.0
    %v1893 = vadd.f32 %v1876, 1.0
    %v1894 = vadd.f32 %v1878, 1.0
    %v1895 = vrcp.pop %v1879
    %v1896 = vmul.f32 1.0, %v1895
    %v1897 = vrcp.pop %v1880
    %v1898 = vmul.f32 1.0, %v1897
    %v1899 = vrcp.pop %v1881
    %v1900 = vmul.f32 1.0, %v1899
    %v1901 = vrcp.pop %v1882
    %v1902 = vmul.f32 1.0, %v1901
    %v1903 = vrcp.pop %v1883
    %v1904 = vmul.f32 1.0, %v1903
    %v1905 = vrcp.pop %v1884
    %v1906 = vmul.f32 1.0, %v1905
    %v1907 = vrcp.pop %v1885
    %v1908 = vmul.f32 1.0, %v1907
    %v1909 = vrcp.pop %v1886
    %v1910 = vmul.f32 1.0, %v1909
    %v1911 = vrcp.pop %v1887
    %v1912 = vmul.f32 1.0, %v1911
    %v1913 = vrcp.pop %v1888
    %v1914 = vmul.f32 1.0, %v1913
    %v1915 = vrcp.pop %v1889
    %v1916 = vmul.f32 1.0, %v1915
    %v1917 = vrcp.pop %v1890
    %v1918 = vmul.f32 1.0, %v1917
    %v1919 = vrcp.pop %v1891
    %v1920 = vmul.f32 1.0, %v1919
    %v1921 = vrcp.pop %v1892
    %v1922 = vmul.f32 1.0, %v1921
    %v1923 = vrcp.pop %v1893
    %v1924 = vmul.f32 1.0, %v1923
    %v1925 = vrcp.pop %v1894
    %v1926 = vmul.f32 1.0, %v1925
    %v1927 = vmul.f32 %v1769, %v1896
    %v1928 = vmul.f32 %v1772, %v1898
    %v1929 = vmul.f32 %v1777, %v1900
    %v1930 = vmul.f32 %v1780, %v1902
    %v1931 = vmul.f32 %v1785, %v1904
    %v1932 = vmul.f32 %v1788, %v1906
    %v1933 = vmul.f32 %v1793, %v1908
    %v1934 = vmul.f32 %v1796, %v1910
    %v1935 = vmul.f32 %v1801, %v1912
    %v1936 = vmul.f32 %v1804, %v1914
    %v1937 = vmul.f32 %v1809, %v1916
    %v1938 = vmul.f32 %v1812, %v1918
    %v1939 = vmul.f32 %v1817, %v1920
    %v1940 = vmul.f32 %v1820, %v1922
    %v1941 = vmul.f32 %v1825, %v1924
    %v1942 = vmul.f32 %v1828, %v1926
    %s1943 = scalar_lea.vmem [#allocation7], 384
    %v1944 = vld [vmem:[%s1943] sm:$0xf]
    %v1945 = vld [vmem:[%s1943 + $0x4] sm:$0xf]
    %v1946 = vld [vmem:[%s1943 + $0x8] sm:$0xf]
    %v1947 = vld [vmem:[%s1943 + $0xc] sm:$0xf]
    %v1948 = vld [vmem:[%s1943 + $0x10] sm:$0xf]
    %v1949 = vld [vmem:[%s1943 + $0x14] sm:$0xf]
    %v1950 = vld [vmem:[%s1943 + $0x18] sm:$0xf]
    %v1951 = vld [vmem:[%s1943 + $0x1c] sm:$0xf]
    %v1952 = vld [vmem:[%s1943 + $0x20] sm:$0xf]
    %v1953 = vld [vmem:[%s1943 + $0x24] sm:$0xf]
    %v1954 = vld [vmem:[%s1943 + $0x28] sm:$0xf]
    %v1955 = vld [vmem:[%s1943 + $0x2c] sm:$0xf]
    %v1956 = vld [vmem:[%s1943 + $0x30] sm:$0xf]
    %v1957 = vld [vmem:[%s1943 + $0x34] sm:$0xf]
    %v1958 = vld [vmem:[%s1943 + $0x38] sm:$0xf]
    %v1959 = vld [vmem:[%s1943 + $0x3c] sm:$0xf]
    %v1960 = vpack.c.bf16 %v1928, %v1927
    %v1961 = vpack.c.bf16 %v1930, %v1929
    %v1962 = vpack.c.bf16 %v1932, %v1931
    %v1963 = vpack.c.bf16 %v1934, %v1933
    %v1964 = vpack.c.bf16 %v1936, %v1935
    %v1965 = vpack.c.bf16 %v1938, %v1937
    %v1966 = vpack.c.bf16 %v1940, %v1939
    %v1967 = vpack.c.bf16 %v1942, %v1941
    %v1968 = vlaneseq
    %v1969 = vshrl.u32 %v1968, 7
    %v1970 = vsub.s32 1, %v1969
    %v1971 = vrot.slane %v91, %v1970
    %v1988 = vunpack.c.l.b16 %v1944
    %v1989 = vunpack.c.l.b16 %v1945
    %v1990 = vunpack.c.l.b16 %v1946
    %v1991 = vunpack.c.l.b16 %v1947
    %v1992 = vunpack.c.l.b16 %v1948
    %v1993 = vunpack.c.l.b16 %v1949
    %v1994 = vunpack.c.l.b16 %v1950
    %v1995 = vunpack.c.l.b16 %v1951
    %v1996 = vunpack.c.l.b16 %v1952
    %v1997 = vunpack.c.l.b16 %v1953
    %v1998 = vunpack.c.l.b16 %v1954
    %v1999 = vunpack.c.l.b16 %v1955
    %v2000 = vunpack.c.l.b16 %v1956
    %v2001 = vunpack.c.l.b16 %v1957
    %v2002 = vunpack.c.l.b16 %v1958
    %v2003 = vunpack.c.l.b16 %v1959
    %v2004 = vpack.c.b16 %v1989, %v1988
    %v2005 = vpack.c.b16 %v1991, %v1990
    %v2006 = vpack.c.b16 %v1993, %v1992
    %v2007 = vpack.c.b16 %v1995, %v1994
    %v2008 = vpack.c.b16 %v1997, %v1996
    %v2009 = vpack.c.b16 %v1999, %v1998
    %v2010 = vpack.c.b16 %v2001, %v2000
    %v2011 = vpack.c.b16 %v2003, %v2002
    %2020 = vmatprep.subr.bf16.mxu0 0
    %2021 = vmatpush1.bf16.msra.mxu0 %v2004
    %2022 = vmatprep.subr.bf16.mxu0 0
    %2023 = vmatpush1.bf16.msra.mxu0 %v2005
    %2024 = vmatprep.subr.bf16.mxu0 0
    %2025 = vmatpush1.bf16.msra.mxu0 %v2006
    %2026 = vmatprep.subr.bf16.mxu0 0
    %2027 = vmatpush1.bf16.msra.mxu0 %v2007
    %2028 = vmatprep.subr.bf16.mxu0 0
    %2029 = vmatpush1.bf16.msra.mxu0 %v2008
    %2030 = vmatprep.subr.bf16.mxu0 0
    %2031 = vmatpush1.bf16.msra.mxu0 %v2009
    %2032 = vmatprep.subr.bf16.mxu0 0
    %2033 = vmatpush1.bf16.msra.mxu0 %v2010
    %2034 = vmatprep.subr.bf16.mxu0 0
    %2035 = vmatpush1.bf16.msra.mxu0 %v2011
    %2036 = vmatprep.subr.bf16.mxu0 0
    %2037 = vmatpush1.bf16.msra.mxu0 0
    %2038 = vmatprep.subr.bf16.mxu0 0
    %2039 = vmatpush1.bf16.msra.mxu0 0
    %2040 = vmatprep.subr.bf16.mxu0 0
    %2041 = vmatpush1.bf16.msra.mxu0 0
    %2042 = vmatprep.subr.bf16.mxu0 0
    %2043 = vmatpush1.bf16.msra.mxu0 0
    %2044 = vmatprep.subr.bf16.mxu0 0
    %2045 = vmatpush1.bf16.msra.mxu0 0
    %2046 = vmatprep.subr.bf16.mxu0 0
    %2047 = vmatpush1.bf16.msra.mxu0 0
    %2048 = vmatprep.subr.bf16.mxu0 0
    %2049 = vmatpush1.bf16.msra.mxu0 0
    %2050 = vmatprep.subr.bf16.mxu0 0
    %2051 = vmatpush1.bf16.msra.mxu0 0
    %2052 = vmatprep.mubr.bf16.mxu0 0
    %2053 = vmatmul.mubr.bf16.gmra.mrb[0].mxu0 %v1960
    %v2054 = vpop.f32.mrb[0].mxu0
    %v2055 = vadd.f32 %v1971, %v2054
    %v2056 = vpop.f32.mrb[0].mxu0
    %v2057 = vpop.f32.mrb[0].mxu0
    %v2058 = vadd.f32 %v1971, %v2057
    %v2059 = vpop.f32.mrb[0].mxu0
    %2060 = vmatprep.mubr.bf16.mxu0 0
    %2061 = vmatmul.mubr.bf16.gmra.mrb[0].mxu0 %v1961
    %v2062 = vpop.f32.mrb[0].mxu0
    %v2063 = vadd.f32 %v1971, %v2062
    %v2064 = vpop.f32.mrb[0].mxu0
    %v2065 = vpop.f32.mrb[0].mxu0
    %v2066 = vadd.f32 %v1971, %v2065
    %v2067 = vpop.f32.mrb[0].mxu0
    %2068 = vmatprep.mubr.bf16.mxu0 0
    %2069 = vmatmul.mubr.bf16.gmra.mrb[0].mxu0 %v1962
    %v2070 = vpop.f32.mrb[0].mxu0
    %v2071 = vadd.f32 %v1971, %v2070
    %v2072 = vpop.f32.mrb[0].mxu0
    %v2073 = vpop.f32.mrb[0].mxu0
    %v2074 = vadd.f32 %v1971, %v2073
    %v2075 = vpop.f32.mrb[0].mxu0
    %2076 = vmatprep.mubr.bf16.mxu0 0
    %2077 = vmatmul.mubr.bf16.gmra.mrb[0].mxu0 %v1963
    %v2078 = vpop.f32.mrb[0].mxu0
    %v2079 = vadd.f32 %v1971, %v2078
    %v2080 = vpop.f32.mrb[0].mxu0
    %v2081 = vpop.f32.mrb[0].mxu0
    %v2082 = vadd.f32 %v1971, %v2081
    %v2083 = vpop.f32.mrb[0].mxu0
    %2084 = vmatprep.mubr.bf16.mxu0 0
    %2085 = vmatmul.mubr.bf16.gmra.mrb[0].mxu0 %v1964
    %v2086 = vpop.f32.mrb[0].mxu0
    %v2087 = vadd.f32 %v1971, %v2086
    %v2088 = vpop.f32.mrb[0].mxu0
    %v2089 = vpop.f32.mrb[0].mxu0
    %v2090 = vadd.f32 %v1971, %v2089
    %v2091 = vpop.f32.mrb[0].mxu0
    %2092 = vmatprep.mubr.bf16.mxu0 0
    %2093 = vmatmul.mubr.bf16.gmra.mrb[0].mxu0 %v1965
    %v2094 = vpop.f32.mrb[0].mxu0
    %v2095 = vadd.f32 %v1971, %v2094
    %v2096 = vpop.f32.mrb[0].mxu0
    %v2097 = vpop.f32.mrb[0].mxu0
    %v2098 = vadd.f32 %v1971, %v2097
    %v2099 = vpop.f32.mrb[0].mxu0
    %2100 = vmatprep.mubr.bf16.mxu0 0
    %2101 = vmatmul.mubr.bf16.gmra.mrb[0].mxu0 %v1966
    %v2102 = vpop.f32.mrb[0].mxu0
    %v2103 = vadd.f32 %v1971, %v2102
    %v2104 = vpop.f32.mrb[0].mxu0
    %v2105 = vpop.f32.mrb[0].mxu0
    %v2106 = vadd.f32 %v1971, %v2105
    %v2107 = vpop.f32.mrb[0].mxu0
    %2108 = vmatprep.mubr.bf16.mxu0 0
    %2109 = vmatmul.mubr.bf16.gmra.mrb[0].mxu0 %v1967
    %v2110 = vpop.f32.mrb[0].mxu0
    %v2111 = vadd.f32 %v1971, %v2110
    %v2112 = vpop.f32.mrb[0].mxu0
    %v2113 = vpop.f32.mrb[0].mxu0
    %v2114 = vadd.f32 %v1971, %v2113
    %v2115 = vpop.f32.mrb[0].mxu0
    %2116 = vdwg.mxu0
    %s2117 = scalar_lea.vmem [#allocation7], 448
    %v2118 = vld [vmem:[%s2117] sm:$0xf]
    %v2119 = vld [vmem:[%s2117 + $0x4] sm:$0xf]
    %v2120 = vld [vmem:[%s2117 + $0x8] sm:$0xf]
    %v2121 = vld [vmem:[%s2117 + $0xc] sm:$0xf]
    %v2122 = vld [vmem:[%s2117 + $0x10] sm:$0xf]
    %v2123 = vld [vmem:[%s2117 + $0x14] sm:$0xf]
    %v2124 = vld [vmem:[%s2117 + $0x18] sm:$0xf]
    %v2125 = vld [vmem:[%s2117 + $0x1c] sm:$0xf]
    %v2126 = vld [vmem:[%s2117 + $0x20] sm:$0xf]
    %v2127 = vld [vmem:[%s2117 + $0x24] sm:$0xf]
    %v2128 = vld [vmem:[%s2117 + $0x28] sm:$0xf]
    %v2129 = vld [vmem:[%s2117 + $0x2c] sm:$0xf]
    %v2130 = vld [vmem:[%s2117 + $0x30] sm:$0xf]
    %v2131 = vld [vmem:[%s2117 + $0x34] sm:$0xf]
    %v2132 = vld [vmem:[%s2117 + $0x38] sm:$0xf]
    %v2133 = vld [vmem:[%s2117 + $0x3c] sm:$0xf]
    %s2134 = scalar_lea.vmem [#allocation7], 512
    %v2135 = vld [vmem:[%s2134] sm:$0xf]
    %v2136 = vld [vmem:[%s2134 + $0x4] sm:$0xf]
    %v2137 = vld [vmem:[%s2134 + $0x8] sm:$0xf]
    %v2138 = vld [vmem:[%s2134 + $0xc] sm:$0xf]
    %v2139 = vld [vmem:[%s2134 + $0x10] sm:$0xf]
    %v2140 = vld [vmem:[%s2134 + $0x14] sm:$0xf]
    %v2141 = vld [vmem:[%s2134 + $0x18] sm:$0xf]
    %v2142 = vld [vmem:[%s2134 + $0x1c] sm:$0xf]
    %v2143 = vld [vmem:[%s2134 + $0x20] sm:$0xf]
    %v2144 = vld [vmem:[%s2134 + $0x24] sm:$0xf]
    %v2145 = vld [vmem:[%s2134 + $0x28] sm:$0xf]
    %v2146 = vld [vmem:[%s2134 + $0x2c] sm:$0xf]
    %v2147 = vld [vmem:[%s2134 + $0x30] sm:$0xf]
    %v2148 = vld [vmem:[%s2134 + $0x34] sm:$0xf]
    %v2149 = vld [vmem:[%s2134 + $0x38] sm:$0xf]
    %v2150 = vld [vmem:[%s2134 + $0x3c] sm:$0xf]
    %s2151 = scalar_lea.vmem [#allocation7], 576
    %v2152 = vld [vmem:[%s2151] sm:$0xf]
    %v2153 = vld [vmem:[%s2151 + $0x4] sm:$0xf]
    %v2154 = vld [vmem:[%s2151 + $0x8] sm:$0xf]
    %v2155 = vld [vmem:[%s2151 + $0xc] sm:$0xf]
    %v2156 = vld [vmem:[%s2151 + $0x10] sm:$0xf]
    %v2157 = vld [vmem:[%s2151 + $0x14] sm:$0xf]
    %v2158 = vld [vmem:[%s2151 + $0x18] sm:$0xf]
    %v2159 = vld [vmem:[%s2151 + $0x1c] sm:$0xf]
    %v2160 = vld [vmem:[%s2151 + $0x20] sm:$0xf]
    %v2161 = vld [vmem:[%s2151 + $0x24] sm:$0xf]
    %v2162 = vld [vmem:[%s2151 + $0x28] sm:$0xf]
    %v2163 = vld [vmem:[%s2151 + $0x2c] sm:$0xf]
    %v2164 = vld [vmem:[%s2151 + $0x30] sm:$0xf]
    %v2165 = vld [vmem:[%s2151 + $0x34] sm:$0xf]
    %v2166 = vld [vmem:[%s2151 + $0x38] sm:$0xf]
    %v2167 = vld [vmem:[%s2151 + $0x3c] sm:$0xf]
    %v2168 = vpack.c.bf16 %v2058, %v2055
    %v2169 = vpack.c.bf16 %v2066, %v2063
    %v2170 = vpack.c.bf16 %v2074, %v2071
    %v2171 = vpack.c.bf16 %v2082, %v2079
    %v2172 = vpack.c.bf16 %v2090, %v2087
    %v2173 = vpack.c.bf16 %v2098, %v2095
    %v2174 = vpack.c.bf16 %v2106, %v2103
    %v2175 = vpack.c.bf16 %v2114, %v2111
    %v2192 = vunpack.c.l.b16 %v2118
    %v2193 = vunpack.c.l.b16 %v2119
    %v2194 = vunpack.c.l.b16 %v2120
    %v2195 = vunpack.c.l.b16 %v2121
    %v2196 = vunpack.c.l.b16 %v2122
    %v2197 = vunpack.c.l.b16 %v2123
    %v2198 = vunpack.c.l.b16 %v2124
    %v2199 = vunpack.c.l.b16 %v2125
    %v2200 = vunpack.c.l.b16 %v2126
    %v2201 = vunpack.c.l.b16 %v2127
    %v2202 = vunpack.c.l.b16 %v2128
    %v2203 = vunpack.c.l.b16 %v2129
    %v2204 = vunpack.c.l.b16 %v2130
    %v2205 = vunpack.c.l.b16 %v2131
    %v2206 = vunpack.c.l.b16 %v2132
    %v2207 = vunpack.c.l.b16 %v2133
    %v2208 = vpack.c.b16 %v2193, %v2192
    %v2209 = vpack.c.b16 %v2195, %v2194
    %v2210 = vpack.c.b16 %v2197, %v2196
    %v2211 = vpack.c.b16 %v2199, %v2198
    %v2212 = vpack.c.b16 %v2201, %v2200
    %v2213 = vpack.c.b16 %v2203, %v2202
    %v2214 = vpack.c.b16 %v2205, %v2204
    %v2215 = vpack.c.b16 %v2207, %v2206
    %2224 = vmatprep.subr.bf16.mxu0 0
    %2225 = vmatpush1.bf16.msra.mxu0 %v2208
    %2226 = vmatprep.subr.bf16.mxu0 0
    %2227 = vmatpush1.bf16.msra.mxu0 %v2209
    %2228 = vmatprep.subr.bf16.mxu0 0
    %2229 = vmatpush1.bf16.msra.mxu0 %v2210
    %2230 = vmatprep.subr.bf16.mxu0 0
    %2231 = vmatpush1.bf16.msra.mxu0 %v2211
    %2232 = vmatprep.subr.bf16.mxu0 0
    %2233 = vmatpush1.bf16.msra.mxu0 %v2212
    %2234 = vmatprep.subr.bf16.mxu0 0
    %2235 = vmatpush1.bf16.msra.mxu0 %v2213
    %2236 = vmatprep.subr.bf16.mxu0 0
    %2237 = vmatpush1.bf16.msra.mxu0 %v2214
    %2238 = vmatprep.subr.bf16.mxu0 0
    %2239 = vmatpush1.bf16.msra.mxu0 %v2215
    %2240 = vmatprep.subr.bf16.mxu0 0
    %2241 = vmatpush1.bf16.msra.mxu0 0
    %2242 = vmatprep.subr.bf16.mxu0 0
    %2243 = vmatpush1.bf16.msra.mxu0 0
    %2244 = vmatprep.subr.bf16.mxu0 0
    %2245 = vmatpush1.bf16.msra.mxu0 0
    %2246 = vmatprep.subr.bf16.mxu0 0
    %2247 = vmatpush1.bf16.msra.mxu0 0
    %2248 = vmatprep.subr.bf16.mxu0 0
    %2249 = vmatpush1.bf16.msra.mxu0 0
    %2250 = vmatprep.subr.bf16.mxu0 0
    %2251 = vmatpush1.bf16.msra.mxu0 0
    %2252 = vmatprep.subr.bf16.mxu0 0
    %2253 = vmatpush1.bf16.msra.mxu0 0
    %2254 = vmatprep.subr.bf16.mxu0 0
    %2255 = vmatpush1.bf16.msra.mxu0 0
    %2256 = vmatprep.mubr.bf16.mxu0 0
    %2257 = vmatmul.mubr.bf16.gmra.mrb[0].mxu0 %v2168
    %v2258 = vpop.f32.mrb[0].mxu0
    %v2259 = vadd.f32 0.0, %v2258
    %v2260 = vpop.f32.mrb[0].mxu0
    %v2261 = vpop.f32.mrb[0].mxu0
    %v2262 = vadd.f32 0.0, %v2261
    %v2263 = vpop.f32.mrb[0].mxu0
    %2264 = vmatprep.mubr.bf16.mxu0 0
    %2265 = vmatmul.mubr.bf16.gmra.mrb[0].mxu0 %v2169
    %v2266 = vpop.f32.mrb[0].mxu0
    %v2267 = vadd.f32 0.0, %v2266
    %v2268 = vpop.f32.mrb[0].mxu0
    %v2269 = vpop.f32.mrb[0].mxu0
    %v2270 = vadd.f32 0.0, %v2269
    %v2271 = vpop.f32.mrb[0].mxu0
    %2272 = vmatprep.mubr.bf16.mxu0 0
    %2273 = vmatmul.mubr.bf16.gmra.mrb[0].mxu0 %v2170
    %v2274 = vpop.f32.mrb[0].mxu0
    %v2275 = vadd.f32 0.0, %v2274
    %v2276 = vpop.f32.mrb[0].mxu0
    %v2277 = vpop.f32.mrb[0].mxu0
    %v2278 = vadd.f32 0.0, %v2277
    %v2279 = vpop.f32.mrb[0].mxu0
    %2280 = vmatprep.mubr.bf16.mxu0 0
    %2281 = vmatmul.mubr.bf16.gmra.mrb[0].mxu0 %v2171
    %v2282 = vpop.f32.mrb[0].mxu0
    %v2283 = vadd.f32 0.0, %v2282
    %v2284 = vpop.f32.mrb[0].mxu0
    %v2285 = vpop.f32.mrb[0].mxu0
    %v2286 = vadd.f32 0.0, %v2285
    %v2287 = vpop.f32.mrb[0].mxu0
    %2288 = vmatprep.mubr.bf16.mxu0 0
    %2289 = vmatmul.mubr.bf16.gmra.mrb[0].mxu0 %v2172
    %v2290 = vpop.f32.mrb[0].mxu0
    %v2291 = vadd.f32 0.0, %v2290
    %v2292 = vpop.f32.mrb[0].mxu0
    %v2293 = vpop.f32.mrb[0].mxu0
    %v2294 = vadd.f32 0.0, %v2293
    %v2295 = vpop.f32.mrb[0].mxu0
    %2296 = vmatprep.mubr.bf16.mxu0 0
    %2297 = vmatmul.mubr.bf16.gmra.mrb[0].mxu0 %v2173
    %v2298 = vpop.f32.mrb[0].mxu0
    %v2299 = vadd.f32 0.0, %v2298
    %v2300 = vpop.f32.mrb[0].mxu0
    %v2301 = vpop.f32.mrb[0].mxu0
    %v2302 = vadd.f32 0.0, %v2301
    %v2303 = vpop.f32.mrb[0].mxu0
    %2304 = vmatprep.mubr.bf16.mxu0 0
    %2305 = vmatmul.mubr.bf16.gmra.mrb[0].mxu0 %v2174
    %v2306 = vpop.f32.mrb[0].mxu0
    %v2307 = vadd.f32 0.0, %v2306
    %v2308 = vpop.f32.mrb[0].mxu0
    %v2309 = vpop.f32.mrb[0].mxu0
    %v2310 = vadd.f32 0.0, %v2309
    %v2311 = vpop.f32.mrb[0].mxu0
    %2312 = vmatprep.mubr.bf16.mxu0 0
    %2313 = vmatmul.mubr.bf16.gmra.mrb[0].mxu0 %v2175
    %v2314 = vpop.f32.mrb[0].mxu0
    %v2315 = vadd.f32 0.0, %v2314
    %v2316 = vpop.f32.mrb[0].mxu0
    %v2317 = vpop.f32.mrb[0].mxu0
    %v2318 = vadd.f32 0.0, %v2317
    %v2319 = vpop.f32.mrb[0].mxu0
    %2320 = vdwg.mxu0
    %v2321 = vpack.c.bf16 %v2262, %v2259
    %v2322 = vpack.c.bf16 %v2270, %v2267
    %v2323 = vpack.c.bf16 %v2278, %v2275
    %v2324 = vpack.c.bf16 %v2286, %v2283
    %v2325 = vpack.c.bf16 %v2294, %v2291
    %v2326 = vpack.c.bf16 %v2302, %v2299
    %v2327 = vpack.c.bf16 %v2310, %v2307
    %v2328 = vpack.c.bf16 %v2318, %v2315
    %v2329 = vlaneseq
    %v2330 = vshrl.u32 %v2329, 7
    %v2331 = vsub.s32 2, %v2330
    %v2332 = vrot.slane %v91, %v2331
    %2333 = vmatprep.subr.bf16.mxu0 0
    %2334 = vmatpush1.bf16.msra.mxu0 %v2321
    %2335 = vmatprep.subr.bf16.mxu0 0
    %2336 = vmatpush1.bf16.msra.mxu0 %v2322
    %2337 = vmatprep.subr.bf16.mxu0 0
    %2338 = vmatpush1.bf16.msra.mxu0 %v2323
    %2339 = vmatprep.subr.bf16.mxu0 0
    %2340 = vmatpush1.bf16.msra.mxu0 %v2324
    %2341 = vmatprep.subr.bf16.mxu0 0
    %2342 = vmatpush1.bf16.msra.mxu0 %v2325
    %2343 = vmatprep.subr.bf16.mxu0 0
    %2344 = vmatpush1.bf16.msra.mxu0 %v2326
    %2345 = vmatprep.subr.bf16.mxu0 0
    %2346 = vmatpush1.bf16.msra.mxu0 %v2327
    %2347 = vmatprep.subr.bf16.mxu0 0
    %2348 = vmatpush1.bf16.msra.mxu0 %v2328
    %2349 = vmatprep.subr.bf16.mxu0 0
    %2350 = vmatpush1.bf16.msra.mxu0 0
    %2351 = vmatprep.subr.bf16.mxu0 0
    %2352 = vmatpush1.bf16.msra.mxu0 0
    %2353 = vmatprep.subr.bf16.mxu0 0
    %2354 = vmatpush1.bf16.msra.mxu0 0
    %2355 = vmatprep.subr.bf16.mxu0 0
    %2356 = vmatpush1.bf16.msra.mxu0 0
    %2357 = vmatprep.subr.bf16.mxu0 0
    %2358 = vmatpush1.bf16.msra.mxu0 0
    %2359 = vmatprep.subr.bf16.mxu0 0
    %2360 = vmatpush1.bf16.msra.mxu0 0
    %2361 = vmatprep.subr.bf16.mxu0 0
    %2362 = vmatpush1.bf16.msra.mxu0 0
    %2363 = vmatprep.subr.bf16.mxu0 0
    %2364 = vmatpush1.bf16.msra.mxu0 0
    %2365 = vmatprep.mubr.bf16.mxu0 0
    %2366 = vmatmul.mubr.bf16.gmra.mrb[0].mxu0 %v640
    %v2367 = vpop.f32.mrb[0].mxu0
    %v2368 = vadd.f32 %v2332, %v2367
    %v2369 = vpop.f32.mrb[0].mxu0
    %v2370 = vpop.f32.mrb[0].mxu0
    %v2371 = vadd.f32 %v2332, %v2370
    %v2372 = vpop.f32.mrb[0].mxu0
    %2373 = vmatprep.mubr.bf16.mxu0 0
    %2374 = vmatmul.mubr.bf16.gmra.mrb[0].mxu0 %v641
    %v2375 = vpop.f32.mrb[0].mxu0
    %v2376 = vadd.f32 %v2332, %v2375
    %v2377 = vpop.f32.mrb[0].mxu0
    %v2378 = vpop.f32.mrb[0].mxu0
    %v2379 = vadd.f32 %v2332, %v2378
    %v2380 = vpop.f32.mrb[0].mxu0
    %2381 = vmatprep.mubr.bf16.mxu0 0
    %2382 = vmatmul.mubr.bf16.gmra.mrb[0].mxu0 %v642
    %v2383 = vpop.f32.mrb[0].mxu0
    %v2384 = vadd.f32 %v2332, %v2383
    %v2385 = vpop.f32.mrb[0].mxu0
    %v2386 = vpop.f32.mrb[0].mxu0
    %v2387 = vadd.f32 %v2332, %v2386
    %v2388 = vpop.f32.mrb[0].mxu0
    %2389 = vmatprep.mubr.bf16.mxu0 0
    %2390 = vmatmul.mubr.bf16.gmra.mrb[0].mxu0 %v643
    %v2391 = vpop.f32.mrb[0].mxu0
    %v2392 = vadd.f32 %v2332, %v2391
    %v2393 = vpop.f32.mrb[0].mxu0
    %v2394 = vpop.f32.mrb[0].mxu0
    %v2395 = vadd.f32 %v2332, %v2394
    %v2396 = vpop.f32.mrb[0].mxu0
    %2397 = vmatprep.mubr.bf16.mxu0 0
    %2398 = vmatmul.mubr.bf16.gmra.mrb[0].mxu0 %v644
    %v2399 = vpop.f32.mrb[0].mxu0
    %v2400 = vadd.f32 %v2332, %v2399
    %v2401 = vpop.f32.mrb[0].mxu0
    %v2402 = vpop.f32.mrb[0].mxu0
    %v2403 = vadd.f32 %v2332, %v2402
    %v2404 = vpop.f32.mrb[0].mxu0
    %2405 = vmatprep.mubr.bf16.mxu0 0
    %2406 = vmatmul.mubr.bf16.gmra.mrb[0].mxu0 %v645
    %v2407 = vpop.f32.mrb[0].mxu0
    %v2408 = vadd.f32 %v2332, %v2407
    %v2409 = vpop.f32.mrb[0].mxu0
    %v2410 = vpop.f32.mrb[0].mxu0
    %v2411 = vadd.f32 %v2332, %v2410
    %v2412 = vpop.f32.mrb[0].mxu0
    %2413 = vmatprep.mubr.bf16.mxu0 0
    %2414 = vmatmul.mubr.bf16.gmra.mrb[0].mxu0 %v646
    %v2415 = vpop.f32.mrb[0].mxu0
    %v2416 = vadd.f32 %v2332, %v2415
    %v2417 = vpop.f32.mrb[0].mxu0
    %v2418 = vpop.f32.mrb[0].mxu0
    %v2419 = vadd.f32 %v2332, %v2418
    %v2420 = vpop.f32.mrb[0].mxu0
    %2421 = vmatprep.mubr.bf16.mxu0 0
    %2422 = vmatmul.mubr.bf16.gmra.mrb[0].mxu0 %v647
    %v2423 = vpop.f32.mrb[0].mxu0
    %v2424 = vadd.f32 %v2332, %v2423
    %v2425 = vpop.f32.mrb[0].mxu0
    %v2426 = vpop.f32.mrb[0].mxu0
    %v2427 = vadd.f32 %v2332, %v2426
    %v2428 = vpop.f32.mrb[0].mxu0
    %2429 = vdwg.mxu0
    %v2430 = vxor.u32 %v2368, 2147483648
    %v2431 = vxor.u32 %v2371, 2147483648
    %v2432 = vxor.u32 %v2376, 2147483648
    %v2433 = vxor.u32 %v2379, 2147483648
    %v2434 = vxor.u32 %v2384, 2147483648
    %v2435 = vxor.u32 %v2387, 2147483648
    %v2436 = vxor.u32 %v2392, 2147483648
    %v2437 = vxor.u32 %v2395, 2147483648
    %v2438 = vxor.u32 %v2400, 2147483648
    %v2439 = vxor.u32 %v2403, 2147483648
    %v2440 = vxor.u32 %v2408, 2147483648
    %v2441 = vxor.u32 %v2411, 2147483648
    %v2442 = vxor.u32 %v2416, 2147483648
    %v2443 = vxor.u32 %v2419, 2147483648
    %v2444 = vxor.u32 %v2424, 2147483648
    %v2445 = vxor.u32 %v2427, 2147483648
    %v2446 = vmul.f32 %v2430, 1.442695
    %v2447 = vpow.pop %v2446
    %v2448 = vmul.f32 %v2431, 1.442695
    %v2449 = vpow.pop %v2448
    %v2450 = vmul.f32 %v2432, 1.442695
    %v2451 = vpow.pop %v2450
    %v2452 = vmul.f32 %v2433, 1.442695
    %v2453 = vpow.pop %v2452
    %v2454 = vmul.f32 %v2434, 1.442695
    %v2455 = vpow.pop %v2454
    %v2456 = vmul.f32 %v2435, 1.442695
    %v2457 = vpow.pop %v2456
    %v2458 = vmul.f32 %v2436, 1.442695
    %v2459 = vpow.pop %v2458
    %v2460 = vmul.f32 %v2437, 1.442695
    %v2461 = vpow.pop %v2460
    %v2462 = vmul.f32 %v2438, 1.442695
    %v2463 = vpow.pop %v2462
    %v2464 = vmul.f32 %v2439, 1.442695
    %v2465 = vpow.pop %v2464
    %v2466 = vmul.f32 %v2440, 1.442695
    %v2467 = vpow.pop %v2466
    %v2468 = vmul.f32 %v2441, 1.442695
    %v2469 = vpow.pop %v2468
    %v2470 = vmul.f32 %v2442, 1.442695
    %v2471 = vpow.pop %v2470
    %v2472 = vmul.f32 %v2443, 1.442695
    %v2473 = vpow.pop %v2472
    %v2474 = vmul.f32 %v2444, 1.442695
    %v2475 = vpow.pop %v2474
    %v2476 = vmul.f32 %v2445, 1.442695
    %v2477 = vpow.pop %v2476
    %v2478 = vadd.f32 %v2447, 1.0
    %v2479 = vadd.f32 %v2449, 1.0
    %v2480 = vadd.f32 %v2451, 1.0
    %v2481 = vadd.f32 %v2453, 1.0
    %v2482 = vadd.f32 %v2455, 1.0
    %v2483 = vadd.f32 %v2457, 1.0
    %v2484 = vadd.f32 %v2459, 1.0
    %v2485 = vadd.f32 %v2461, 1.0
    %v2486 = vadd.f32 %v2463, 1.0
    %v2487 = vadd.f32 %v2465, 1.0
    %v2488 = vadd.f32 %v2467, 1.0
    %v2489 = vadd.f32 %v2469, 1.0
    %v2490 = vadd.f32 %v2471, 1.0
    %v2491 = vadd.f32 %v2473, 1.0
    %v2492 = vadd.f32 %v2475, 1.0
    %v2493 = vadd.f32 %v2477, 1.0
    %v2494 = vrcp.pop %v2478
    %v2495 = vmul.f32 1.0, %v2494
    %v2496 = vrcp.pop %v2479
    %v2497 = vmul.f32 1.0, %v2496
    %v2498 = vrcp.pop %v2480
    %v2499 = vmul.f32 1.0, %v2498
    %v2500 = vrcp.pop %v2481
    %v2501 = vmul.f32 1.0, %v2500
    %v2502 = vrcp.pop %v2482
    %v2503 = vmul.f32 1.0, %v2502
    %v2504 = vrcp.pop %v2483
    %v2505 = vmul.f32 1.0, %v2504
    %v2506 = vrcp.pop %v2484
    %v2507 = vmul.f32 1.0, %v2506
    %v2508 = vrcp.pop %v2485
    %v2509 = vmul.f32 1.0, %v2508
    %v2510 = vrcp.pop %v2486
    %v2511 = vmul.f32 1.0, %v2510
    %v2512 = vrcp.pop %v2487
    %v2513 = vmul.f32 1.0, %v2512
    %v2514 = vrcp.pop %v2488
    %v2515 = vmul.f32 1.0, %v2514
    %v2516 = vrcp.pop %v2489
    %v2517 = vmul.f32 1.0, %v2516
    %v2518 = vrcp.pop %v2490
    %v2519 = vmul.f32 1.0, %v2518
    %v2520 = vrcp.pop %v2491
    %v2521 = vmul.f32 1.0, %v2520
    %v2522 = vrcp.pop %v2492
    %v2523 = vmul.f32 1.0, %v2522
    %v2524 = vrcp.pop %v2493
    %v2525 = vmul.f32 1.0, %v2524
    %v2526 = vmul.f32 %v2368, %v2495
    %v2527 = vmul.f32 %v2371, %v2497
    %v2528 = vmul.f32 %v2376, %v2499
    %v2529 = vmul.f32 %v2379, %v2501
    %v2530 = vmul.f32 %v2384, %v2503
    %v2531 = vmul.f32 %v2387, %v2505
    %v2532 = vmul.f32 %v2392, %v2507
    %v2533 = vmul.f32 %v2395, %v2509
    %v2534 = vmul.f32 %v2400, %v2511
    %v2535 = vmul.f32 %v2403, %v2513
    %v2536 = vmul.f32 %v2408, %v2515
    %v2537 = vmul.f32 %v2411, %v2517
    %v2538 = vmul.f32 %v2416, %v2519
    %v2539 = vmul.f32 %v2419, %v2521
    %v2540 = vmul.f32 %v2424, %v2523
    %v2541 = vmul.f32 %v2427, %v2525
    %v2558 = vunpack.c.l.b16 %v2135
    %v2559 = vunpack.c.l.b16 %v2136
    %v2560 = vunpack.c.l.b16 %v2137
    %v2561 = vunpack.c.l.b16 %v2138
    %v2562 = vunpack.c.l.b16 %v2139
    %v2563 = vunpack.c.l.b16 %v2140
    %v2564 = vunpack.c.l.b16 %v2141
    %v2565 = vunpack.c.l.b16 %v2142
    %v2566 = vunpack.c.l.b16 %v2143
    %v2567 = vunpack.c.l.b16 %v2144
    %v2568 = vunpack.c.l.b16 %v2145
    %v2569 = vunpack.c.l.b16 %v2146
    %v2570 = vunpack.c.l.b16 %v2147
    %v2571 = vunpack.c.l.b16 %v2148
    %v2572 = vunpack.c.l.b16 %v2149
    %v2573 = vunpack.c.l.b16 %v2150
    %v2574 = vpack.c.b16 %v2559, %v2558
    %v2575 = vpack.c.b16 %v2561, %v2560
    %v2576 = vpack.c.b16 %v2563, %v2562
    %v2577 = vpack.c.b16 %v2565, %v2564
    %v2578 = vpack.c.b16 %v2567, %v2566
    %v2579 = vpack.c.b16 %v2569, %v2568
    %v2580 = vpack.c.b16 %v2571, %v2570
    %v2581 = vpack.c.b16 %v2573, %v2572
    %v2591 = vrot.slane %v91, 3
    %2593 = vmatprep.subr.bf16.mxu0 0
    %2594 = vmatpush1.bf16.msra.mxu0 %v2574
    %2595 = vmatprep.subr.bf16.mxu0 0
    %2596 = vmatpush1.bf16.msra.mxu0 %v2575
    %2597 = vmatprep.subr.bf16.mxu0 0
    %2598 = vmatpush1.bf16.msra.mxu0 %v2576
    %2599 = vmatprep.subr.bf16.mxu0 0
    %2600 = vmatpush1.bf16.msra.mxu0 %v2577
    %2601 = vmatprep.subr.bf16.mxu0 0
    %2602 = vmatpush1.bf16.msra.mxu0 %v2578
    %2603 = vmatprep.subr.bf16.mxu0 0
    %2604 = vmatpush1.bf16.msra.mxu0 %v2579
    %2605 = vmatprep.subr.bf16.mxu0 0
    %2606 = vmatpush1.bf16.msra.mxu0 %v2580
    %2607 = vmatprep.subr.bf16.mxu0 0
    %2608 = vmatpush1.bf16.msra.mxu0 %v2581
    %2609 = vmatprep.subr.bf16.mxu0 0
    %2610 = vmatpush1.bf16.msra.mxu0 0
    %2611 = vmatprep.subr.bf16.mxu0 0
    %2612 = vmatpush1.bf16.msra.mxu0 0
    %2613 = vmatprep.subr.bf16.mxu0 0
    %2614 = vmatpush1.bf16.msra.mxu0 0
    %2615 = vmatprep.subr.bf16.mxu0 0
    %2616 = vmatpush1.bf16.msra.mxu0 0
    %2617 = vmatprep.subr.bf16.mxu0 0
    %2618 = vmatpush1.bf16.msra.mxu0 0
    %2619 = vmatprep.subr.bf16.mxu0 0
    %2620 = vmatpush1.bf16.msra.mxu0 0
    %2621 = vmatprep.subr.bf16.mxu0 0
    %2622 = vmatpush1.bf16.msra.mxu0 0
    %2623 = vmatprep.subr.bf16.mxu0 0
    %2624 = vmatpush1.bf16.msra.mxu0 0
    %2625 = vmatprep.mubr.bf16.mxu0 0
    %2626 = vmatmul.mubr.bf16.gmra.mrb[0].mxu0 %v1022
    %v2627 = vpop.f32.mrb[0].mxu0
    %v2628 = vadd.f32 %v2591, %v2627
    %v2629 = vpop.f32.mrb[0].mxu0
    %v2630 = vpop.f32.mrb[0].mxu0
    %v2631 = vpop.f32.mrb[0].mxu0
    %2632 = vdwg.mxu0
    %v2633 = vxor.u32 %v2628, 2147483648
    %v2634 = vmul.f32 %v2633, 1.442695
    %v2635 = vpow.pop %v2634
    %v2636 = vadd.f32 %v2635, 1.0
    %v2637 = vrcp.pop %v2636
    %v2638 = vmul.f32 1.0, %v2637
    %v2639 = vmul.f32 %v2628, %v2638
    %v2640 = vlaneseq
    %v2641 = vshrl.u32 %v2640, 7
    %v2642 = vsub.s32 0, %v2641
    %v2643 = vrot.slane %v2639, %v2642
    %v2644 = vadd.f32 %v2526, %v2643
    %v2645 = vadd.f32 %v2527, %v2643
    %v2646 = vadd.f32 %v2528, %v2643
    %v2647 = vadd.f32 %v2529, %v2643
    %v2648 = vadd.f32 %v2530, %v2643
    %v2649 = vadd.f32 %v2531, %v2643
    %v2650 = vadd.f32 %v2532, %v2643
    %v2651 = vadd.f32 %v2533, %v2643
    %v2652 = vadd.f32 %v2534, %v2643
    %v2653 = vadd.f32 %v2535, %v2643
    %v2654 = vadd.f32 %v2536, %v2643
    %v2655 = vadd.f32 %v2537, %v2643
    %v2656 = vadd.f32 %v2538, %v2643
    %v2657 = vadd.f32 %v2539, %v2643
    %v2658 = vadd.f32 %v2540, %v2643
    %v2659 = vadd.f32 %v2541, %v2643
    %v2660 = vpack.c.bf16 %v2645, %v2644
    %v2661 = vpack.c.bf16 %v2647, %v2646
    %v2662 = vpack.c.bf16 %v2649, %v2648
    %v2663 = vpack.c.bf16 %v2651, %v2650
    %v2664 = vpack.c.bf16 %v2653, %v2652
    %v2665 = vpack.c.bf16 %v2655, %v2654
    %v2666 = vpack.c.bf16 %v2657, %v2656
    %v2667 = vpack.c.bf16 %v2659, %v2658
    %v2668 = vlaneseq
    %v2669 = vshrl.u32 %v2668, 7
    %v2670 = vsub.s32 4, %v2669
    %v2671 = vrot.slane %v91, %v2670
    %v2688 = vunpack.c.l.b16 %v2152
    %v2689 = vunpack.c.l.b16 %v2153
    %v2690 = vunpack.c.l.b16 %v2154
    %v2691 = vunpack.c.l.b16 %v2155
    %v2692 = vunpack.c.l.b16 %v2156
    %v2693 = vunpack.c.l.b16 %v2157
    %v2694 = vunpack.c.l.b16 %v2158
    %v2695 = vunpack.c.l.b16 %v2159
    %v2696 = vunpack.c.l.b16 %v2160
    %v2697 = vunpack.c.l.b16 %v2161
    %v2698 = vunpack.c.l.b16 %v2162
    %v2699 = vunpack.c.l.b16 %v2163
    %v2700 = vunpack.c.l.b16 %v2164
    %v2701 = vunpack.c.l.b16 %v2165
    %v2702 = vunpack.c.l.b16 %v2166
    %v2703 = vunpack.c.l.b16 %v2167
    %v2704 = vpack.c.b16 %v2689, %v2688
    %v2705 = vpack.c.b16 %v2691, %v2690
    %v2706 = vpack.c.b16 %v2693, %v2692
    %v2707 = vpack.c.b16 %v2695, %v2694
    %v2708 = vpack.c.b16 %v2697, %v2696
    %v2709 = vpack.c.b16 %v2699, %v2698
    %v2710 = vpack.c.b16 %v2701, %v2700
    %v2711 = vpack.c.b16 %v2703, %v2702
    %2720 = vmatprep.subr.bf16.mxu0 0
    %2721 = vmatpush1.bf16.msra.mxu0 %v2704
    %2722 = vmatprep.subr.bf16.mxu0 0
    %2723 = vmatpush1.bf16.msra.mxu0 %v2705
    %2724 = vmatprep.subr.bf16.mxu0 0
    %2725 = vmatpush1.bf16.msra.mxu0 %v2706
    %2726 = vmatprep.subr.bf16.mxu0 0
    %2727 = vmatpush1.bf16.msra.mxu0 %v2707
    %2728 = vmatprep.subr.bf16.mxu0 0
    %2729 = vmatpush1.bf16.msra.mxu0 %v2708
    %2730 = vmatprep.subr.bf16.mxu0 0
    %2731 = vmatpush1.bf16.msra.mxu0 %v2709
    %2732 = vmatprep.subr.bf16.mxu0 0
    %2733 = vmatpush1.bf16.msra.mxu0 %v2710
    %2734 = vmatprep.subr.bf16.mxu0 0
    %2735 = vmatpush1.bf16.msra.mxu0 %v2711
    %2736 = vmatprep.subr.bf16.mxu0 0
    %2737 = vmatpush1.bf16.msra.mxu0 0
    %2738 = vmatprep.subr.bf16.mxu0 0
    %2739 = vmatpush1.bf16.msra.mxu0 0
    %2740 = vmatprep.subr.bf16.mxu0 0
    %2741 = vmatpush1.bf16.msra.mxu0 0
    %2742 = vmatprep.subr.bf16.mxu0 0
    %2743 = vmatpush1.bf16.msra.mxu0 0
    %2744 = vmatprep.subr.bf16.mxu0 0
    %2745 = vmatpush1.bf16.msra.mxu0 0
    %2746 = vmatprep.subr.bf16.mxu0 0
    %2747 = vmatpush1.bf16.msra.mxu0 0
    %2748 = vmatprep.subr.bf16.mxu0 0
    %2749 = vmatpush1.bf16.msra.mxu0 0
    %2750 = vmatprep.subr.bf16.mxu0 0
    %2751 = vmatpush1.bf16.msra.mxu0 0
    %2752 = vmatprep.mubr.bf16.mxu0 0
    %2753 = vmatmul.mubr.bf16.gmra.mrb[0].mxu0 %v2660
    %v2754 = vpop.f32.mrb[0].mxu0
    %v2755 = vadd.f32 %v2671, %v2754
    %v2756 = vpop.f32.mrb[0].mxu0
    %v2757 = vpop.f32.mrb[0].mxu0
    %v2758 = vadd.f32 %v2671, %v2757
    %v2759 = vpop.f32.mrb[0].mxu0
    %2760 = vmatprep.mubr.bf16.mxu0 0
    %2761 = vmatmul.mubr.bf16.gmra.mrb[0].mxu0 %v2661
    %v2762 = vpop.f32.mrb[0].mxu0
    %v2763 = vadd.f32 %v2671, %v2762
    %v2764 = vpop.f32.mrb[0].mxu0
    %v2765 = vpop.f32.mrb[0].mxu0
    %v2766 = vadd.f32 %v2671, %v2765
    %v2767 = vpop.f32.mrb[0].mxu0
    %2768 = vmatprep.mubr.bf16.mxu0 0
    %2769 = vmatmul.mubr.bf16.gmra.mrb[0].mxu0 %v2662
    %v2770 = vpop.f32.mrb[0].mxu0
    %v2771 = vadd.f32 %v2671, %v2770
    %v2772 = vpop.f32.mrb[0].mxu0
    %v2773 = vpop.f32.mrb[0].mxu0
    %v2774 = vadd.f32 %v2671, %v2773
    %v2775 = vpop.f32.mrb[0].mxu0
    %2776 = vmatprep.mubr.bf16.mxu0 0
    %2777 = vmatmul.mubr.bf16.gmra.mrb[0].mxu0 %v2663
    %v2778 = vpop.f32.mrb[0].mxu0
    %v2779 = vadd.f32 %v2671, %v2778
    %v2780 = vpop.f32.mrb[0].mxu0
    %v2781 = vpop.f32.mrb[0].mxu0
    %v2782 = vadd.f32 %v2671, %v2781
    %v2783 = vpop.f32.mrb[0].mxu0
    %2784 = vmatprep.mubr.bf16.mxu0 0
    %2785 = vmatmul.mubr.bf16.gmra.mrb[0].mxu0 %v2664
    %v2786 = vpop.f32.mrb[0].mxu0
    %v2787 = vadd.f32 %v2671, %v2786
    %v2788 = vpop.f32.mrb[0].mxu0
    %v2789 = vpop.f32.mrb[0].mxu0
    %v2790 = vadd.f32 %v2671, %v2789
    %v2791 = vpop.f32.mrb[0].mxu0
    %2792 = vmatprep.mubr.bf16.mxu0 0
    %2793 = vmatmul.mubr.bf16.gmra.mrb[0].mxu0 %v2665
    %v2794 = vpop.f32.mrb[0].mxu0
    %v2795 = vadd.f32 %v2671, %v2794
    %v2796 = vpop.f32.mrb[0].mxu0
    %v2797 = vpop.f32.mrb[0].mxu0
    %v2798 = vadd.f32 %v2671, %v2797
    %v2799 = vpop.f32.mrb[0].mxu0
    %2800 = vmatprep.mubr.bf16.mxu0 0
    %2801 = vmatmul.mubr.bf16.gmra.mrb[0].mxu0 %v2666
    %v2802 = vpop.f32.mrb[0].mxu0
    %v2803 = vadd.f32 %v2671, %v2802
    %v2804 = vpop.f32.mrb[0].mxu0
    %v2805 = vpop.f32.mrb[0].mxu0
    %v2806 = vadd.f32 %v2671, %v2805
    %v2807 = vpop.f32.mrb[0].mxu0
    %2808 = vmatprep.mubr.bf16.mxu0 0
    %2809 = vmatmul.mubr.bf16.gmra.mrb[0].mxu0 %v2667
    %v2810 = vpop.f32.mrb[0].mxu0
    %v2811 = vadd.f32 %v2671, %v2810
    %v2812 = vpop.f32.mrb[0].mxu0
    %v2813 = vpop.f32.mrb[0].mxu0
    %v2814 = vadd.f32 %v2671, %v2813
    %v2815 = vpop.f32.mrb[0].mxu0
    %2816 = vdwg.mxu0
    %v2817 = vxor.u32 %v2755, 2147483648
    %v2818 = vxor.u32 %v2758, 2147483648
    %v2819 = vxor.u32 %v2763, 2147483648
    %v2820 = vxor.u32 %v2766, 2147483648
    %v2821 = vxor.u32 %v2771, 2147483648
    %v2822 = vxor.u32 %v2774, 2147483648
    %v2823 = vxor.u32 %v2779, 2147483648
    %v2824 = vxor.u32 %v2782, 2147483648
    %v2825 = vxor.u32 %v2787, 2147483648
    %v2826 = vxor.u32 %v2790, 2147483648
    %v2827 = vxor.u32 %v2795, 2147483648
    %v2828 = vxor.u32 %v2798, 2147483648
    %v2829 = vxor.u32 %v2803, 2147483648
    %v2830 = vxor.u32 %v2806, 2147483648
    %v2831 = vxor.u32 %v2811, 2147483648
    %v2832 = vxor.u32 %v2814, 2147483648
    %v2833 = vmul.f32 %v2817, 1.442695
    %v2834 = vpow.pop %v2833
    %v2835 = vmul.f32 %v2818, 1.442695
    %v2836 = vpow.pop %v2835
    %v2837 = vmul.f32 %v2819, 1.442695
    %v2838 = vpow.pop %v2837
    %v2839 = vmul.f32 %v2820, 1.442695
    %v2840 = vpow.pop %v2839
    %v2841 = vmul.f32 %v2821, 1.442695
    %v2842 = vpow.pop %v2841
    %v2843 = vmul.f32 %v2822, 1.442695
    %v2844 = vpow.pop %v2843
    %v2845 = vmul.f32 %v2823, 1.442695
    %v2846 = vpow.pop %v2845
    %v2847 = vmul.f32 %v2824, 1.442695
    %v2848 = vpow.pop %v2847
    %v2849 = vmul.f32 %v2825, 1.442695
    %v2850 = vpow.pop %v2849
    %v2851 = vmul.f32 %v2826, 1.442695
    %v2852 = vpow.pop %v2851
    %v2853 = vmul.f32 %v2827, 1.442695
    %v2854 = vpow.pop %v2853
    %v2855 = vmul.f32 %v2828, 1.442695
    %v2856 = vpow.pop %v2855
    %v2857 = vmul.f32 %v2829, 1.442695
    %v2858 = vpow.pop %v2857
    %v2859 = vmul.f32 %v2830, 1.442695
    %v2860 = vpow.pop %v2859
    %v2861 = vmul.f32 %v2831, 1.442695
    %v2862 = vpow.pop %v2861
    %v2863 = vmul.f32 %v2832, 1.442695
    %v2864 = vpow.pop %v2863
    %v2865 = vadd.f32 %v2834, 1.0
    %v2866 = vadd.f32 %v2836, 1.0
    %v2867 = vadd.f32 %v2838, 1.0
    %v2868 = vadd.f32 %v2840, 1.0
    %v2869 = vadd.f32 %v2842, 1.0
    %v2870 = vadd.f32 %v2844, 1.0
    %v2871 = vadd.f32 %v2846, 1.0
    %v2872 = vadd.f32 %v2848, 1.0
    %v2873 = vadd.f32 %v2850, 1.0
    %v2874 = vadd.f32 %v2852, 1.0
    %v2875 = vadd.f32 %v2854, 1.0
    %v2876 = vadd.f32 %v2856, 1.0
    %v2877 = vadd.f32 %v2858, 1.0
    %v2878 = vadd.f32 %v2860, 1.0
    %v2879 = vadd.f32 %v2862, 1.0
    %v2880 = vadd.f32 %v2864, 1.0
    %v2881 = vrcp.pop %v2865
    %v2882 = vmul.f32 1.0, %v2881
    %v2883 = vrcp.pop %v2866
    %v2884 = vmul.f32 1.0, %v2883
    %v2885 = vrcp.pop %v2867
    %v2886 = vmul.f32 1.0, %v2885
    %v2887 = vrcp.pop %v2868
    %v2888 = vmul.f32 1.0, %v2887
    %v2889 = vrcp.pop %v2869
    %v2890 = vmul.f32 1.0, %v2889
    %v2891 = vrcp.pop %v2870
    %v2892 = vmul.f32 1.0, %v2891
    %v2893 = vrcp.pop %v2871
    %v2894 = vmul.f32 1.0, %v2893
    %v2895 = vrcp.pop %v2872
    %v2896 = vmul.f32 1.0, %v2895
    %v2897 = vrcp.pop %v2873
    %v2898 = vmul.f32 1.0, %v2897
    %v2899 = vrcp.pop %v2874
    %v2900 = vmul.f32 1.0, %v2899
    %v2901 = vrcp.pop %v2875
    %v2902 = vmul.f32 1.0, %v2901
    %v2903 = vrcp.pop %v2876
    %v2904 = vmul.f32 1.0, %v2903
    %v2905 = vrcp.pop %v2877
    %v2906 = vmul.f32 1.0, %v2905
    %v2907 = vrcp.pop %v2878
    %v2908 = vmul.f32 1.0, %v2907
    %v2909 = vrcp.pop %v2879
    %v2910 = vmul.f32 1.0, %v2909
    %v2911 = vrcp.pop %v2880
    %v2912 = vmul.f32 1.0, %v2911
    %v2913 = vmul.f32 %v2755, %v2882
    %v2914 = vmul.f32 %v2758, %v2884
    %v2915 = vmul.f32 %v2763, %v2886
    %v2916 = vmul.f32 %v2766, %v2888
    %v2917 = vmul.f32 %v2771, %v2890
    %v2918 = vmul.f32 %v2774, %v2892
    %v2919 = vmul.f32 %v2779, %v2894
    %v2920 = vmul.f32 %v2782, %v2896
    %v2921 = vmul.f32 %v2787, %v2898
    %v2922 = vmul.f32 %v2790, %v2900
    %v2923 = vmul.f32 %v2795, %v2902
    %v2924 = vmul.f32 %v2798, %v2904
    %v2925 = vmul.f32 %v2803, %v2906
    %v2926 = vmul.f32 %v2806, %v2908
    %v2927 = vmul.f32 %v2811, %v2910
    %v2928 = vmul.f32 %v2814, %v2912
    %2929 = vadd.xlane.f32.xlu0 %v2913
    %v2930 = vpop.xlane.xlu0 %2929
    %2931 = vadd.xlane.f32.xlu0 %v2914
    %v2932 = vpop.xlane.xlu0 %2931
    %2933 = vadd.xlane.f32.xlu0 %v2915
    %v2934 = vpop.xlane.xlu0 %2933
    %2935 = vadd.xlane.f32.xlu0 %v2916
    %v2936 = vpop.xlane.xlu0 %2935
    %2937 = vadd.xlane.f32.xlu0 %v2917
    %v2938 = vpop.xlane.xlu0 %2937
    %2939 = vadd.xlane.f32.xlu0 %v2918
    %v2940 = vpop.xlane.xlu0 %2939
    %2941 = vadd.xlane.f32.xlu0 %v2919
    %v2942 = vpop.xlane.xlu0 %2941
    %2943 = vadd.xlane.f32.xlu0 %v2920
    %v2944 = vpop.xlane.xlu0 %2943
    %2945 = vadd.xlane.f32.xlu0 %v2921
    %v2946 = vpop.xlane.xlu0 %2945
    %2947 = vadd.xlane.f32.xlu0 %v2922
    %v2948 = vpop.xlane.xlu0 %2947
    %2949 = vadd.xlane.f32.xlu0 %v2923
    %v2950 = vpop.xlane.xlu0 %2949
    %2951 = vadd.xlane.f32.xlu0 %v2924
    %v2952 = vpop.xlane.xlu0 %2951
    %2953 = vadd.xlane.f32.xlu0 %v2925
    %v2954 = vpop.xlane.xlu0 %2953
    %2955 = vadd.xlane.f32.xlu0 %v2926
    %v2956 = vpop.xlane.xlu0 %2955
    %2957 = vadd.xlane.f32.xlu0 %v2927
    %v2958 = vpop.xlane.xlu0 %2957
    %2959 = vadd.xlane.f32.xlu0 %v2928
    %v2960 = vpop.xlane.xlu0 %2959
    %v2961 = vmul.f32 %v2930, 0.03125
    %v2962 = vmul.f32 %v2932, 0.03125
    %v2963 = vmul.f32 %v2934, 0.03125
    %v2964 = vmul.f32 %v2936, 0.03125
    %v2965 = vmul.f32 %v2938, 0.03125
    %v2966 = vmul.f32 %v2940, 0.03125
    %v2967 = vmul.f32 %v2942, 0.03125
    %v2968 = vmul.f32 %v2944, 0.03125
    %v2969 = vmul.f32 %v2946, 0.03125
    %v2970 = vmul.f32 %v2948, 0.03125
    %v2971 = vmul.f32 %v2950, 0.03125
    %v2972 = vmul.f32 %v2952, 0.03125
    %v2973 = vmul.f32 %v2954, 0.03125
    %v2974 = vmul.f32 %v2956, 0.03125
    %v2975 = vmul.f32 %v2958, 0.03125
    %v2976 = vmul.f32 %v2960, 0.03125
    %v2977 = vmul.f32 %v2913, %v2913
    %v2978 = vmul.f32 %v2914, %v2914
    %v2979 = vmul.f32 %v2915, %v2915
    %v2980 = vmul.f32 %v2916, %v2916
    %v2981 = vmul.f32 %v2917, %v2917
    %v2982 = vmul.f32 %v2918, %v2918
    %v2983 = vmul.f32 %v2919, %v2919
    %v2984 = vmul.f32 %v2920, %v2920
    %v2985 = vmul.f32 %v2921, %v2921
    %v2986 = vmul.f32 %v2922, %v2922
    %v2987 = vmul.f32 %v2923, %v2923
    %v2988 = vmul.f32 %v2924, %v2924
    %v2989 = vmul.f32 %v2925, %v2925
    %v2990 = vmul.f32 %v2926, %v2926
    %v2991 = vmul.f32 %v2927, %v2927
    %v2992 = vmul.f32 %v2928, %v2928
    %2993 = vadd.xlane.f32.xlu0 %v2977
    %v2994 = vpop.xlane.xlu0 %2993
    %2995 = vadd.xlane.f32.xlu0 %v2978
    %v2996 = vpop.xlane.xlu0 %2995
    %2997 = vadd.xlane.f32.xlu0 %v2979
    %v2998 = vpop.xlane.xlu0 %2997
    %2999 = vadd.xlane.f32.xlu0 %v2980
    %v3000 = vpop.xlane.xlu0 %2999
    %3001 = vadd.xlane.f32.xlu0 %v2981
    %v3002 = vpop.xlane.xlu0 %3001
    %3003 = vadd.xlane.f32.xlu0 %v2982
    %v3004 = vpop.xlane.xlu0 %3003
    %3005 = vadd.xlane.f32.xlu0 %v2983
    %v3006 = vpop.xlane.xlu0 %3005
    %3007 = vadd.xlane.f32.xlu0 %v2984
    %v3008 = vpop.xlane.xlu0 %3007
    %3009 = vadd.xlane.f32.xlu0 %v2985
    %v3010 = vpop.xlane.xlu0 %3009
    %3011 = vadd.xlane.f32.xlu0 %v2986
    %v3012 = vpop.xlane.xlu0 %3011
    %3013 = vadd.xlane.f32.xlu0 %v2987
    %v3014 = vpop.xlane.xlu0 %3013
    %3015 = vadd.xlane.f32.xlu0 %v2988
    %v3016 = vpop.xlane.xlu0 %3015
    %3017 = vadd.xlane.f32.xlu0 %v2989
    %v3018 = vpop.xlane.xlu0 %3017
    %3019 = vadd.xlane.f32.xlu0 %v2990
    %v3020 = vpop.xlane.xlu0 %3019
    %3021 = vadd.xlane.f32.xlu0 %v2991
    %v3022 = vpop.xlane.xlu0 %3021
    %3023 = vadd.xlane.f32.xlu0 %v2992
    %v3024 = vpop.xlane.xlu0 %3023
    %v3025 = vmul.f32 %v2994, 0.03125
    %v3026 = vmul.f32 %v2996, 0.03125
    %v3027 = vmul.f32 %v2998, 0.03125
    %v3028 = vmul.f32 %v3000, 0.03125
    %v3029 = vmul.f32 %v3002, 0.03125
    %v3030 = vmul.f32 %v3004, 0.03125
    %v3031 = vmul.f32 %v3006, 0.03125
    %v3032 = vmul.f32 %v3008, 0.03125
    %v3033 = vmul.f32 %v3010, 0.03125
    %v3034 = vmul.f32 %v3012, 0.03125
    %v3035 = vmul.f32 %v3014, 0.03125
    %v3036 = vmul.f32 %v3016, 0.03125
    %v3037 = vmul.f32 %v3018, 0.03125
    %v3038 = vmul.f32 %v3020, 0.03125
    %v3039 = vmul.f32 %v3022, 0.03125
    %v3040 = vmul.f32 %v3024, 0.03125
    %v3041 = vmul.f32 %v2961, %v2961
    %v3042 = vmul.f32 %v2962, %v2962
    %v3043 = vmul.f32 %v2963, %v2963
    %v3044 = vmul.f32 %v2964, %v2964
    %v3045 = vmul.f32 %v2965, %v2965
    %v3046 = vmul.f32 %v2966, %v2966
    %v3047 = vmul.f32 %v2967, %v2967
    %v3048 = vmul.f32 %v2968, %v2968
    %v3049 = vmul.f32 %v2969, %v2969
    %v3050 = vmul.f32 %v2970, %v2970
    %v3051 = vmul.f32 %v2971, %v2971
    %v3052 = vmul.f32 %v2972, %v2972
    %v3053 = vmul.f32 %v2973, %v2973
    %v3054 = vmul.f32 %v2974, %v2974
    %v3055 = vmul.f32 %v2975, %v2975
    %v3056 = vmul.f32 %v2976, %v2976
    %v3057 = vsub.f32 %v3025, %v3041
    %v3058 = vsub.f32 %v3026, %v3042
    %v3059 = vsub.f32 %v3027, %v3043
    %v3060 = vsub.f32 %v3028, %v3044
    %v3061 = vsub.f32 %v3029, %v3045
    %v3062 = vsub.f32 %v3030, %v3046
    %v3063 = vsub.f32 %v3031, %v3047
    %v3064 = vsub.f32 %v3032, %v3048
    %v3065 = vsub.f32 %v3033, %v3049
    %v3066 = vsub.f32 %v3034, %v3050
    %v3067 = vsub.f32 %v3035, %v3051
    %v3068 = vsub.f32 %v3036, %v3052
    %v3069 = vsub.f32 %v3037, %v3053
    %v3070 = vsub.f32 %v3038, %v3054
    %v3071 = vsub.f32 %v3039, %v3055
    %v3072 = vsub.f32 %v3040, %v3056
    %v3073 = vsub.f32 %v2913, %v2961
    %v3074 = vsub.f32 %v2914, %v2962
    %v3075 = vsub.f32 %v2915, %v2963
    %v3076 = vsub.f32 %v2916, %v2964
    %v3077 = vsub.f32 %v2917, %v2965
    %v3078 = vsub.f32 %v2918, %v2966
    %v3079 = vsub.f32 %v2919, %v2967
    %v3080 = vsub.f32 %v2920, %v2968
    %v3081 = vsub.f32 %v2921, %v2969
    %v3082 = vsub.f32 %v2922, %v2970
    %v3083 = vsub.f32 %v2923, %v2971
    %v3084 = vsub.f32 %v2924, %v2972
    %v3085 = vsub.f32 %v2925, %v2973
    %v3086 = vsub.f32 %v2926, %v2974
    %v3087 = vsub.f32 %v2927, %v2975
    %v3088 = vsub.f32 %v2928, %v2976
    %v3089 = vadd.f32 %v3057, 1e-05
    %v3090 = vadd.f32 %v3058, 1e-05
    %v3091 = vadd.f32 %v3059, 1e-05
    %v3092 = vadd.f32 %v3060, 1e-05
    %v3093 = vadd.f32 %v3061, 1e-05
    %v3094 = vadd.f32 %v3062, 1e-05
    %v3095 = vadd.f32 %v3063, 1e-05
    %v3096 = vadd.f32 %v3064, 1e-05
    %v3097 = vadd.f32 %v3065, 1e-05
    %v3098 = vadd.f32 %v3066, 1e-05
    %v3099 = vadd.f32 %v3067, 1e-05
    %v3100 = vadd.f32 %v3068, 1e-05
    %v3101 = vadd.f32 %v3069, 1e-05
    %v3102 = vadd.f32 %v3070, 1e-05
    %v3103 = vadd.f32 %v3071, 1e-05
    %v3104 = vadd.f32 %v3072, 1e-05
    %v3105 = vrsqrt.pop %v3089
    %v3106 = vrsqrt.pop %v3090
    %v3107 = vrsqrt.pop %v3091
    %v3108 = vrsqrt.pop %v3092
    %v3109 = vrsqrt.pop %v3093
    %v3110 = vrsqrt.pop %v3094
    %v3111 = vrsqrt.pop %v3095
    %v3112 = vrsqrt.pop %v3096
    %v3113 = vrsqrt.pop %v3097
    %v3114 = vrsqrt.pop %v3098
    %v3115 = vrsqrt.pop %v3099
    %v3116 = vrsqrt.pop %v3100
    %v3117 = vrsqrt.pop %v3101
    %v3118 = vrsqrt.pop %v3102
    %v3119 = vrsqrt.pop %v3103
    %v3120 = vrsqrt.pop %v3104
    %v3121 = vmul.f32 %v3073, %v3105
    %v3122 = vmul.f32 %v3074, %v3106
    %v3123 = vmul.f32 %v3075, %v3107
    %v3124 = vmul.f32 %v3076, %v3108
    %v3125 = vmul.f32 %v3077, %v3109
    %v3126 = vmul.f32 %v3078, %v3110
    %v3127 = vmul.f32 %v3079, %v3111
    %v3128 = vmul.f32 %v3080, %v3112
    %v3129 = vmul.f32 %v3081, %v3113
    %v3130 = vmul.f32 %v3082, %v3114
    %v3131 = vmul.f32 %v3083, %v3115
    %v3132 = vmul.f32 %v3084, %v3116
    %v3133 = vmul.f32 %v3085, %v3117
    %v3134 = vmul.f32 %v3086, %v3118
    %v3135 = vmul.f32 %v3087, %v3119
    %v3136 = vmul.f32 %v3088, %v3120
    %v3137 = vlaneseq
    %v3138 = vshrl.u32 %v3137, 7
    %v3139 = vsub.s32 5, %v3138
    %v3140 = vrot.slane %v91, %v3139
    %v3141 = vmul.f32 %v3121, %v3140
    %v3142 = vmul.f32 %v3122, %v3140
    %v3143 = vmul.f32 %v3123, %v3140
    %v3144 = vmul.f32 %v3124, %v3140
    %v3145 = vmul.f32 %v3125, %v3140
    %v3146 = vmul.f32 %v3126, %v3140
    %v3147 = vmul.f32 %v3127, %v3140
    %v3148 = vmul.f32 %v3128, %v3140
    %v3149 = vmul.f32 %v3129, %v3140
    %v3150 = vmul.f32 %v3130, %v3140
    %v3151 = vmul.f32 %v3131, %v3140
    %v3152 = vmul.f32 %v3132, %v3140
    %v3153 = vmul.f32 %v3133, %v3140
    %v3154 = vmul.f32 %v3134, %v3140
    %v3155 = vmul.f32 %v3135, %v3140
    %v3156 = vmul.f32 %v3136, %v3140
    %v3157 = vlaneseq
    %v3158 = vshrl.u32 %v3157, 7
    %v3159 = vsub.s32 6, %v3158
    %v3160 = vrot.slane %v91, %v3159
    %v3161 = vadd.f32 %v3141, %v3160
    %v3162 = vadd.f32 %v3142, %v3160
    %v3163 = vadd.f32 %v3143, %v3160
    %v3164 = vadd.f32 %v3144, %v3160
    %v3165 = vadd.f32 %v3145, %v3160
    %v3166 = vadd.f32 %v3146, %v3160
    %v3167 = vadd.f32 %v3147, %v3160
    %v3168 = vadd.f32 %v3148, %v3160
    %v3169 = vadd.f32 %v3149, %v3160
    %v3170 = vadd.f32 %v3150, %v3160
    %v3171 = vadd.f32 %v3151, %v3160
    %v3172 = vadd.f32 %v3152, %v3160
    %v3173 = vadd.f32 %v3153, %v3160
    %v3174 = vadd.f32 %v3154, %v3160
    %v3175 = vadd.f32 %v3155, %v3160
    %v3176 = vadd.f32 %v3156, %v3160
    %s3177 = scalar_lea.vmem [#allocation7], 640
    %v3178 = vld [vmem:[%s3177] sm:$0xf]
    %v3179 = vld [vmem:[%s3177 + $0x4] sm:$0xf]
    %v3180 = vld [vmem:[%s3177 + $0x8] sm:$0xf]
    %v3181 = vld [vmem:[%s3177 + $0xc] sm:$0xf]
    %v3182 = vld [vmem:[%s3177 + $0x10] sm:$0xf]
    %v3183 = vld [vmem:[%s3177 + $0x14] sm:$0xf]
    %v3184 = vld [vmem:[%s3177 + $0x18] sm:$0xf]
    %v3185 = vld [vmem:[%s3177 + $0x1c] sm:$0xf]
    %v3186 = vld [vmem:[%s3177 + $0x20] sm:$0xf]
    %v3187 = vld [vmem:[%s3177 + $0x24] sm:$0xf]
    %v3188 = vld [vmem:[%s3177 + $0x28] sm:$0xf]
    %v3189 = vld [vmem:[%s3177 + $0x2c] sm:$0xf]
    %v3190 = vld [vmem:[%s3177 + $0x30] sm:$0xf]
    %v3191 = vld [vmem:[%s3177 + $0x34] sm:$0xf]
    %v3192 = vld [vmem:[%s3177 + $0x38] sm:$0xf]
    %v3193 = vld [vmem:[%s3177 + $0x3c] sm:$0xf]
    %v3194 = vpack.c.bf16 %v3162, %v3161
    %v3195 = vpack.c.bf16 %v3164, %v3163
    %v3196 = vpack.c.bf16 %v3166, %v3165
    %v3197 = vpack.c.bf16 %v3168, %v3167
    %v3198 = vpack.c.bf16 %v3170, %v3169
    %v3199 = vpack.c.bf16 %v3172, %v3171
    %v3200 = vpack.c.bf16 %v3174, %v3173
    %v3201 = vpack.c.bf16 %v3176, %v3175
    %v3202 = vlaneseq
    %v3203 = vshrl.u32 %v3202, 7
    %v3204 = vsub.s32 7, %v3203
    %v3205 = vrot.slane %v91, %v3204
    %v3222 = vunpack.c.l.b16 %v3178
    %v3223 = vunpack.c.l.b16 %v3179
    %v3224 = vunpack.c.l.b16 %v3180
    %v3225 = vunpack.c.l.b16 %v3181
    %v3226 = vunpack.c.l.b16 %v3182
    %v3227 = vunpack.c.l.b16 %v3183
    %v3228 = vunpack.c.l.b16 %v3184
    %v3229 = vunpack.c.l.b16 %v3185
    %v3230 = vunpack.c.l.b16 %v3186
    %v3231 = vunpack.c.l.b16 %v3187
    %v3232 = vunpack.c.l.b16 %v3188
    %v3233 = vunpack.c.l.b16 %v3189
    %v3234 = vunpack.c.l.b16 %v3190
    %v3235 = vunpack.c.l.b16 %v3191
    %v3236 = vunpack.c.l.b16 %v3192
    %v3237 = vunpack.c.l.b16 %v3193
    %v3238 = vpack.c.b16 %v3223, %v3222
    %v3239 = vpack.c.b16 %v3225, %v3224
    %v3240 = vpack.c.b16 %v3227, %v3226
    %v3241 = vpack.c.b16 %v3229, %v3228
    %v3242 = vpack.c.b16 %v3231, %v3230
    %v3243 = vpack.c.b16 %v3233, %v3232
    %v3244 = vpack.c.b16 %v3235, %v3234
    %v3245 = vpack.c.b16 %v3237, %v3236
    %3254 = vmatprep.subr.bf16.mxu0 0
    %3255 = vmatpush1.bf16.msra.mxu0 %v3238
    %3256 = vmatprep.subr.bf16.mxu0 0
    %3257 = vmatpush1.bf16.msra.mxu0 %v3239
    %3258 = vmatprep.subr.bf16.mxu0 0
    %3259 = vmatpush1.bf16.msra.mxu0 %v3240
    %3260 = vmatprep.subr.bf16.mxu0 0
    %3261 = vmatpush1.bf16.msra.mxu0 %v3241
    %3262 = vmatprep.subr.bf16.mxu0 0
    %3263 = vmatpush1.bf16.msra.mxu0 %v3242
    %3264 = vmatprep.subr.bf16.mxu0 0
    %3265 = vmatpush1.bf16.msra.mxu0 %v3243
    %3266 = vmatprep.subr.bf16.mxu0 0
    %3267 = vmatpush1.bf16.msra.mxu0 %v3244
    %3268 = vmatprep.subr.bf16.mxu0 0
    %3269 = vmatpush1.bf16.msra.mxu0 %v3245
    %3270 = vmatprep.subr.bf16.mxu0 0
    %3271 = vmatpush1.bf16.msra.mxu0 0
    %3272 = vmatprep.subr.bf16.mxu0 0
    %3273 = vmatpush1.bf16.msra.mxu0 0
    %3274 = vmatprep.subr.bf16.mxu0 0
    %3275 = vmatpush1.bf16.msra.mxu0 0
    %3276 = vmatprep.subr.bf16.mxu0 0
    %3277 = vmatpush1.bf16.msra.mxu0 0
    %3278 = vmatprep.subr.bf16.mxu0 0
    %3279 = vmatpush1.bf16.msra.mxu0 0
    %3280 = vmatprep.subr.bf16.mxu0 0
    %3281 = vmatpush1.bf16.msra.mxu0 0
    %3282 = vmatprep.subr.bf16.mxu0 0
    %3283 = vmatpush1.bf16.msra.mxu0 0
    %3284 = vmatprep.subr.bf16.mxu0 0
    %3285 = vmatpush1.bf16.msra.mxu0 0
    %3286 = vmatprep.mubr.bf16.mxu0 0
    %3287 = vmatmul.mubr.bf16.gmra.mrb[0].mxu0 %v3194
    %v3288 = vpop.f32.mrb[0].mxu0
    %v3289 = vadd.f32 %v3205, %v3288
    %v3290 = vpop.f32.mrb[0].mxu0
    %v3291 = vpop.f32.mrb[0].mxu0
    %v3292 = vadd.f32 %v3205, %v3291
    %v3293 = vpop.f32.mrb[0].mxu0
    %3294 = vmatprep.mubr.bf16.mxu0 0
    %3295 = vmatmul.mubr.bf16.gmra.mrb[0].mxu0 %v3195
    %v3296 = vpop.f32.mrb[0].mxu0
    %v3297 = vadd.f32 %v3205, %v3296
    %v3298 = vpop.f32.mrb[0].mxu0
    %v3299 = vpop.f32.mrb[0].mxu0
    %v3300 = vadd.f32 %v3205, %v3299
    %v3301 = vpop.f32.mrb[0].mxu0
    %3302 = vmatprep.mubr.bf16.mxu0 0
    %3303 = vmatmul.mubr.bf16.gmra.mrb[0].mxu0 %v3196
    %v3304 = vpop.f32.mrb[0].mxu0
    %v3305 = vadd.f32 %v3205, %v3304
    %v3306 = vpop.f32.mrb[0].mxu0
    %v3307 = vpop.f32.mrb[0].mxu0
    %v3308 = vadd.f32 %v3205, %v3307
    %v3309 = vpop.f32.mrb[0].mxu0
    %3310 = vmatprep.mubr.bf16.mxu0 0
    %3311 = vmatmul.mubr.bf16.gmra.mrb[0].mxu0 %v3197
    %v3312 = vpop.f32.mrb[0].mxu0
    %v3313 = vadd.f32 %v3205, %v3312
    %v3314 = vpop.f32.mrb[0].mxu0
    %v3315 = vpop.f32.mrb[0].mxu0
    %v3316 = vadd.f32 %v3205, %v3315
    %v3317 = vpop.f32.mrb[0].mxu0
    %3318 = vmatprep.mubr.bf16.mxu0 0
    %3319 = vmatmul.mubr.bf16.gmra.mrb[0].mxu0 %v3198
    %v3320 = vpop.f32.mrb[0].mxu0
    %v3321 = vadd.f32 %v3205, %v3320
    %v3322 = vpop.f32.mrb[0].mxu0
    %v3323 = vpop.f32.mrb[0].mxu0
    %v3324 = vadd.f32 %v3205, %v3323
    %v3325 = vpop.f32.mrb[0].mxu0
    %3326 = vmatprep.mubr.bf16.mxu0 0
    %3327 = vmatmul.mubr.bf16.gmra.mrb[0].mxu0 %v3199
    %v3328 = vpop.f32.mrb[0].mxu0
    %v3329 = vadd.f32 %v3205, %v3328
    %v3330 = vpop.f32.mrb[0].mxu0
    %v3331 = vpop.f32.mrb[0].mxu0
    %v3332 = vadd.f32 %v3205, %v3331
    %v3333 = vpop.f32.mrb[0].mxu0
    %3334 = vmatprep.mubr.bf16.mxu0 0
    %3335 = vmatmul.mubr.bf16.gmra.mrb[0].mxu0 %v3200
    %v3336 = vpop.f32.mrb[0].mxu0
    %v3337 = vadd.f32 %v3205, %v3336
    %v3338 = vpop.f32.mrb[0].mxu0
    %v3339 = vpop.f32.mrb[0].mxu0
    %v3340 = vadd.f32 %v3205, %v3339
    %v3341 = vpop.f32.mrb[0].mxu0
    %3342 = vmatprep.mubr.bf16.mxu0 0
    %3343 = vmatmul.mubr.bf16.gmra.mrb[0].mxu0 %v3201
    %v3344 = vpop.f32.mrb[0].mxu0
    %v3345 = vadd.f32 %v3205, %v3344
    %v3346 = vpop.f32.mrb[0].mxu0
    %v3347 = vpop.f32.mrb[0].mxu0
    %v3348 = vadd.f32 %v3205, %v3347
    %v3349 = vpop.f32.mrb[0].mxu0
    %3350 = vdwg.mxu0
    %3351 = vst [vmem:[#allocation10] sm:$0xff] %v3289
    %3352 = vst [vmem:[#allocation10 + $0x8] sm:$0xff] %v3292
    %3353 = vst [vmem:[#allocation10 + $0x10] sm:$0xff] %v3297
    %3354 = vst [vmem:[#allocation10 + $0x18] sm:$0xff] %v3300
    %3355 = vst [vmem:[#allocation10 + $0x20] sm:$0xff] %v3305
    %3356 = vst [vmem:[#allocation10 + $0x28] sm:$0xff] %v3308
    %3357 = vst [vmem:[#allocation10 + $0x30] sm:$0xff] %v3313
    %3358 = vst [vmem:[#allocation10 + $0x38] sm:$0xff] %v3316
    %3359 = vst [vmem:[#allocation10 + $0x40] sm:$0xff] %v3321
    %3360 = vst [vmem:[#allocation10 + $0x48] sm:$0xff] %v3324
    %3361 = vst [vmem:[#allocation10 + $0x50] sm:$0xff] %v3329
    %3362 = vst [vmem:[#allocation10 + $0x58] sm:$0xff] %v3332
    %3363 = vst [vmem:[#allocation10 + $0x60] sm:$0xff] %v3337
    %3364 = vst [vmem:[#allocation10 + $0x68] sm:$0xff] %v3340
    %3365 = vst [vmem:[#allocation10 + $0x70] sm:$0xff] %v3345
    %3366 = vst [vmem:[#allocation10 + $0x78] sm:$0xff] %v3348
    // Predicated region
    $region34: #{tpu_custom_call.1} parent=1 // pred_check
      _
    $region35: #{tpu_custom_call.1} parent=1 // pred_check_branch
      %3368 = sbr.rel (0) target = $region37
    $region36: #{tpu_custom_call.1} parent=1 // pred_region
      %s3370 = ssub.s32 2048, 2048
      %3371 = vsyncadd [#allocation4], %s3370
      %s3372 = sshll.u32 [#allocation10], 4
      %s3373 = int_to_ptr.vmem [resolvable:$true] %s3372
      %3378 = dma.vmem_to_hbm [thread:$0]  %s3373, 2048, %s4, [#allocation4], 128, 128, 8
    $region37: #{tpu_custom_call.1} parent=1 // pred_fallthru
      _
    // Predicated region
    $region38: #{tpu_custom_call.1} parent=1 // pred_check
      _
    $region39: #{tpu_custom_call.1} parent=1 // pred_check_branch
      %3380 = sbr.rel (0) target = $region41
    $region40: #{tpu_custom_call.1} parent=1 // pred_region
      %3381 = dma.done [#allocation4], 2048
    $region41: #{tpu_custom_call.1} parent=1 // pred_fallthru
      _
    %3382 = vsyncpa [#allocation3], 1
    %3383 = vsyncpa [#allocation6], 1
    %3384 = vsyncpa [#allocation9], 1
    %3385 = vsyncpa [#allocation4], 1

</llo_original>
